<compile_context>
chip_gen: v7x
topology: tpu7x:2x2x1
jax: 0.10.0
libtpu: 0.0.40
codegen_flags: <defaults>
</compile_context>

<pallas_src>
import functools

import jax
import jax.numpy as jnp
from jax.experimental import pallas as pl
from jax.experimental.pallas import tpu as pltpu

# >= default scoped VMEM limit on every generation, < v7x's 64 MiB physical VMEM.
_VMEM_LIMIT_BYTES = 48 * 1024 * 1024
# Per-step (double-buffered) matmul working-set budget; leaves headroom on v7x.
_MATMUL_WS_BUDGET = 28 * 1024 * 1024
# Below this, use full-K blocks (no accumulator k-loop at all).
_FULL_K_MAX = 2048


def _round_up(v, m):
    return ((v + m - 1) // m) * m


def _pick_tile(dim, preferred, align):
    """Largest tile <= preferred that is a multiple of `align` and divides `dim`;
    the full dim if dim <= preferred; otherwise falls back to the full dim
    (full-extent blocks are always legal — callers budget-check the result)."""
    if dim <= preferred:
        return dim
    t = (preferred // align) * align
    while t >= align:
        if dim % t == 0:
            return t
        t -= align
    return dim


# ----------------------------- Pallas kernels -----------------------------

def _matmul_kernel(*refs, n_k, activation, fuse_residual):
    """Tiled matmul; fused bias (+ QuickGELU) (+ residual) epilogue.
    n_k == 1: single full-K pass, no accumulator scratch.  n_k > 1: f32 VMEM accumulator."""
    if fuse_residual:
        x_ref, w_ref, b_ref, res_ref = refs[:4]
        rest = refs[4:]
    else:
        x_ref, w_ref, b_ref = refs[:3]
        res_ref = None
        rest = refs[3:]

    def epilogue(acc):
        out = acc + b_ref[...]                               # f32 epilogue math
        if activation == "quick_gelu":                       # CLIP QuickGELU
            out = out * jax.nn.sigmoid(1.702 * out)
        if fuse_residual:
            out = out + res_ref[...].astype(jnp.float32)
        return out

    if n_k == 1:
        (o_ref,) = rest
        acc = jnp.dot(x_ref[...], w_ref[...], preferred_element_type=jnp.float32)
        o_ref[...] = epilogue(acc).astype(o_ref.dtype)
    else:
        o_ref, acc_ref = rest
        k = pl.program_id(2)

        @pl.when(k == 0)
        def _():
            acc_ref[...] = jnp.zeros_like(acc_ref)

        acc_ref[...] += jnp.dot(x_ref[...], w_ref[...],
                                preferred_element_type=jnp.float32)

        @pl.when(k == n_k - 1)
        def _():
            o_ref[...] = epilogue(acc_ref[...]).astype(o_ref.dtype)


def _layernorm_kernel(x_ref, g_ref, b_ref, o_ref):
    x = x_ref[...].astype(jnp.float32)                       # LN math stays f32 (v5e-safe)
    mu = jnp.mean(x, axis=-1, keepdims=True)
    var = jnp.mean(jnp.square(x - mu), axis=-1, keepdims=True)
    y = (x - mu) * jax.lax.rsqrt(var + 1e-5) * g_ref[...] + b_ref[...]
    o_ref[...] = y.astype(o_ref.dtype)


def _embed_lnpre_kernel(xp_ref, add_ref, g_ref, b_ref, o_ref):
    """Fused per-image: [cls | patches] assembly + positional add + pad + ln_pre.
    xp_ref: (1, P, D) patch embeddings; add_ref: (S_pad, D) where row 0 = cls+pos[0],
    rows 1..S-1 = pos[1:], rows >= S = 0; o_ref: (1, S_pad, D)."""
    p = xp_ref.shape[1]
    s_pad, d = o_ref.shape[1], o_ref.shape[2]
    g = g_ref[...]
    bb = b_ref[...]

    def ln(v):
        mu = jnp.mean(v, axis=-1, keepdims=True)
        var = jnp.mean(jnp.square(v - mu), axis=-1, keepdims=True)
        return (v - mu) * jax.lax.rsqrt(var + 1e-5) * g + bb

    # class-token row (patch contribution is zero there)
    o_ref[0, 0:1, :] = ln(add_ref[0:1, :]).astype(o_ref.dtype)
    # patch rows, shifted by one for the class token
    x = xp_ref[0].astype(jnp.float32) + add_ref[1:1 + p, :]
    o_ref[0, 1:1 + p, :] = ln(x).astype(o_ref.dtype)
    # zero the padded tail rows so downstream attention keys stay finite
    if 1 + p < s_pad:
        o_ref[0, 1 + p:, :] = jnp.zeros((s_pad - 1 - p, d), o_ref.dtype)


def _attention_kernel(q_ref, k_ref, v_ref, o_ref, *, head_dim, heads_per_block,
                      seq_real, scale):
    """One (batch, head-group) step.  q/k/v blocks are (1, S_pad, group) lane-dense slabs of the
    packed QKV tensor; output is a single lane-dense (1, S_pad, group) store."""
    s_pad = q_ref.shape[1]

    if seq_real < s_pad:                                      # mask padded key positions
        kidx = jax.lax.broadcasted_iota(jnp.int32, (1, s_pad), 1)
        key_bias = jnp.where(kidx < seq_real, 0.0, -1e30).astype(jnp.float32)
    else:
        key_bias = None

    outs = []
    for h in range(heads_per_block):                          # small (2 for ViT-B/16)
        lo = h * head_dim
        q = q_ref[0, :, lo:lo + head_dim]
        k = k_ref[0, :, lo:lo + head_dim]
        v = v_ref[0, :, lo:lo + head_dim]
        # contract on the head dim of both operands -> no explicit k.T (no XLU transpose)
        s = jax.lax.dot_general(q, k, (((1,), (1,)), ((), ())),
                                preferred_element_type=jnp.float32) * scale
        if key_bias is not None:
            s = s + key_bias
        s = s - jnp.max(s, axis=-1, keepdims=True)
        p = jnp.exp(s)
        p = p * pl.reciprocal(jnp.sum(p, axis=-1, keepdims=True), approx=True)
        outs.append(jnp.dot(p.astype(v.dtype), v, preferred_element_type=jnp.float32))
    out = outs[0] if len(outs) == 1 else jnp.concatenate(outs, axis=-1)
    o_ref[0] = out.astype(o_ref.dtype)                        # lane-dense store


# ----------------------------- kernel wrappers -----------------------------

def pallas_matmul(x, w, b, residual=None, activation=None, out_dtype=jnp.float32,
                  tm_pref=512, tn_pref=512, tk_pref=512):
    """out = act(x @ w + b) [+ residual]; x,w fed to the MXU in bf16, f32 accumulation."""
    M, K = x.shape
    K2, N = w.shape
    assert K == K2 and b.shape == (1, N)

    x = x.astype(jnp.bfloat16)
    w = w.astype(jnp.bfloat16)
    b = b.astype(jnp.float32)

    # K: prefer full-K (no accumulator loop / f32 acc RMW), else 256-aligned tiles; pad K with
    # zeros as a guarded last resort instead of silently taking a huge block.
    if K <= _FULL_K_MAX:
        tk = K
    else:
        tk = _pick_tile(K, tk_pref, 256)
        if tk == K:
            Kp = _round_up(K, 256)
            x = jnp.pad(x, ((0, 0), (0, Kp - K)))
            w = jnp.pad(w, ((0, Kp - K), (0, 0)))
            K = Kp
            tk = _pick_tile(K, tk_pref, 256)

    tm = _pick_tile(M, tm_pref, 16)            # bf16-native sublane tile is 16 rows
    if tm == M and M > tm_pref:
        tm = _pick_tile(M, tm_pref, 8)
    tn = _pick_tile(N, tn_pref, 256)           # 256-aligned for the v6e/v7x MXU
    if tn == N and N > tn_pref:
        tn = _pick_tile(N, tn_pref, 128)

    n_k = K // tk
    grid = (M // tm, N // tn, n_k)

    out_bytes = jnp.dtype(out_dtype).itemsize
    res_bytes = residual.dtype.itemsize if residual is not None else 0
    ws = 2 * (tm * tk * 2 + tk * tn * 2 + tn * 4
              + tm * tn * res_bytes + tm * tn * out_bytes)
    if n_k > 1:
        ws += tm * tn * 4
    assert ws <= _MATMUL_WS_BUDGET, (
        f"matmul working set {ws}B exceeds budget (M={M},N={N},K={K},tiles=({tm},{tn},{tk}))")

    in_specs = [
        pl.BlockSpec((tm, tk), lambda i, j, k: (i, k)),
        pl.BlockSpec((tk, tn), lambda i, j, k: (k, j)),
        pl.BlockSpec((1, tn), lambda i, j, k: (0, j)),
    ]
    inputs = [x, w, b]
    if residual is not None:
        in_specs.append(pl.BlockSpec((tm, tn), lambda i, j, k: (i, j)))
        inputs.append(residual)

    bytes_accessed = (M * K * 2) * (N // tn) + (K * N * 2) * (M // tm) + N * 4 + M * N * out_bytes
    if residual is not None:
        bytes_accessed += M * N * res_bytes
    cost = pl.CostEstimate(
        flops=2 * M * N * K,
        transcendentals=(M * N if activation == "quick_gelu" else 0),
        bytes_accessed=int(bytes_accessed),
    )

    kernel = functools.partial(_matmul_kernel, n_k=n_k, activation=activation,
                               fuse_residual=residual is not None)
    scratch = [] if n_k == 1 else [pltpu.VMEM((tm, tn), jnp.float32)]
    return pl.pallas_call(
        kernel,
        out_shape=jax.ShapeDtypeStruct((M, N), out_dtype),
        grid=grid,
        in_specs=in_specs,
        out_specs=pl.BlockSpec((tm, tn), lambda i, j, k: (i, j)),
        scratch_shapes=scratch,
        compiler_params=pltpu.CompilerParams(
            dimension_semantics=("parallel", "parallel", "arbitrary"),
            vmem_limit_bytes=_VMEM_LIMIT_BYTES),
        cost_estimate=cost,
    )(*inputs)


def pallas_layernorm(x, g, b, out_dtype=jnp.float32, tm_pref=512):
    """Row-tiled LayerNorm over the last dim. x: (M, D); g, b: (1, D)."""
    M, D = x.shape
    tm = _pick_tile(M, tm_pref, 16)
    if tm == M and M > tm_pref:
        tm = _pick_tile(M, tm_pref, 8)
    cost = pl.CostEstimate(
        flops=10 * M * D, transcendentals=M,
        bytes_accessed=int(M * D * (x.dtype.itemsize + jnp.dtype(out_dtype).itemsize) + 2 * D * 4))
    return pl.pallas_call(
        _layernorm_kernel,
        out_shape=jax.ShapeDtypeStruct((M, D), out_dtype),
        grid=(M // tm,),
        in_specs=[
            pl.BlockSpec((tm, D), lambda i: (i, 0)),
            pl.BlockSpec((1, D), lambda i: (0, 0)),
            pl.BlockSpec((1, D), lambda i: (0, 0)),
        ],
        out_specs=pl.BlockSpec((tm, D), lambda i: (i, 0)),
        compiler_params=pltpu.CompilerParams(
            dimension_semantics=("parallel",),
            vmem_limit_bytes=_VMEM_LIMIT_BYTES),
        cost_estimate=cost,
    )(x, g.astype(jnp.float32), b.astype(jnp.float32))


def pallas_embed_lnpre(x_p, add_term, g, b, out_dtype=jnp.float32):
    """Fused class-token concat + positional add + pad-to-S_pad + ln_pre, one image per step."""
    B, P, D = x_p.shape
    S_pad = add_term.shape[0]
    cost = pl.CostEstimate(
        flops=12 * B * S_pad * D, transcendentals=B * S_pad,
        bytes_accessed=int(B * P * D * 4 + S_pad * D * 4
                           + B * S_pad * D * jnp.dtype(out_dtype).itemsize))
    return pl.pallas_call(
        _embed_lnpre_kernel,
        out_shape=jax.ShapeDtypeStruct((B, S_pad, D), out_dtype),
        grid=(B,),
        in_specs=[
            pl.BlockSpec((1, P, D), lambda bi: (bi, 0, 0)),
            pl.BlockSpec((S_pad, D), lambda bi: (0, 0)),
            pl.BlockSpec((1, D), lambda bi: (0, 0)),
            pl.BlockSpec((1, D), lambda bi: (0, 0)),
        ],
        out_specs=pl.BlockSpec((1, S_pad, D), lambda bi: (bi, 0, 0)),
        compiler_params=pltpu.CompilerParams(
            dimension_semantics=("parallel",),
            vmem_limit_bytes=_VMEM_LIMIT_BYTES),
        cost_estimate=cost,
    )(x_p, add_term, g.astype(jnp.float32), b.astype(jnp.float32))


def pallas_attention(qkv, num_heads, seq_real, out_dtype=jnp.bfloat16):
    """qkv: (B, S_pad, 3*D) bf16 packed q|k|v (heads packed along lanes) -> (B, S_pad, D).
    Heads are processed in lane-dense 128-wide groups: grid = (B, D/128); each step gets three
    (1, S_pad, 128) blocks (Q/K/V slabs of the same qkv array) and stores one dense block."""
    B, S_pad, threeD = qkv.shape
    D = threeD // 3
    head_dim = D // num_heads
    assert D % 128 == 0, "model width must be lane-aligned"
    if head_dim % 128 == 0:
        hgw = head_dim
    elif 128 % head_dim == 0:
        hgw = 128
    else:
        hgw = D
    heads_per_block = hgw // head_dim
    n_g = D // hgw

    qkv = qkv.astype(jnp.bfloat16)
    out_bytes = jnp.dtype(out_dtype).itemsize
    cost = pl.CostEstimate(
        flops=4 * B * S_pad * S_pad * D,
        transcendentals=B * num_heads * S_pad * S_pad,
        bytes_accessed=int(3 * B * S_pad * D * 2 + B * S_pad * D * out_bytes))

    kernel = functools.partial(_attention_kernel, head_dim=head_dim,
                               heads_per_block=heads_per_block, seq_real=seq_real,
                               scale=float(head_dim) ** -0.5)
    blk = (1, S_pad, hgw)
    return pl.pallas_call(
        kernel,
        out_shape=jax.ShapeDtypeStruct((B, S_pad, D), out_dtype),
        grid=(B, n_g),
        in_specs=[
            pl.BlockSpec(blk, lambda bi, gi: (bi, 0, gi)),            # Q slab
            pl.BlockSpec(blk, lambda bi, gi: (bi, 0, gi + n_g)),      # K slab
            pl.BlockSpec(blk, lambda bi, gi: (bi, 0, gi + 2 * n_g)),  # V slab
        ],
        out_specs=pl.BlockSpec(blk, lambda bi, gi: (bi, 0, gi)),
        compiler_params=pltpu.CompilerParams(
            dimension_semantics=("parallel", "parallel"),
            vmem_limit_bytes=_VMEM_LIMIT_BYTES),
        cost_estimate=cost,
    )(qkv, qkv, qkv)


# ----------------------------- parameter setup -----------------------------

def init_params(key, *, channels, patch, width, heads, layers, mlp_dim, seq_len):
    ks = iter(jax.random.split(key, 8 + layers * 12))

    def nrm(shape, scale=0.02, dtype=jnp.float32):
        return (jax.random.normal(next(ks), shape, jnp.float32) * scale).astype(dtype)

    def ln_g(shape):
        return (1.0 + 0.1 * jax.random.normal(next(ks), shape, jnp.float32)).astype(jnp.float32)

    def ln_b(shape):
        return (0.02 * jax.random.normal(next(ks), shape, jnp.float32)).astype(jnp.float32)

    params = {
        "conv1_w": nrm((width, channels, patch, patch)),       # PyTorch layout, no bias
        "class_embedding": nrm((width,)),
        "pos_embedding": nrm((seq_len, width)),
        "ln_pre_g": ln_g((1, width)), "ln_pre_b": ln_b((1, width)),
        "ln_post_g": ln_g((1, width)), "ln_post_b": ln_b((1, width)),
        "layers": [],
    }
    for _ in range(layers):
        params["layers"].append({
            "ln1_g": ln_g((1, width)), "ln1_b": ln_b((1, width)),
            # big matmul weights stored bf16 (MXU-native, halves weight HBM traffic)
            "w_qkv": nrm((width, 3 * width), dtype=jnp.bfloat16),
            "b_qkv": nrm((1, 3 * width)),
            "w_out": nrm((width, width), dtype=jnp.bfloat16),
            "b_out": nrm((1, width)),
            "ln2_g": ln_g((1, width)), "ln2_b": ln_b((1, width)),
            "w_fc": nrm((width, mlp_dim), dtype=jnp.bfloat16),
            "b_fc": nrm((1, mlp_dim)),
            "w_proj": nrm((mlp_dim, width), dtype=jnp.bfloat16),
            "b_proj": nrm((1, width)),
        })
    return params


# ----------------------------- forward pass -----------------------------

def image_encoder_forward(x, params, *, patch, width, heads):
    """ImageEncoder.forward, bert_token=None path.

    x: (B, C, H, W) f32 (NCHW) -> (grid_feats (B, P, width) f32, grid_mask (B, P) i32)
    """
    B, C, H, W = x.shape
    gh, gw = H // patch, W // patch
    P = gh * gw
    D = width
    nH = heads
    S = P + 1
    S_pad = _round_up(S, 16)             # bf16-native sublane alignment; padded keys masked
    M = B * S_pad

    # conv1 (stride == kernel, no bias) == patchify (JAX glue) + Pallas matmul
    patches = x.reshape(B, C, gh, patch, gw, patch)
    patches = patches.transpose(0, 2, 4, 1, 3, 5).reshape(B * P, C * patch * patch)
    w_conv = params["conv1_w"].reshape(D, C * patch * patch).T
    x_p = pallas_matmul(patches, w_conv, jnp.zeros((1, D), jnp.float32),
                        out_dtype=jnp.float32).reshape(B, P, D)

    # fused: class token + positional embedding + pad to S_pad + ln_pre
    pos = params["pos_embedding"].astype(jnp.float32)                         # (S, D)
    cls_row = params["class_embedding"].astype(jnp.float32)[None] + pos[:1]   # (1, D)
    add_term = jnp.concatenate(                                              # tiny, param-only
        [cls_row, pos[1:], jnp.zeros((S_pad - S, D), jnp.float32)], axis=0)
    x_flat = pallas_embed_lnpre(x_p, add_term, params["ln_pre_g"], params["ln_pre_b"],
                                out_dtype=jnp.float32).reshape(M, D)

    for layer in params["layers"]:
        # --- self-attention block (pre-LN; residual fused into out-projection) ---
        h = pallas_layernorm(x_flat, layer["ln1_g"], layer["ln1_b"], out_dtype=jnp.bfloat16)
        qkv = pallas_matmul(h, layer["w_qkv"], layer["b_qkv"], out_dtype=jnp.bfloat16)  # (M, 3D)
        attn = pallas_attention(qkv.reshape(B, S_pad, 3 * D), num_heads=nH, seq_real=S)
        x_flat = pallas_matmul(attn.reshape(M, D), layer["w_out"], layer["b_out"],
                               residual=x_flat, out_dtype=jnp.float32)

        # --- MLP block (pre-LN; QuickGELU fused; residual fused into projection) ---
        h = pallas_layernorm(x_flat, layer["ln2_g"], layer["ln2_b"], out_dtype=jnp.bfloat16)
        h = pallas_matmul(h, layer["w_fc"], layer["b_fc"],
                          activation="quick_gelu", out_dtype=jnp.bfloat16)
        x_flat = pallas_matmul(h, layer["w_proj"], layer["b_proj"],
                               residual=x_flat, out_dtype=jnp.float32)

    # ln_post over grid tokens only (drop class token and padding), like ln_post(grid_feats[:,1:])
    x_seq = x_flat.reshape(B, S_pad, D)
    grid = x_seq[:, 1:S, :].reshape(B * P, D)
    grid = pallas_layernorm(grid, params["ln_post_g"], params["ln_post_b"],
                            out_dtype=jnp.float32)
    grid_feats = grid.reshape(B, P, D)
    grid_mask = jnp.ones((B, P), jnp.int32)
    return grid_feats, grid_mask


# ----------------------------- pure-JAX reference (same dtype strategy) -----------------------------

def reference_forward(x, params, *, patch, width, heads):
    B, C, H, W = x.shape
    gh, gw = H // patch, W // patch
    P = gh * gw
    D = width
    nH = heads
    Dh = D // nH
    S = P + 1

    def linear(h, w, b, act=None):
        out = jnp.dot(h.astype(jnp.bfloat16), w.astype(jnp.bfloat16),
                      preferred_element_type=jnp.float32) + b.astype(jnp.float32)
        if act == "quick_gelu":
            out = out * jax.nn.sigmoid(1.702 * out)
        return out

    def ln(h, g, b):
        mu = jnp.mean(h, -1, keepdims=True)
        var = jnp.mean(jnp.square(h - mu), -1, keepdims=True)
        return (h - mu) * jax.lax.rsqrt(var + 1e-5) * g.astype(jnp.float32) + b.astype(jnp.float32)

    patches = x.reshape(B, C, gh, patch, gw, patch).transpose(0, 2, 4, 1, 3, 5)
    patches = patches.reshape(B * P, C * patch * patch)
    w_conv = params["conv1_w"].reshape(D, -1).T
    xp = linear(patches, w_conv, jnp.zeros((1, D), jnp.float32)).reshape(B, P, D)

    cls_tok = jnp.broadcast_to(params["class_embedding"].astype(jnp.float32)[None, None, :],
                               (B, 1, D))
    xs = jnp.concatenate([cls_tok, xp], 1) + params["pos_embedding"].astype(jnp.float32)[None]
    h = ln(xs.reshape(B * S, D), params["ln_pre_g"], params["ln_pre_b"])

    for layer in params["layers"]:
        a = ln(h, layer["ln1_g"], layer["ln1_b"])
        qkv = linear(a, layer["w_qkv"], layer["b_qkv"]).astype(jnp.bfloat16)
        qkv = qkv.reshape(B, S, 3, nH, Dh)
        q = qkv[:, :, 0].transpose(0, 2, 1, 3)
        k = qkv[:, :, 1].transpose(0, 2, 1, 3)
        v = qkv[:, :, 2].transpose(0, 2, 1, 3)
        s = jnp.einsum("bhqd,bhkd->bhqk", q, k,
                       preferred_element_type=jnp.float32) * (float(Dh) ** -0.5)
        p = jax.nn.softmax(s, axis=-1)
        o = jnp.einsum("bhqk,bhkd->bhqd", p.astype(jnp.bfloat16), v,
                       preferred_element_type=jnp.float32)
        o = o.transpose(0, 2, 1, 3).reshape(B * S, D)
        h = h + linear(o, layer["w_out"], layer["b_out"])

        a = ln(h, layer["ln2_g"], layer["ln2_b"])
        a = linear(a, layer["w_fc"], layer["b_fc"], act="quick_gelu")
        h = h + linear(a, layer["w_proj"], layer["b_proj"])

    xs = h.reshape(B, S, D)
    grid = ln(xs[:, 1:].reshape(B * P, D), params["ln_post_g"], params["ln_post_b"])
    return grid.reshape(B, P, D), jnp.ones((B, P), jnp.int32)


# ----------------------------- main -----------------------------

if __name__ == "__main__":
    # Small, shape-consistent config (ViT-B/16 analogue at toy size).
    B, C, IMG, PATCH = 2, 3, 32, 8
    WIDTH, HEADS, LAYERS = 128, 4, 2
    MLP = 4 * WIDTH
    P = (IMG // PATCH) ** 2
    SEQ = P + 1

    key = jax.random.PRNGKey(0)
    k_x, k_p = jax.random.split(key)
    x = jax.random.normal(k_x, (B, C, IMG, IMG), jnp.float32)
    params = init_params(k_p, channels=C, patch=PATCH, width=WIDTH, heads=HEADS,
                         layers=LAYERS, mlp_dim=MLP, seq_len=SEQ)

    fwd = jax.jit(functools.partial(image_encoder_forward,
                                    patch=PATCH, width=WIDTH, heads=HEADS))
    grid_feats, grid_mask = fwd(x, params)
    jax.block_until_ready((grid_feats, grid_mask))

    assert grid_feats.shape == (B, P, WIDTH) and grid_feats.dtype == jnp.float32
    assert grid_mask.shape == (B, P)
    assert bool(jnp.all(jnp.isfinite(grid_feats)))

    # Cross-check against a pure-JAX reference using the same bf16/f32 dtype strategy.
    ref_feats, _ = jax.jit(functools.partial(reference_forward,
                                             patch=PATCH, width=WIDTH, heads=HEADS))(x, params)
    max_err = float(jnp.max(jnp.abs(grid_feats - ref_feats)))
    assert max_err < 5e-2, f"mismatch vs reference: max abs err {max_err}"

    print("KERNEL_OK")
</pallas_src>

<mosaic_0001>
module attributes {stable_mosaic.version = 11 : i64} {
  func.func @_embed_lnpre_kernel(%arg0: i32, %arg1: memref<1x16x128xf32, #tpu.memory_space<vmem>>, %arg2: memref<32x128xf32, #tpu.memory_space<vmem>>, %arg3: memref<1x128xf32, #tpu.memory_space<vmem>>, %arg4: memref<1x128xf32, #tpu.memory_space<vmem>>, %arg5: memref<1x32x128xf32, #tpu.memory_space<vmem>>) attributes {dimension_semantics = [#tpu.dimension_semantics<parallel>], iteration_bounds = array<i64: 2>, scalar_prefetch = 0 : i64, scratch_operands = 0 : i64, tpu.core_type = #tpu.core_type<tc>, window_params = [{transform_indices = @transform_0, window_bounds = array<i64: 1, 16, 128>}, {pipeline_mode = #tpu.pipeline_mode<synchronous>, transform_indices = @transform_1, window_bounds = array<i64: 32, 128>}, {pipeline_mode = #tpu.pipeline_mode<synchronous>, transform_indices = @transform_2, window_bounds = array<i64: 1, 128>}, {pipeline_mode = #tpu.pipeline_mode<synchronous>, transform_indices = @transform_3, window_bounds = array<i64: 1, 128>}, {transform_indices = @transform_4, window_bounds = array<i64: 1, 32, 128>}]} {
    %c0 = arith.constant 0 : index
    %c0_0 = arith.constant 0 : index
    %0 = vector.load %arg3[%c0, %c0_0] : memref<1x128xf32, #tpu.memory_space<vmem>>, vector<1x128xf32>
    %c0_1 = arith.constant 0 : index
    %c0_2 = arith.constant 0 : index
    %1 = vector.load %arg4[%c0_1, %c0_2] : memref<1x128xf32, #tpu.memory_space<vmem>>, vector<1x128xf32>
    %c0_3 = arith.constant 0 : index
    %c0_4 = arith.constant 0 : index
    %2 = vector.load %arg2[%c0_3, %c0_4] : memref<32x128xf32, #tpu.memory_space<vmem>>, vector<1x128xf32>
    %cst = arith.constant dense<0.000000e+00> : vector<1xf32>
    %3 = vector.multi_reduction <add>, %2, %cst [1] : vector<1x128xf32> to vector<1xf32>
    %4 = vector.shape_cast %3 : vector<1xf32> to vector<1x1xf32>
    %cst_5 = arith.constant 1.280000e+02 : f32
    %5 = vector.broadcast %cst_5 : f32 to vector<1x1xf32>
    %6 = arith.divf %4, %5 : vector<1x1xf32>
    %7 = vector.broadcast %6 : vector<1x1xf32> to vector<1x128xf32>
    %8 = arith.subf %2, %7 : vector<1x128xf32>
    %9 = arith.mulf %8, %8 : vector<1x128xf32>
    %cst_6 = arith.constant dense<0.000000e+00> : vector<1xf32>
    %10 = vector.multi_reduction <add>, %9, %cst_6 [1] : vector<1x128xf32> to vector<1xf32>
    %11 = vector.shape_cast %10 : vector<1xf32> to vector<1x1xf32>
    %cst_7 = arith.constant 1.280000e+02 : f32
    %12 = vector.broadcast %cst_7 : f32 to vector<1x1xf32>
    %13 = arith.divf %11, %12 : vector<1x1xf32>
    %14 = vector.broadcast %6 : vector<1x1xf32> to vector<1x128xf32>
    %15 = arith.subf %2, %14 : vector<1x128xf32>
    %cst_8 = arith.constant 9.99999974E-6 : f32
    %16 = vector.broadcast %cst_8 : f32 to vector<1x1xf32>
    %17 = arith.addf %13, %16 : vector<1x1xf32>
    %18 = math.rsqrt %17 : vector<1x1xf32>
    %19 = vector.broadcast %18 : vector<1x1xf32> to vector<1x128xf32>
    %20 = arith.mulf %15, %19 : vector<1x128xf32>
    %21 = arith.mulf %20, %0 : vector<1x128xf32>
    %22 = arith.addf %21, %1 : vector<1x128xf32>
    %c0_9 = arith.constant 0 : index
    %c0_10 = arith.constant 0 : index
    %c0_11 = arith.constant 0 : index
    %23 = vector.load %arg5[%c0_9, %c0_10, %c0_11] : memref<1x32x128xf32, #tpu.memory_space<vmem>>, vector<1x1x128xf32>
    %24 = vector.shape_cast %23 : vector<1x1x128xf32> to vector<1x128xf32>
    %25 = vector.shape_cast %22 : vector<1x128xf32> to vector<1x1x128xf32>
    tpu.vector_store %arg5[%c0_9, %c0_10, %c0_11], %25 {strides = array<i32>} : memref<1x32x128xf32, #tpu.memory_space<vmem>>, vector<1x1x128xf32>,
    %c0_12 = arith.constant 0 : index
    %c0_13 = arith.constant 0 : index
    %c0_14 = arith.constant 0 : index
    %26 = vector.load %arg1[%c0_12, %c0_13, %c0_14] : memref<1x16x128xf32, #tpu.memory_space<vmem>>, vector<1x16x128xf32>
    %27 = vector.shape_cast %26 : vector<1x16x128xf32> to vector<16x128xf32>
    %c1 = arith.constant 1 : index
    %c0_15 = arith.constant 0 : index
    %28 = vector.load %arg2[%c1, %c0_15] : memref<32x128xf32, #tpu.memory_space<vmem>>, vector<16x128xf32>
    %29 = arith.addf %27, %28 : vector<16x128xf32>
    %cst_16 = arith.constant dense<0.000000e+00> : vector<16xf32>
    %30 = vector.multi_reduction <add>, %29, %cst_16 [1] : vector<16x128xf32> to vector<16xf32>
    %31 = vector.shape_cast %30 : vector<16xf32> to vector<16x1xf32>
    %cst_17 = arith.constant 1.280000e+02 : f32
    %32 = vector.broadcast %cst_17 : f32 to vector<16x1xf32>
    %33 = arith.divf %31, %32 : vector<16x1xf32>
    %34 = vector.broadcast %33 : vector<16x1xf32> to vector<16x128xf32>
    %35 = arith.subf %29, %34 : vector<16x128xf32>
    %36 = arith.mulf %35, %35 : vector<16x128xf32>
    %cst_18 = arith.constant dense<0.000000e+00> : vector<16xf32>
    %37 = vector.multi_reduction <add>, %36, %cst_18 [1] : vector<16x128xf32> to vector<16xf32>
    %38 = vector.shape_cast %37 : vector<16xf32> to vector<16x1xf32>
    %cst_19 = arith.constant 1.280000e+02 : f32
    %39 = vector.broadcast %cst_19 : f32 to vector<16x1xf32>
    %40 = arith.divf %38, %39 : vector<16x1xf32>
    %41 = vector.broadcast %33 : vector<16x1xf32> to vector<16x128xf32>
    %42 = arith.subf %29, %41 : vector<16x128xf32>
    %cst_20 = arith.constant 9.99999974E-6 : f32
    %43 = vector.broadcast %cst_20 : f32 to vector<16x1xf32>
    %44 = arith.addf %40, %43 : vector<16x1xf32>
    %45 = math.rsqrt %44 : vector<16x1xf32>
    %46 = vector.broadcast %45 : vector<16x1xf32> to vector<16x128xf32>
    %47 = arith.mulf %42, %46 : vector<16x128xf32>
    %48 = vector.broadcast %0 : vector<1x128xf32> to vector<16x128xf32>
    %49 = arith.mulf %47, %48 : vector<16x128xf32>
    %50 = vector.broadcast %1 : vector<1x128xf32> to vector<16x128xf32>
    %51 = arith.addf %49, %50 : vector<16x128xf32>
    %c0_21 = arith.constant 0 : index
    %c1_22 = arith.constant 1 : index
    %c0_23 = arith.constant 0 : index
    %52 = vector.load %arg5[%c0_21, %c1_22, %c0_23] : memref<1x32x128xf32, #tpu.memory_space<vmem>>, vector<1x16x128xf32>
    %53 = vector.shape_cast %52 : vector<1x16x128xf32> to vector<16x128xf32>
    %54 = vector.shape_cast %51 : vector<16x128xf32> to vector<1x16x128xf32>
    tpu.vector_store %arg5[%c0_21, %c1_22, %c0_23], %54 {strides = array<i32>} : memref<1x32x128xf32, #tpu.memory_space<vmem>>, vector<1x16x128xf32>,
    %cst_24 = arith.constant 0.000000e+00 : f32
    %55 = vector.broadcast %cst_24 : f32 to vector<15x128xf32>
    %c0_25 = arith.constant 0 : index
    %c17 = arith.constant 17 : index
    %c0_26 = arith.constant 0 : index
    %56 = vector.load %arg5[%c0_25, %c17, %c0_26] : memref<1x32x128xf32, #tpu.memory_space<vmem>>, vector<1x15x128xf32>
    %57 = vector.shape_cast %56 : vector<1x15x128xf32> to vector<15x128xf32>
    %58 = vector.shape_cast %55 : vector<15x128xf32> to vector<1x15x128xf32>
    tpu.vector_store %arg5[%c0_25, %c17, %c0_26], %58 {strides = array<i32>} : memref<1x32x128xf32, #tpu.memory_space<vmem>>, vector<1x15x128xf32>,
    return
  }
  func.func @transform_0(%arg0: i32) -> (i32, i32, i32) {
    %c0_i32 = arith.constant 0 : i32
    %c0_i32_0 = arith.constant 0 : i32
    %c0_i32_1 = arith.constant 0 : i32
    return %arg0, %c0_i32, %c0_i32_0 : i32, i32, i32
  }
  func.func @transform_1(%arg0: i32) -> (i32, i32) {
    %c0_i32 = arith.constant 0 : i32
    %c0_i32_0 = arith.constant 0 : i32
    %c0_i32_1 = arith.constant 0 : i32
    return %c0_i32, %c0_i32_0 : i32, i32
  }
  func.func @transform_2(%arg0: i32) -> (i32, i32) {
    %c0_i32 = arith.constant 0 : i32
    %c0_i32_0 = arith.constant 0 : i32
    %c0_i32_1 = arith.constant 0 : i32
    return %c0_i32, %c0_i32_0 : i32, i32
  }
  func.func @transform_3(%arg0: i32) -> (i32, i32) {
    %c0_i32 = arith.constant 0 : i32
    %c0_i32_0 = arith.constant 0 : i32
    %c0_i32_1 = arith.constant 0 : i32
    return %c0_i32, %c0_i32_0 : i32, i32
  }
  func.func @transform_4(%arg0: i32) -> (i32, i32, i32) {
    %c0_i32 = arith.constant 0 : i32
    %c0_i32_0 = arith.constant 0 : i32
    %c0_i32_1 = arith.constant 0 : i32
    return %arg0, %c0_i32, %c0_i32_0 : i32, i32, i32
  }
}

module attributes {stable_mosaic.version = 11 : i64} {
  func.func @_matmul_kernel(%arg0: i32, %arg1: i32, %arg2: i32, %arg3: memref<64x128xbf16, #tpu.memory_space<vmem>>, %arg4: memref<128x384xbf16, #tpu.memory_space<vmem>>, %arg5: memref<1x384xf32, #tpu.memory_space<vmem>>, %arg6: memref<64x384xbf16, #tpu.memory_space<vmem>>) attributes {dimension_semantics = [#tpu.dimension_semantics<parallel>, #tpu.dimension_semantics<parallel>, #tpu.dimension_semantics<arbitrary>], iteration_bounds = array<i64: 1, 1, 1>, scalar_prefetch = 0 : i64, scratch_operands = 0 : i64, tpu.core_type = #tpu.core_type<tc>, window_params = [{transform_indices = @transform_0, window_bounds = array<i64: 64, 128>}, {transform_indices = @transform_1, window_bounds = array<i64: 128, 384>}, {transform_indices = @transform_2, window_bounds = array<i64: 1, 384>}, {transform_indices = @transform_3, window_bounds = array<i64: 64, 384>}]} {
    %c0 = arith.constant 0 : index
    %c0_0 = arith.constant 0 : index
    %0 = vector.load %arg3[%c0, %c0_0] : memref<64x128xbf16, #tpu.memory_space<vmem>>, vector<64x128xbf16>
    %c0_1 = arith.constant 0 : index
    %c0_2 = arith.constant 0 : index
    %1 = vector.load %arg4[%c0_1, %c0_2] : memref<128x384xbf16, #tpu.memory_space<vmem>>, vector<128x384xbf16>
    %cst = arith.constant dense<0.000000e+00> : vector<64x384xf32>
    %2 = tpu.matmul %0, %1, %cst {dimension_numbers = #tpu.dot_dimension_numbers<[1], [0], [0], [1], [0, 0, 1, 1], [], []>} : vector<64x128xbf16>, vector<128x384xbf16>, vector<64x384xf32> -> vector<64x384xf32>
    %c0_3 = arith.constant 0 : index
    %c0_4 = arith.constant 0 : index
    %3 = vector.load %arg5[%c0_3, %c0_4] : memref<1x384xf32, #tpu.memory_space<vmem>>, vector<1x384xf32>
    %4 = vector.broadcast %3 : vector<1x384xf32> to vector<64x384xf32>
    %5 = arith.addf %2, %4 : vector<64x384xf32>
    %6 = arith.truncf %5 : vector<64x384xf32> to vector<64x384xbf16>
    %c0_5 = arith.constant 0 : index
    %c0_6 = arith.constant 0 : index
    %7 = vector.load %arg6[%c0_5, %c0_6] : memref<64x384xbf16, #tpu.memory_space<vmem>>, vector<64x384xbf16>
    tpu.vector_store %arg6[%c0_5, %c0_6], %6 {strides = array<i32>} : memref<64x384xbf16, #tpu.memory_space<vmem>>, vector<64x384xbf16>,
    return
  }
  func.func @transform_0(%arg0: i32, %arg1: i32, %arg2: i32) -> (i32, i32) {
    %c0_i32 = arith.constant 0 : i32
    return %arg0, %arg2 : i32, i32
  }
  func.func @transform_1(%arg0: i32, %arg1: i32, %arg2: i32) -> (i32, i32) {
    %c0_i32 = arith.constant 0 : i32
    return %arg2, %arg1 : i32, i32
  }
  func.func @transform_2(%arg0: i32, %arg1: i32, %arg2: i32) -> (i32, i32) {
    %c0_i32 = arith.constant 0 : i32
    %c0_i32_0 = arith.constant 0 : i32
    return %c0_i32, %arg1 : i32, i32
  }
  func.func @transform_3(%arg0: i32, %arg1: i32, %arg2: i32) -> (i32, i32) {
    %c0_i32 = arith.constant 0 : i32
    return %arg0, %arg1 : i32, i32
  }
}

module attributes {stable_mosaic.version = 11 : i64} {
  func.func @_matmul_kernel(%arg0: i32, %arg1: i32, %arg2: i32, %arg3: memref<32x192xbf16, #tpu.memory_space<vmem>>, %arg4: memref<192x128xbf16, #tpu.memory_space<vmem>>, %arg5: memref<1x128xf32, #tpu.memory_space<vmem>>, %arg6: memref<32x128xf32, #tpu.memory_space<vmem>>) attributes {dimension_semantics = [#tpu.dimension_semantics<parallel>, #tpu.dimension_semantics<parallel>, #tpu.dimension_semantics<arbitrary>], iteration_bounds = array<i64: 1, 1, 1>, scalar_prefetch = 0 : i64, scratch_operands = 0 : i64, tpu.core_type = #tpu.core_type<tc>, window_params = [{transform_indices = @transform_0, window_bounds = array<i64: 32, 192>}, {transform_indices = @transform_1, window_bounds = array<i64: 192, 128>}, {transform_indices = @transform_2, window_bounds = array<i64: 1, 128>}, {transform_indices = @transform_3, window_bounds = array<i64: 32, 128>}]} {
    %c0 = arith.constant 0 : index
    %c0_0 = arith.constant 0 : index
    %0 = vector.load %arg3[%c0, %c0_0] : memref<32x192xbf16, #tpu.memory_space<vmem>>, vector<32x192xbf16>
    %c0_1 = arith.constant 0 : index
    %c0_2 = arith.constant 0 : index
    %1 = vector.load %arg4[%c0_1, %c0_2] : memref<192x128xbf16, #tpu.memory_space<vmem>>, vector<192x128xbf16>
    %cst = arith.constant dense<0.000000e+00> : vector<32x128xf32>
    %2 = tpu.matmul %0, %1, %cst {dimension_numbers = #tpu.dot_dimension_numbers<[1], [0], [0], [1], [0, 0, 1, 1], [], []>} : vector<32x192xbf16>, vector<192x128xbf16>, vector<32x128xf32> -> vector<32x128xf32>
    %c0_3 = arith.constant 0 : index
    %c0_4 = arith.constant 0 : index
    %3 = vector.load %arg5[%c0_3, %c0_4] : memref<1x128xf32, #tpu.memory_space<vmem>>, vector<1x128xf32>
    %4 = vector.broadcast %3 : vector<1x128xf32> to vector<32x128xf32>
    %5 = arith.addf %2, %4 : vector<32x128xf32>
    %c0_5 = arith.constant 0 : index
    %c0_6 = arith.constant 0 : index
    %6 = vector.load %arg6[%c0_5, %c0_6] : memref<32x128xf32, #tpu.memory_space<vmem>>, vector<32x128xf32>
    tpu.vector_store %arg6[%c0_5, %c0_6], %5 {strides = array<i32>} : memref<32x128xf32, #tpu.memory_space<vmem>>, vector<32x128xf32>,
    return
  }
  func.func @transform_0(%arg0: i32, %arg1: i32, %arg2: i32) -> (i32, i32) {
    %c0_i32 = arith.constant 0 : i32
    return %arg0, %arg2 : i32, i32
  }
  func.func @transform_1(%arg0: i32, %arg1: i32, %arg2: i32) -> (i32, i32) {
    %c0_i32 = arith.constant 0 : i32
    return %arg2, %arg1 : i32, i32
  }
  func.func @transform_2(%arg0: i32, %arg1: i32, %arg2: i32) -> (i32, i32) {
    %c0_i32 = arith.constant 0 : i32
    %c0_i32_0 = arith.constant 0 : i32
    return %c0_i32, %arg1 : i32, i32
  }
  func.func @transform_3(%arg0: i32, %arg1: i32, %arg2: i32) -> (i32, i32) {
    %c0_i32 = arith.constant 0 : i32
    return %arg0, %arg1 : i32, i32
  }
}

module attributes {stable_mosaic.version = 11 : i64} {
  func.func @_layernorm_kernel(%arg0: i32, %arg1: memref<64x128xf32, #tpu.memory_space<vmem>>, %arg2: memref<1x128xf32, #tpu.memory_space<vmem>>, %arg3: memref<1x128xf32, #tpu.memory_space<vmem>>, %arg4: memref<64x128xbf16, #tpu.memory_space<vmem>>) attributes {dimension_semantics = [#tpu.dimension_semantics<parallel>], iteration_bounds = array<i64: 1>, scalar_prefetch = 0 : i64, scratch_operands = 0 : i64, tpu.core_type = #tpu.core_type<tc>, window_params = [{transform_indices = @transform_0, window_bounds = array<i64: 64, 128>}, {pipeline_mode = #tpu.pipeline_mode<synchronous>, transform_indices = @transform_1, window_bounds = array<i64: 1, 128>}, {pipeline_mode = #tpu.pipeline_mode<synchronous>, transform_indices = @transform_2, window_bounds = array<i64: 1, 128>}, {transform_indices = @transform_3, window_bounds = array<i64: 64, 128>}]} {
    %c0 = arith.constant 0 : index
    %c0_0 = arith.constant 0 : index
    %0 = vector.load %arg1[%c0, %c0_0] : memref<64x128xf32, #tpu.memory_space<vmem>>, vector<64x128xf32>
    %cst = arith.constant dense<0.000000e+00> : vector<64xf32>
    %1 = vector.multi_reduction <add>, %0, %cst [1] : vector<64x128xf32> to vector<64xf32>
    %2 = vector.shape_cast %1 : vector<64xf32> to vector<64x1xf32>
    %cst_1 = arith.constant 1.280000e+02 : f32
    %3 = vector.broadcast %cst_1 : f32 to vector<64x1xf32>
    %4 = arith.divf %2, %3 : vector<64x1xf32>
    %5 = vector.broadcast %4 : vector<64x1xf32> to vector<64x128xf32>
    %6 = arith.subf %0, %5 : vector<64x128xf32>
    %7 = arith.mulf %6, %6 : vector<64x128xf32>
    %cst_2 = arith.constant dense<0.000000e+00> : vector<64xf32>
    %8 = vector.multi_reduction <add>, %7, %cst_2 [1] : vector<64x128xf32> to vector<64xf32>
    %9 = vector.shape_cast %8 : vector<64xf32> to vector<64x1xf32>
    %cst_3 = arith.constant 1.280000e+02 : f32
    %10 = vector.broadcast %cst_3 : f32 to vector<64x1xf32>
    %11 = arith.divf %9, %10 : vector<64x1xf32>
    %12 = vector.broadcast %4 : vector<64x1xf32> to vector<64x128xf32>
    %13 = arith.subf %0, %12 : vector<64x128xf32>
    %cst_4 = arith.constant 9.99999974E-6 : f32
    %14 = vector.broadcast %cst_4 : f32 to vector<64x1xf32>
    %15 = arith.addf %11, %14 : vector<64x1xf32>
    %16 = math.rsqrt %15 : vector<64x1xf32>
    %17 = vector.broadcast %16 : vector<64x1xf32> to vector<64x128xf32>
    %18 = arith.mulf %13, %17 : vector<64x128xf32>
    %c0_5 = arith.constant 0 : index
    %c0_6 = arith.constant 0 : index
    %19 = vector.load %arg2[%c0_5, %c0_6] : memref<1x128xf32, #tpu.memory_space<vmem>>, vector<1x128xf32>
    %20 = vector.broadcast %19 : vector<1x128xf32> to vector<64x128xf32>
    %21 = arith.mulf %18, %20 : vector<64x128xf32>
    %c0_7 = arith.constant 0 : index
    %c0_8 = arith.constant 0 : index
    %22 = vector.load %arg3[%c0_7, %c0_8] : memref<1x128xf32, #tpu.memory_space<vmem>>, vector<1x128xf32>
    %23 = vector.broadcast %22 : vector<1x128xf32> to vector<64x128xf32>
    %24 = arith.addf %21, %23 : vector<64x128xf32>
    %25 = arith.truncf %24 : vector<64x128xf32> to vector<64x128xbf16>
    %c0_9 = arith.constant 0 : index
    %c0_10 = arith.constant 0 : index
    %26 = vector.load %arg4[%c0_9, %c0_10] : memref<64x128xbf16, #tpu.memory_space<vmem>>, vector<64x128xbf16>
    tpu.vector_store %arg4[%c0_9, %c0_10], %25 {strides = array<i32>} : memref<64x128xbf16, #tpu.memory_space<vmem>>, vector<64x128xbf16>,
    return
  }
  func.func @transform_0(%arg0: i32) -> (i32, i32) {
    %c0_i32 = arith.constant 0 : i32
    %c0_i32_0 = arith.constant 0 : i32
    return %arg0, %c0_i32 : i32, i32
  }
  func.func @transform_1(%arg0: i32) -> (i32, i32) {
    %c0_i32 = arith.constant 0 : i32
    %c0_i32_0 = arith.constant 0 : i32
    %c0_i32_1 = arith.constant 0 : i32
    return %c0_i32, %c0_i32_0 : i32, i32
  }
  func.func @transform_2(%arg0: i32) -> (i32, i32) {
    %c0_i32 = arith.constant 0 : i32
    %c0_i32_0 = arith.constant 0 : i32
    %c0_i32_1 = arith.constant 0 : i32
    return %c0_i32, %c0_i32_0 : i32, i32
  }
  func.func @transform_3(%arg0: i32) -> (i32, i32) {
    %c0_i32 = arith.constant 0 : i32
    %c0_i32_0 = arith.constant 0 : i32
    return %arg0, %c0_i32 : i32, i32
  }
}

module attributes {stable_mosaic.version = 11 : i64} {
  func.func @_matmul_kernel(%arg0: i32, %arg1: i32, %arg2: i32, %arg3: memref<64x128xbf16, #tpu.memory_space<vmem>>, %arg4: memref<128x128xbf16, #tpu.memory_space<vmem>>, %arg5: memref<1x128xf32, #tpu.memory_space<vmem>>, %arg6: memref<64x128xf32, #tpu.memory_space<vmem>>, %arg7: memref<64x128xf32, #tpu.memory_space<vmem>>) attributes {dimension_semantics = [#tpu.dimension_semantics<parallel>, #tpu.dimension_semantics<parallel>, #tpu.dimension_semantics<arbitrary>], iteration_bounds = array<i64: 1, 1, 1>, scalar_prefetch = 0 : i64, scratch_operands = 0 : i64, tpu.core_type = #tpu.core_type<tc>, window_params = [{transform_indices = @transform_0, window_bounds = array<i64: 64, 128>}, {transform_indices = @transform_1, window_bounds = array<i64: 128, 128>}, {transform_indices = @transform_2, window_bounds = array<i64: 1, 128>}, {transform_indices = @transform_3, window_bounds = array<i64: 64, 128>}, {transform_indices = @transform_4, window_bounds = array<i64: 64, 128>}]} {
    %c0 = arith.constant 0 : index
    %c0_0 = arith.constant 0 : index
    %0 = vector.load %arg3[%c0, %c0_0] : memref<64x128xbf16, #tpu.memory_space<vmem>>, vector<64x128xbf16>
    %c0_1 = arith.constant 0 : index
    %c0_2 = arith.constant 0 : index
    %1 = vector.load %arg4[%c0_1, %c0_2] : memref<128x128xbf16, #tpu.memory_space<vmem>>, vector<128x128xbf16>
    %cst = arith.constant dense<0.000000e+00> : vector<64x128xf32>
    %2 = tpu.matmul %0, %1, %cst {dimension_numbers = #tpu.dot_dimension_numbers<[1], [0], [0], [1], [0, 0, 1, 1], [], []>} : vector<64x128xbf16>, vector<128x128xbf16>, vector<64x128xf32> -> vector<64x128xf32>
    %c0_3 = arith.constant 0 : index
    %c0_4 = arith.constant 0 : index
    %3 = vector.load %arg5[%c0_3, %c0_4] : memref<1x128xf32, #tpu.memory_space<vmem>>, vector<1x128xf32>
    %4 = vector.broadcast %3 : vector<1x128xf32> to vector<64x128xf32>
    %5 = arith.addf %2, %4 : vector<64x128xf32>
    %c0_5 = arith.constant 0 : index
    %c0_6 = arith.constant 0 : index
    %6 = vector.load %arg6[%c0_5, %c0_6] : memref<64x128xf32, #tpu.memory_space<vmem>>, vector<64x128xf32>
    %7 = arith.addf %5, %6 : vector<64x128xf32>
    %c0_7 = arith.constant 0 : index
    %c0_8 = arith.constant 0 : index
    %8 = vector.load %arg7[%c0_7, %c0_8] : memref<64x128xf32, #tpu.memory_space<vmem>>, vector<64x128xf32>
    tpu.vector_store %arg7[%c0_7, %c0_8], %7 {strides = array<i32>} : memref<64x128xf32, #tpu.memory_space<vmem>>, vector<64x128xf32>,
    return
  }
  func.func @transform_0(%arg0: i32, %arg1: i32, %arg2: i32) -> (i32, i32) {
    %c0_i32 = arith.constant 0 : i32
    return %arg0, %arg2 : i32, i32
  }
  func.func @transform_1(%arg0: i32, %arg1: i32, %arg2: i32) -> (i32, i32) {
    %c0_i32 = arith.constant 0 : i32
    return %arg2, %arg1 : i32, i32
  }
  func.func @transform_2(%arg0: i32, %arg1: i32, %arg2: i32) -> (i32, i32) {
    %c0_i32 = arith.constant 0 : i32
    %c0_i32_0 = arith.constant 0 : i32
    return %c0_i32, %arg1 : i32, i32
  }
  func.func @transform_3(%arg0: i32, %arg1: i32, %arg2: i32) -> (i32, i32) {
    %c0_i32 = arith.constant 0 : i32
    return %arg0, %arg1 : i32, i32
  }
  func.func @transform_4(%arg0: i32, %arg1: i32, %arg2: i32) -> (i32, i32) {
    %c0_i32 = arith.constant 0 : i32
    return %arg0, %arg1 : i32, i32
  }
}

module attributes {stable_mosaic.version = 11 : i64} {
  func.func @_matmul_kernel(%arg0: i32, %arg1: i32, %arg2: i32, %arg3: memref<64x512xbf16, #tpu.memory_space<vmem>>, %arg4: memref<512x128xbf16, #tpu.memory_space<vmem>>, %arg5: memref<1x128xf32, #tpu.memory_space<vmem>>, %arg6: memref<64x128xf32, #tpu.memory_space<vmem>>, %arg7: memref<64x128xf32, #tpu.memory_space<vmem>>) attributes {dimension_semantics = [#tpu.dimension_semantics<parallel>, #tpu.dimension_semantics<parallel>, #tpu.dimension_semantics<arbitrary>], iteration_bounds = array<i64: 1, 1, 1>, scalar_prefetch = 0 : i64, scratch_operands = 0 : i64, tpu.core_type = #tpu.core_type<tc>, window_params = [{transform_indices = @transform_0, window_bounds = array<i64: 64, 512>}, {transform_indices = @transform_1, window_bounds = array<i64: 512, 128>}, {transform_indices = @transform_2, window_bounds = array<i64: 1, 128>}, {transform_indices = @transform_3, window_bounds = array<i64: 64, 128>}, {transform_indices = @transform_4, window_bounds = array<i64: 64, 128>}]} {
    %c0 = arith.constant 0 : index
    %c0_0 = arith.constant 0 : index
    %0 = vector.load %arg3[%c0, %c0_0] : memref<64x512xbf16, #tpu.memory_space<vmem>>, vector<64x512xbf16>
    %c0_1 = arith.constant 0 : index
    %c0_2 = arith.constant 0 : index
    %1 = vector.load %arg4[%c0_1, %c0_2] : memref<512x128xbf16, #tpu.memory_space<vmem>>, vector<512x128xbf16>
    %cst = arith.constant dense<0.000000e+00> : vector<64x128xf32>
    %2 = tpu.matmul %0, %1, %cst {dimension_numbers = #tpu.dot_dimension_numbers<[1], [0], [0], [1], [0, 0, 1, 1], [], []>} : vector<64x512xbf16>, vector<512x128xbf16>, vector<64x128xf32> -> vector<64x128xf32>
    %c0_3 = arith.constant 0 : index
    %c0_4 = arith.constant 0 : index
    %3 = vector.load %arg5[%c0_3, %c0_4] : memref<1x128xf32, #tpu.memory_space<vmem>>, vector<1x128xf32>
    %4 = vector.broadcast %3 : vector<1x128xf32> to vector<64x128xf32>
    %5 = arith.addf %2, %4 : vector<64x128xf32>
    %c0_5 = arith.constant 0 : index
    %c0_6 = arith.constant 0 : index
    %6 = vector.load %arg6[%c0_5, %c0_6] : memref<64x128xf32, #tpu.memory_space<vmem>>, vector<64x128xf32>
    %7 = arith.addf %5, %6 : vector<64x128xf32>
    %c0_7 = arith.constant 0 : index
    %c0_8 = arith.constant 0 : index
    %8 = vector.load %arg7[%c0_7, %c0_8] : memref<64x128xf32, #tpu.memory_space<vmem>>, vector<64x128xf32>
    tpu.vector_store %arg7[%c0_7, %c0_8], %7 {strides = array<i32>} : memref<64x128xf32, #tpu.memory_space<vmem>>, vector<64x128xf32>,
    return
  }
  func.func @transform_0(%arg0: i32, %arg1: i32, %arg2: i32) -> (i32, i32) {
    %c0_i32 = arith.constant 0 : i32
    return %arg0, %arg2 : i32, i32
  }
  func.func @transform_1(%arg0: i32, %arg1: i32, %arg2: i32) -> (i32, i32) {
    %c0_i32 = arith.constant 0 : i32
    return %arg2, %arg1 : i32, i32
  }
  func.func @transform_2(%arg0: i32, %arg1: i32, %arg2: i32) -> (i32, i32) {
    %c0_i32 = arith.constant 0 : i32
    %c0_i32_0 = arith.constant 0 : i32
    return %c0_i32, %arg1 : i32, i32
  }
  func.func @transform_3(%arg0: i32, %arg1: i32, %arg2: i32) -> (i32, i32) {
    %c0_i32 = arith.constant 0 : i32
    return %arg0, %arg1 : i32, i32
  }
  func.func @transform_4(%arg0: i32, %arg1: i32, %arg2: i32) -> (i32, i32) {
    %c0_i32 = arith.constant 0 : i32
    return %arg0, %arg1 : i32, i32
  }
}

module attributes {stable_mosaic.version = 11 : i64} {
  func.func @_attention_kernel(%arg0: i32, %arg1: i32, %arg2: memref<1x32x128xbf16, #tpu.memory_space<vmem>>, %arg3: memref<1x32x128xbf16, #tpu.memory_space<vmem>>, %arg4: memref<1x32x128xbf16, #tpu.memory_space<vmem>>, %arg5: memref<1x32x128xbf16, #tpu.memory_space<vmem>>) attributes {dimension_semantics = [#tpu.dimension_semantics<parallel>, #tpu.dimension_semantics<parallel>], iteration_bounds = array<i64: 2, 1>, scalar_prefetch = 0 : i64, scratch_operands = 0 : i64, tpu.core_type = #tpu.core_type<tc>, window_params = [{transform_indices = @transform_0, window_bounds = array<i64: 1, 32, 128>}, {transform_indices = @transform_1, window_bounds = array<i64: 1, 32, 128>}, {transform_indices = @transform_2, window_bounds = array<i64: 1, 32, 128>}, {transform_indices = @transform_3, window_bounds = array<i64: 1, 32, 128>}]} {
    %0 = tpu.iota {dimensions = array<i32: 1>} : vector<1x32xi32>
    %c17_i32 = arith.constant 17 : i32
    %1 = vector.broadcast %c17_i32 : i32 to vector<1x32xi32>
    %2 = arith.cmpi slt, %0, %1 : vector<1x32xi32>
    %cst = arith.constant 0.000000e+00 : f32
    %cst_0 = arith.constant -1.000000e+30 : f32
    %3 = vector.broadcast %cst : f32 to vector<1x32xf32>
    %4 = vector.broadcast %cst_0 : f32 to vector<1x32xf32>
    %5 = arith.select %2, %3, %4 : vector<1x32xi1>, vector<1x32xf32>
    %c0 = arith.constant 0 : index
    %c0_1 = arith.constant 0 : index
    %c0_2 = arith.constant 0 : index
    %6 = vector.load %arg2[%c0, %c0_1, %c0_2] : memref<1x32x128xbf16, #tpu.memory_space<vmem>>, vector<1x32x32xbf16>
    %7 = vector.shape_cast %6 : vector<1x32x32xbf16> to vector<32x32xbf16>
    %c0_3 = arith.constant 0 : index
    %c0_4 = arith.constant 0 : index
    %c0_5 = arith.constant 0 : index
    %8 = vector.load %arg3[%c0_3, %c0_4, %c0_5] : memref<1x32x128xbf16, #tpu.memory_space<vmem>>, vector<1x32x32xbf16>
    %9 = vector.shape_cast %8 : vector<1x32x32xbf16> to vector<32x32xbf16>
    %c0_6 = arith.constant 0 : index
    %c0_7 = arith.constant 0 : index
    %c0_8 = arith.constant 0 : index
    %10 = vector.load %arg4[%c0_6, %c0_7, %c0_8] : memref<1x32x128xbf16, #tpu.memory_space<vmem>>, vector<1x32x32xbf16>
    %11 = vector.shape_cast %10 : vector<1x32x32xbf16> to vector<32x32xbf16>
    %cst_9 = arith.constant dense<0.000000e+00> : vector<32x32xf32>
    %12 = tpu.matmul %7, %9, %cst_9 {dimension_numbers = #tpu.dot_dimension_numbers<[1], [1], [0], [0], [0, 0, 1, 0], [], []>} : vector<32x32xbf16>, vector<32x32xbf16>, vector<32x32xf32> -> vector<32x32xf32>
    %cst_10 = arith.constant 0.176776692 : f32
    %13 = vector.broadcast %cst_10 : f32 to vector<32x32xf32>
    %14 = arith.mulf %12, %13 : vector<32x32xf32>
    %15 = vector.broadcast %5 : vector<1x32xf32> to vector<32x32xf32>
    %16 = arith.addf %14, %15 : vector<32x32xf32>
    %cst_11 = arith.constant dense<0xFF800000> : vector<32xf32>
    %17 = vector.multi_reduction <maximumf>, %16, %cst_11 [1] : vector<32x32xf32> to vector<32xf32>
    %18 = vector.shape_cast %17 : vector<32xf32> to vector<32x1xf32>
    %19 = vector.broadcast %18 : vector<32x1xf32> to vector<32x32xf32>
    %20 = arith.subf %16, %19 : vector<32x32xf32>
    %21 = math.exp %20 : vector<32x32xf32>
    %cst_12 = arith.constant dense<0.000000e+00> : vector<32xf32>
    %22 = vector.multi_reduction <add>, %21, %cst_12 [1] : vector<32x32xf32> to vector<32xf32>
    %23 = vector.shape_cast %22 : vector<32xf32> to vector<32x1xf32>
    %24 = tpu.reciprocal %23 {approx = true} : vector<32x1xf32> -> vector<32x1xf32>
    %25 = vector.broadcast %24 : vector<32x1xf32> to vector<32x32xf32>
    %26 = arith.mulf %21, %25 : vector<32x32xf32>
    %27 = arith.truncf %26 : vector<32x32xf32> to vector<32x32xbf16>
    %cst_13 = arith.constant dense<0.000000e+00> : vector<32x32xf32>
    %28 = tpu.matmul %27, %11, %cst_13 {dimension_numbers = #tpu.dot_dimension_numbers<[1], [0], [0], [1], [0, 0, 1, 1], [], []>} : vector<32x32xbf16>, vector<32x32xbf16>, vector<32x32xf32> -> vector<32x32xf32>
    %c0_14 = arith.constant 0 : index
    %c0_15 = arith.constant 0 : index
    %c32 = arith.constant 32 : index
    %29 = vector.load %arg2[%c0_14, %c0_15, %c32] : memref<1x32x128xbf16, #tpu.memory_space<vmem>>, vector<1x32x32xbf16>
    %30 = vector.shape_cast %29 : vector<1x32x32xbf16> to vector<32x32xbf16>
    %c0_16 = arith.constant 0 : index
    %c0_17 = arith.constant 0 : index
    %c32_18 = arith.constant 32 : index
    %31 = vector.load %arg3[%c0_16, %c0_17, %c32_18] : memref<1x32x128xbf16, #tpu.memory_space<vmem>>, vector<1x32x32xbf16>
    %32 = vector.shape_cast %31 : vector<1x32x32xbf16> to vector<32x32xbf16>
    %c0_19 = arith.constant 0 : index
    %c0_20 = arith.constant 0 : index
    %c32_21 = arith.constant 32 : index
    %33 = vector.load %arg4[%c0_19, %c0_20, %c32_21] : memref<1x32x128xbf16, #tpu.memory_space<vmem>>, vector<1x32x32xbf16>
    %34 = vector.shape_cast %33 : vector<1x32x32xbf16> to vector<32x32xbf16>
    %cst_22 = arith.constant dense<0.000000e+00> : vector<32x32xf32>
    %35 = tpu.matmul %30, %32, %cst_22 {dimension_numbers = #tpu.dot_dimension_numbers<[1], [1], [0], [0], [0, 0, 1, 0], [], []>} : vector<32x32xbf16>, vector<32x32xbf16>, vector<32x32xf32> -> vector<32x32xf32>
    %cst_23 = arith.constant 0.176776692 : f32
    %36 = vector.broadcast %cst_23 : f32 to vector<32x32xf32>
    %37 = arith.mulf %35, %36 : vector<32x32xf32>
    %38 = vector.broadcast %5 : vector<1x32xf32> to vector<32x32xf32>
    %39 = arith.addf %37, %38 : vector<32x32xf32>
    %cst_24 = arith.constant dense<0xFF800000> : vector<32xf32>
    %40 = vector.multi_reduction <maximumf>, %39, %cst_24 [1] : vector<32x32xf32> to vector<32xf32>
    %41 = vector.shape_cast %40 : vector<32xf32> to vector<32x1xf32>
    %42 = vector.broadcast %41 : vector<32x1xf32> to vector<32x32xf32>
    %43 = arith.subf %39, %42 : vector<32x32xf32>
    %44 = math.exp %43 : vector<32x32xf32>
    %cst_25 = arith.constant dense<0.000000e+00> : vector<32xf32>
    %45 = vector.multi_reduction <add>, %44, %cst_25 [1] : vector<32x32xf32> to vector<32xf32>
    %46 = vector.shape_cast %45 : vector<32xf32> to vector<32x1xf32>
    %47 = tpu.reciprocal %46 {approx = true} : vector<32x1xf32> -> vector<32x1xf32>
    %48 = vector.broadcast %47 : vector<32x1xf32> to vector<32x32xf32>
    %49 = arith.mulf %44, %48 : vector<32x32xf32>
    %50 = arith.truncf %49 : vector<32x32xf32> to vector<32x32xbf16>
    %cst_26 = arith.constant dense<0.000000e+00> : vector<32x32xf32>
    %51 = tpu.matmul %50, %34, %cst_26 {dimension_numbers = #tpu.dot_dimension_numbers<[1], [0], [0], [1], [0, 0, 1, 1], [], []>} : vector<32x32xbf16>, vector<32x32xbf16>, vector<32x32xf32> -> vector<32x32xf32>
    %c0_27 = arith.constant 0 : index
    %c0_28 = arith.constant 0 : index
    %c64 = arith.constant 64 : index
    %52 = vector.load %arg2[%c0_27, %c0_28, %c64] : memref<1x32x128xbf16, #tpu.memory_space<vmem>>, vector<1x32x32xbf16>
    %53 = vector.shape_cast %52 : vector<1x32x32xbf16> to vector<32x32xbf16>
    %c0_29 = arith.constant 0 : index
    %c0_30 = arith.constant 0 : index
    %c64_31 = arith.constant 64 : index
    %54 = vector.load %arg3[%c0_29, %c0_30, %c64_31] : memref<1x32x128xbf16, #tpu.memory_space<vmem>>, vector<1x32x32xbf16>
    %55 = vector.shape_cast %54 : vector<1x32x32xbf16> to vector<32x32xbf16>
    %c0_32 = arith.constant 0 : index
    %c0_33 = arith.constant 0 : index
    %c64_34 = arith.constant 64 : index
    %56 = vector.load %arg4[%c0_32, %c0_33, %c64_34] : memref<1x32x128xbf16, #tpu.memory_space<vmem>>, vector<1x32x32xbf16>
    %57 = vector.shape_cast %56 : vector<1x32x32xbf16> to vector<32x32xbf16>
    %cst_35 = arith.constant dense<0.000000e+00> : vector<32x32xf32>
    %58 = tpu.matmul %53, %55, %cst_35 {dimension_numbers = #tpu.dot_dimension_numbers<[1], [1], [0], [0], [0, 0, 1, 0], [], []>} : vector<32x32xbf16>, vector<32x32xbf16>, vector<32x32xf32> -> vector<32x32xf32>
    %cst_36 = arith.constant 0.176776692 : f32
    %59 = vector.broadcast %cst_36 : f32 to vector<32x32xf32>
    %60 = arith.mulf %58, %59 : vector<32x32xf32>
    %61 = vector.broadcast %5 : vector<1x32xf32> to vector<32x32xf32>
    %62 = arith.addf %60, %61 : vector<32x32xf32>
    %cst_37 = arith.constant dense<0xFF800000> : vector<32xf32>
    %63 = vector.multi_reduction <maximumf>, %62, %cst_37 [1] : vector<32x32xf32> to vector<32xf32>
    %64 = vector.shape_cast %63 : vector<32xf32> to vector<32x1xf32>
    %65 = vector.broadcast %64 : vector<32x1xf32> to vector<32x32xf32>
    %66 = arith.subf %62, %65 : vector<32x32xf32>
    %67 = math.exp %66 : vector<32x32xf32>
    %cst_38 = arith.constant dense<0.000000e+00> : vector<32xf32>
    %68 = vector.multi_reduction <add>, %67, %cst_38 [1] : vector<32x32xf32> to vector<32xf32>
    %69 = vector.shape_cast %68 : vector<32xf32> to vector<32x1xf32>
    %70 = tpu.reciprocal %69 {approx = true} : vector<32x1xf32> -> vector<32x1xf32>
    %71 = vector.broadcast %70 : vector<32x1xf32> to vector<32x32xf32>
    %72 = arith.mulf %67, %71 : vector<32x32xf32>
    %73 = arith.truncf %72 : vector<32x32xf32> to vector<32x32xbf16>
    %cst_39 = arith.constant dense<0.000000e+00> : vector<32x32xf32>
    %74 = tpu.matmul %73, %57, %cst_39 {dimension_numbers = #tpu.dot_dimension_numbers<[1], [0], [0], [1], [0, 0, 1, 1], [], []>} : vector<32x32xbf16>, vector<32x32xbf16>, vector<32x32xf32> -> vector<32x32xf32>
    %c0_40 = arith.constant 0 : index
    %c0_41 = arith.constant 0 : index
    %c96 = arith.constant 96 : index
    %75 = vector.load %arg2[%c0_40, %c0_41, %c96] : memref<1x32x128xbf16, #tpu.memory_space<vmem>>, vector<1x32x32xbf16>
    %76 = vector.shape_cast %75 : vector<1x32x32xbf16> to vector<32x32xbf16>
    %c0_42 = arith.constant 0 : index
    %c0_43 = arith.constant 0 : index
    %c96_44 = arith.constant 96 : index
    %77 = vector.load %arg3[%c0_42, %c0_43, %c96_44] : memref<1x32x128xbf16, #tpu.memory_space<vmem>>, vector<1x32x32xbf16>
    %78 = vector.shape_cast %77 : vector<1x32x32xbf16> to vector<32x32xbf16>
    %c0_45 = arith.constant 0 : index
    %c0_46 = arith.constant 0 : index
    %c96_47 = arith.constant 96 : index
    %79 = vector.load %arg4[%c0_45, %c0_46, %c96_47] : memref<1x32x128xbf16, #tpu.memory_space<vmem>>, vector<1x32x32xbf16>
    %80 = vector.shape_cast %79 : vector<1x32x32xbf16> to vector<32x32xbf16>
    %cst_48 = arith.constant dense<0.000000e+00> : vector<32x32xf32>
    %81 = tpu.matmul %76, %78, %cst_48 {dimension_numbers = #tpu.dot_dimension_numbers<[1], [1], [0], [0], [0, 0, 1, 0], [], []>} : vector<32x32xbf16>, vector<32x32xbf16>, vector<32x32xf32> -> vector<32x32xf32>
    %cst_49 = arith.constant 0.176776692 : f32
    %82 = vector.broadcast %cst_49 : f32 to vector<32x32xf32>
    %83 = arith.mulf %81, %82 : vector<32x32xf32>
    %84 = vector.broadcast %5 : vector<1x32xf32> to vector<32x32xf32>
    %85 = arith.addf %83, %84 : vector<32x32xf32>
    %cst_50 = arith.constant dense<0xFF800000> : vector<32xf32>
    %86 = vector.multi_reduction <maximumf>, %85, %cst_50 [1] : vector<32x32xf32> to vector<32xf32>
    %87 = vector.shape_cast %86 : vector<32xf32> to vector<32x1xf32>
    %88 = vector.broadcast %87 : vector<32x1xf32> to vector<32x32xf32>
    %89 = arith.subf %85, %88 : vector<32x32xf32>
    %90 = math.exp %89 : vector<32x32xf32>
    %cst_51 = arith.constant dense<0.000000e+00> : vector<32xf32>
    %91 = vector.multi_reduction <add>, %90, %cst_51 [1] : vector<32x32xf32> to vector<32xf32>
    %92 = vector.shape_cast %91 : vector<32xf32> to vector<32x1xf32>
    %93 = tpu.reciprocal %92 {approx = true} : vector<32x1xf32> -> vector<32x1xf32>
    %94 = vector.broadcast %93 : vector<32x1xf32> to vector<32x32xf32>
    %95 = arith.mulf %90, %94 : vector<32x32xf32>
    %96 = arith.truncf %95 : vector<32x32xf32> to vector<32x32xbf16>
    %cst_52 = arith.constant dense<0.000000e+00> : vector<32x32xf32>
    %97 = tpu.matmul %96, %80, %cst_52 {dimension_numbers = #tpu.dot_dimension_numbers<[1], [0], [0], [1], [0, 0, 1, 1], [], []>} : vector<32x32xbf16>, vector<32x32xbf16>, vector<32x32xf32> -> vector<32x32xf32>
    %98 = tpu.concatenate %28, %51, %74, %97 in 1 : vector<32x32xf32>, vector<32x32xf32>, vector<32x32xf32>, vector<32x32xf32> -> vector<32x128xf32>
    %99 = arith.truncf %98 : vector<32x128xf32> to vector<32x128xbf16>
    %c0_53 = arith.constant 0 : index
    %c0_54 = arith.constant 0 : index
    %c0_55 = arith.constant 0 : index
    %100 = vector.load %arg5[%c0_53, %c0_54, %c0_55] : memref<1x32x128xbf16, #tpu.memory_space<vmem>>, vector<1x32x128xbf16>
    %101 = vector.shape_cast %100 : vector<1x32x128xbf16> to vector<32x128xbf16>
    %102 = vector.shape_cast %99 : vector<32x128xbf16> to vector<1x32x128xbf16>
    tpu.vector_store %arg5[%c0_53, %c0_54, %c0_55], %102 {strides = array<i32>} : memref<1x32x128xbf16, #tpu.memory_space<vmem>>, vector<1x32x128xbf16>,
    return
  }
  func.func @transform_0(%arg0: i32, %arg1: i32) -> (i32, i32, i32) {
    %c0_i32 = arith.constant 0 : i32
    %c0_i32_0 = arith.constant 0 : i32
    return %arg0, %c0_i32, %arg1 : i32, i32, i32
  }
  func.func @transform_1(%arg0: i32, %arg1: i32) -> (i32, i32, i32) {
    %c1_i32 = arith.constant 1 : i32
    %0 = arith.addi %arg1, %c1_i32 : i32
    %c0_i32 = arith.constant 0 : i32
    %c0_i32_0 = arith.constant 0 : i32
    return %arg0, %c0_i32, %0 : i32, i32, i32
  }
  func.func @transform_2(%arg0: i32, %arg1: i32) -> (i32, i32, i32) {
    %c2_i32 = arith.constant 2 : i32
    %0 = arith.addi %arg1, %c2_i32 : i32
    %c0_i32 = arith.constant 0 : i32
    %c0_i32_0 = arith.constant 0 : i32
    return %arg0, %c0_i32, %0 : i32, i32, i32
  }
  func.func @transform_3(%arg0: i32, %arg1: i32) -> (i32, i32, i32) {
    %c0_i32 = arith.constant 0 : i32
    %c0_i32_0 = arith.constant 0 : i32
    return %arg0, %c0_i32, %arg1 : i32, i32, i32
  }
}

module attributes {stable_mosaic.version = 11 : i64} {
  func.func @_matmul_kernel(%arg0: i32, %arg1: i32, %arg2: i32, %arg3: memref<64x128xbf16, #tpu.memory_space<vmem>>, %arg4: memref<128x512xbf16, #tpu.memory_space<vmem>>, %arg5: memref<1x512xf32, #tpu.memory_space<vmem>>, %arg6: memref<64x512xbf16, #tpu.memory_space<vmem>>) attributes {dimension_semantics = [#tpu.dimension_semantics<parallel>, #tpu.dimension_semantics<parallel>, #tpu.dimension_semantics<arbitrary>], iteration_bounds = array<i64: 1, 1, 1>, scalar_prefetch = 0 : i64, scratch_operands = 0 : i64, tpu.core_type = #tpu.core_type<tc>, window_params = [{transform_indices = @transform_0, window_bounds = array<i64: 64, 128>}, {transform_indices = @transform_1, window_bounds = array<i64: 128, 512>}, {transform_indices = @transform_2, window_bounds = array<i64: 1, 512>}, {transform_indices = @transform_3, window_bounds = array<i64: 64, 512>}]} {
    %c0 = arith.constant 0 : index
    %c0_0 = arith.constant 0 : index
    %0 = vector.load %arg3[%c0, %c0_0] : memref<64x128xbf16, #tpu.memory_space<vmem>>, vector<64x128xbf16>
    %c0_1 = arith.constant 0 : index
    %c0_2 = arith.constant 0 : index
    %1 = vector.load %arg4[%c0_1, %c0_2] : memref<128x512xbf16, #tpu.memory_space<vmem>>, vector<128x512xbf16>
    %cst = arith.constant dense<0.000000e+00> : vector<64x512xf32>
    %2 = tpu.matmul %0, %1, %cst {dimension_numbers = #tpu.dot_dimension_numbers<[1], [0], [0], [1], [0, 0, 1, 1], [], []>} : vector<64x128xbf16>, vector<128x512xbf16>, vector<64x512xf32> -> vector<64x512xf32>
    %c0_3 = arith.constant 0 : index
    %c0_4 = arith.constant 0 : index
    %3 = vector.load %arg5[%c0_3, %c0_4] : memref<1x512xf32, #tpu.memory_space<vmem>>, vector<1x512xf32>
    %4 = vector.broadcast %3 : vector<1x512xf32> to vector<64x512xf32>
    %5 = arith.addf %2, %4 : vector<64x512xf32>
    %cst_5 = arith.constant 1.702000e+00 : f32
    %6 = vector.broadcast %cst_5 : f32 to vector<64x512xf32>
    %7 = arith.mulf %6, %5 : vector<64x512xf32>
    %8 = arith.negf %7 : vector<64x512xf32>
    %9 = math.exp %8 : vector<64x512xf32>
    %cst_6 = arith.constant 1.000000e+00 : f32
    %10 = vector.broadcast %cst_6 : f32 to vector<64x512xf32>
    %11 = arith.addf %10, %9 : vector<64x512xf32>
    %12 = arith.divf %10, %11 : vector<64x512xf32>
    %13 = arith.mulf %5, %12 : vector<64x512xf32>
    %14 = arith.truncf %13 : vector<64x512xf32> to vector<64x512xbf16>
    %c0_7 = arith.constant 0 : index
    %c0_8 = arith.constant 0 : index
    %15 = vector.load %arg6[%c0_7, %c0_8] : memref<64x512xbf16, #tpu.memory_space<vmem>>, vector<64x512xbf16>
    tpu.vector_store %arg6[%c0_7, %c0_8], %14 {strides = array<i32>} : memref<64x512xbf16, #tpu.memory_space<vmem>>, vector<64x512xbf16>,
    return
  }
  func.func @transform_0(%arg0: i32, %arg1: i32, %arg2: i32) -> (i32, i32) {
    %c0_i32 = arith.constant 0 : i32
    return %arg0, %arg2 : i32, i32
  }
  func.func @transform_1(%arg0: i32, %arg1: i32, %arg2: i32) -> (i32, i32) {
    %c0_i32 = arith.constant 0 : i32
    return %arg2, %arg1 : i32, i32
  }
  func.func @transform_2(%arg0: i32, %arg1: i32, %arg2: i32) -> (i32, i32) {
    %c0_i32 = arith.constant 0 : i32
    %c0_i32_0 = arith.constant 0 : i32
    return %c0_i32, %arg1 : i32, i32
  }
  func.func @transform_3(%arg0: i32, %arg1: i32, %arg2: i32) -> (i32, i32) {
    %c0_i32 = arith.constant 0 : i32
    return %arg0, %arg1 : i32, i32
  }
}

module attributes {stable_mosaic.version = 11 : i64} {
  func.func @_layernorm_kernel(%arg0: i32, %arg1: memref<32x128xf32, #tpu.memory_space<vmem>>, %arg2: memref<1x128xf32, #tpu.memory_space<vmem>>, %arg3: memref<1x128xf32, #tpu.memory_space<vmem>>, %arg4: memref<32x128xf32, #tpu.memory_space<vmem>>) attributes {dimension_semantics = [#tpu.dimension_semantics<parallel>], iteration_bounds = array<i64: 1>, scalar_prefetch = 0 : i64, scratch_operands = 0 : i64, tpu.core_type = #tpu.core_type<tc>, window_params = [{transform_indices = @transform_0, window_bounds = array<i64: 32, 128>}, {pipeline_mode = #tpu.pipeline_mode<synchronous>, transform_indices = @transform_1, window_bounds = array<i64: 1, 128>}, {pipeline_mode = #tpu.pipeline_mode<synchronous>, transform_indices = @transform_2, window_bounds = array<i64: 1, 128>}, {transform_indices = @transform_3, window_bounds = array<i64: 32, 128>}]} {
    %c0 = arith.constant 0 : index
    %c0_0 = arith.constant 0 : index
    %0 = vector.load %arg1[%c0, %c0_0] : memref<32x128xf32, #tpu.memory_space<vmem>>, vector<32x128xf32>
    %cst = arith.constant dense<0.000000e+00> : vector<32xf32>
    %1 = vector.multi_reduction <add>, %0, %cst [1] : vector<32x128xf32> to vector<32xf32>
    %2 = vector.shape_cast %1 : vector<32xf32> to vector<32x1xf32>
    %cst_1 = arith.constant 1.280000e+02 : f32
    %3 = vector.broadcast %cst_1 : f32 to vector<32x1xf32>
    %4 = arith.divf %2, %3 : vector<32x1xf32>
    %5 = vector.broadcast %4 : vector<32x1xf32> to vector<32x128xf32>
    %6 = arith.subf %0, %5 : vector<32x128xf32>
    %7 = arith.mulf %6, %6 : vector<32x128xf32>
    %cst_2 = arith.constant dense<0.000000e+00> : vector<32xf32>
    %8 = vector.multi_reduction <add>, %7, %cst_2 [1] : vector<32x128xf32> to vector<32xf32>
    %9 = vector.shape_cast %8 : vector<32xf32> to vector<32x1xf32>
    %cst_3 = arith.constant 1.280000e+02 : f32
    %10 = vector.broadcast %cst_3 : f32 to vector<32x1xf32>
    %11 = arith.divf %9, %10 : vector<32x1xf32>
    %12 = vector.broadcast %4 : vector<32x1xf32> to vector<32x128xf32>
    %13 = arith.subf %0, %12 : vector<32x128xf32>
    %cst_4 = arith.constant 9.99999974E-6 : f32
    %14 = vector.broadcast %cst_4 : f32 to vector<32x1xf32>
    %15 = arith.addf %11, %14 : vector<32x1xf32>
    %16 = math.rsqrt %15 : vector<32x1xf32>
    %17 = vector.broadcast %16 : vector<32x1xf32> to vector<32x128xf32>
    %18 = arith.mulf %13, %17 : vector<32x128xf32>
    %c0_5 = arith.constant 0 : index
    %c0_6 = arith.constant 0 : index
    %19 = vector.load %arg2[%c0_5, %c0_6] : memref<1x128xf32, #tpu.memory_space<vmem>>, vector<1x128xf32>
    %20 = vector.broadcast %19 : vector<1x128xf32> to vector<32x128xf32>
    %21 = arith.mulf %18, %20 : vector<32x128xf32>
    %c0_7 = arith.constant 0 : index
    %c0_8 = arith.constant 0 : index
    %22 = vector.load %arg3[%c0_7, %c0_8] : memref<1x128xf32, #tpu.memory_space<vmem>>, vector<1x128xf32>
    %23 = vector.broadcast %22 : vector<1x128xf32> to vector<32x128xf32>
    %24 = arith.addf %21, %23 : vector<32x128xf32>
    %c0_9 = arith.constant 0 : index
    %c0_10 = arith.constant 0 : index
    %25 = vector.load %arg4[%c0_9, %c0_10] : memref<32x128xf32, #tpu.memory_space<vmem>>, vector<32x128xf32>
    tpu.vector_store %arg4[%c0_9, %c0_10], %24 {strides = array<i32>} : memref<32x128xf32, #tpu.memory_space<vmem>>, vector<32x128xf32>,
    return
  }
  func.func @transform_0(%arg0: i32) -> (i32, i32) {
    %c0_i32 = arith.constant 0 : i32
    %c0_i32_0 = arith.constant 0 : i32
    return %arg0, %c0_i32 : i32, i32
  }
  func.func @transform_1(%arg0: i32) -> (i32, i32) {
    %c0_i32 = arith.constant 0 : i32
    %c0_i32_0 = arith.constant 0 : i32
    %c0_i32_1 = arith.constant 0 : i32
    return %c0_i32, %c0_i32_0 : i32, i32
  }
  func.func @transform_2(%arg0: i32) -> (i32, i32) {
    %c0_i32 = arith.constant 0 : i32
    %c0_i32_0 = arith.constant 0 : i32
    %c0_i32_1 = arith.constant 0 : i32
    return %c0_i32, %c0_i32_0 : i32, i32
  }
  func.func @transform_3(%arg0: i32) -> (i32, i32) {
    %c0_i32 = arith.constant 0 : i32
    %c0_i32_0 = arith.constant 0 : i32
    return %arg0, %c0_i32 : i32, i32
  }
}

</mosaic_0001>

<llo_original>
// kernel: image_encoder_forward.19
$region0: #{image_encoder_forward.19}
  #allocation0 [shape = 'u32[]', space=smem, size = 0x4, offset = 0x4, fixed_abs, tag = 'smem constant byte address 0x4 - core index']
  #allocation1 [shape = 'u32[144,128]{1,0:T(1,128)}', space=vmem, size = 0x12000, scoped, tag = 'internal scratch']
  %s0 = inlined_call_operand.vmem [shape: f32[64,128], index: 0, kind: input, shape index: {}]
  %s1 = inlined_call_operand.vmem [shape: f32[1,128], index: 1, kind: input, shape index: {}]
  %s2 = inlined_call_operand.vmem [shape: f32[1,128], index: 2, kind: input, shape index: {}]
  %s3 = inlined_call_operand.vmem [shape: bf16[64,128], index: 3, kind: output, shape index: {}]
  %s4 = sld [smem:[#allocation0]]
  $region22: #{image_encoder_forward.19} parent=0
    _
  %s6 = ssub.s32 1, %s4
  %s7 = scalar_select 0, %s6, %s4
  // Predicated region
  $region2: #{image_encoder_forward.19} parent=0 // pred_check
    _
  $region3: #{image_encoder_forward.19} parent=0 // pred_check_branch
    %9 = sbr.rel (0) target = $region5
  $region4: #{image_encoder_forward.19} parent=0 // pred_region
    _
  $region5: #{image_encoder_forward.19} parent=0 // pred_fallthru
    _
  // Predicated region
  $region6: #{image_encoder_forward.19} parent=0 // pred_check
    _
  $region7: #{image_encoder_forward.19} parent=0 // pred_check_branch
    %11 = sbr.rel (0) target = $region9
  $region8: #{image_encoder_forward.19} parent=0 // pred_region
    _
  $region9: #{image_encoder_forward.19} parent=0 // pred_fallthru
    _
  // Predicated region
  $region10: #{image_encoder_forward.19} parent=0 // pred_check
    _
  $region11: #{image_encoder_forward.19} parent=0 // pred_check_branch
    %13 = sbr.rel (0) target = $region13
  $region12: #{image_encoder_forward.19} parent=0 // pred_region
    _
  $region13: #{image_encoder_forward.19} parent=0 // pred_fallthru
    _
  %v14 = vld [vmem:[%s0] sm:$0xff]
  %v15 = vld [vmem:[%s0 + $0x8] sm:$0xff]
  %v16 = vld [vmem:[%s0 + $0x10] sm:$0xff]
  %v17 = vld [vmem:[%s0 + $0x18] sm:$0xff]
  %v18 = vld [vmem:[%s0 + $0x20] sm:$0xff]
  %v19 = vld [vmem:[%s0 + $0x28] sm:$0xff]
  %v20 = vld [vmem:[%s0 + $0x30] sm:$0xff]
  %v21 = vld [vmem:[%s0 + $0x38] sm:$0xff]
  %22 = vadd.xlane.f32.xlu0 %v14
  %v23 = vpop.xlane.xlu0 %22
  %24 = vadd.xlane.f32.xlu0 %v15
  %v25 = vpop.xlane.xlu0 %24
  %26 = vadd.xlane.f32.xlu0 %v16
  %v27 = vpop.xlane.xlu0 %26
  %28 = vadd.xlane.f32.xlu0 %v17
  %v29 = vpop.xlane.xlu0 %28
  %30 = vadd.xlane.f32.xlu0 %v18
  %v31 = vpop.xlane.xlu0 %30
  %32 = vadd.xlane.f32.xlu0 %v19
  %v33 = vpop.xlane.xlu0 %32
  %34 = vadd.xlane.f32.xlu0 %v20
  %v35 = vpop.xlane.xlu0 %34
  %36 = vadd.xlane.f32.xlu0 %v21
  %v37 = vpop.xlane.xlu0 %36
  %v38 = vrcp.pop 128.0
  %v39 = vmul.f32 %v23, %v38
  %v40 = vmul.f32 %v25, %v38
  %v41 = vmul.f32 %v27, %v38
  %v42 = vmul.f32 %v29, %v38
  %v43 = vmul.f32 %v31, %v38
  %v44 = vmul.f32 %v33, %v38
  %v45 = vmul.f32 %v35, %v38
  %v46 = vmul.f32 %v37, %v38
  %v47 = vsub.f32 %v14, %v39
  %v48 = vsub.f32 %v15, %v40
  %v49 = vsub.f32 %v16, %v41
  %v50 = vsub.f32 %v17, %v42
  %v51 = vsub.f32 %v18, %v43
  %v52 = vsub.f32 %v19, %v44
  %v53 = vsub.f32 %v20, %v45
  %v54 = vsub.f32 %v21, %v46
  %v55 = vmul.f32 %v47, %v47
  %v56 = vmul.f32 %v48, %v48
  %v57 = vmul.f32 %v49, %v49
  %v58 = vmul.f32 %v50, %v50
  %v59 = vmul.f32 %v51, %v51
  %v60 = vmul.f32 %v52, %v52
  %v61 = vmul.f32 %v53, %v53
  %v62 = vmul.f32 %v54, %v54
  %63 = vadd.xlane.f32.xlu0 %v55
  %v64 = vpop.xlane.xlu0 %63
  %65 = vadd.xlane.f32.xlu0 %v56
  %v66 = vpop.xlane.xlu0 %65
  %67 = vadd.xlane.f32.xlu0 %v57
  %v68 = vpop.xlane.xlu0 %67
  %69 = vadd.xlane.f32.xlu0 %v58
  %v70 = vpop.xlane.xlu0 %69
  %71 = vadd.xlane.f32.xlu0 %v59
  %v72 = vpop.xlane.xlu0 %71
  %73 = vadd.xlane.f32.xlu0 %v60
  %v74 = vpop.xlane.xlu0 %73
  %75 = vadd.xlane.f32.xlu0 %v61
  %v76 = vpop.xlane.xlu0 %75
  %77 = vadd.xlane.f32.xlu0 %v62
  %v78 = vpop.xlane.xlu0 %77
  %v79 = vmul.f32 %v64, %v38
  %v80 = vmul.f32 %v66, %v38
  %v81 = vmul.f32 %v68, %v38
  %v82 = vmul.f32 %v70, %v38
  %v83 = vmul.f32 %v72, %v38
  %v84 = vmul.f32 %v74, %v38
  %v85 = vmul.f32 %v76, %v38
  %v86 = vmul.f32 %v78, %v38
  %v87 = vadd.f32 %v79, 1e-05
  %v88 = vadd.f32 %v80, 1e-05
  %v89 = vadd.f32 %v81, 1e-05
  %v90 = vadd.f32 %v82, 1e-05
  %v91 = vadd.f32 %v83, 1e-05
  %v92 = vadd.f32 %v84, 1e-05
  %v93 = vadd.f32 %v85, 1e-05
  %v94 = vadd.f32 %v86, 1e-05
  %v95 = vrsqrt.pop %v87
  %v96 = vrsqrt.pop %v88
  %v97 = vrsqrt.pop %v89
  %v98 = vrsqrt.pop %v90
  %v99 = vrsqrt.pop %v91
  %v100 = vrsqrt.pop %v92
  %v101 = vrsqrt.pop %v93
  %v102 = vrsqrt.pop %v94
  %v103 = vmul.f32 %v47, %v95
  %v104 = vmul.f32 %v48, %v96
  %v105 = vmul.f32 %v49, %v97
  %v106 = vmul.f32 %v50, %v98
  %v107 = vmul.f32 %v51, %v99
  %v108 = vmul.f32 %v52, %v100
  %v109 = vmul.f32 %v53, %v101
  %v110 = vmul.f32 %v54, %v102
  %v111 = vld [vmem:[%s1] sm:$0x1]
  %v113 = vlaneseq
  %v114 = vshrl.u32 %v113, 7
  %v115 = vsub.s32 0, %v114
  %v116 = vrot.slane %v111, %v115
  %v118 = vmul.f32 %v103, %v116
  %v119 = vmul.f32 %v104, %v116
  %v120 = vmul.f32 %v105, %v116
  %v121 = vmul.f32 %v106, %v116
  %v122 = vmul.f32 %v107, %v116
  %v123 = vmul.f32 %v108, %v116
  %v124 = vmul.f32 %v109, %v116
  %v125 = vmul.f32 %v110, %v116
  %v126 = vld [vmem:[%s2] sm:$0x1]
  %v128 = vlaneseq
  %v129 = vshrl.u32 %v128, 7
  %v130 = vsub.s32 0, %v129
  %v131 = vrot.slane %v126, %v130
  %v133 = vadd.f32 %v118, %v131
  %v134 = vadd.f32 %v119, %v131
  %v135 = vadd.f32 %v120, %v131
  %v136 = vadd.f32 %v121, %v131
  %v137 = vadd.f32 %v122, %v131
  %v138 = vadd.f32 %v123, %v131
  %v139 = vadd.f32 %v124, %v131
  %v140 = vadd.f32 %v125, %v131
  %v141 = vpack.c.bf16 %v134, %v133
  %v142 = vpack.c.bf16 %v136, %v135
  %v143 = vpack.c.bf16 %v138, %v137
  %v144 = vpack.c.bf16 %v140, %v139
  %v149 = vunpack.c.l.b16 %v141
  %v150 = vunpack.c.h.b16 %v141
  %v151 = vunpack.c.l.b16 %v142
  %v152 = vunpack.c.h.b16 %v142
  %v153 = vunpack.c.l.b16 %v143
  %v154 = vunpack.c.h.b16 %v143
  %v155 = vunpack.c.l.b16 %v144
  %v156 = vunpack.c.h.b16 %v144
  %v157 = vpack.c.b16 %v149, %v149
  %v158 = vpack.c.b16 %v150, %v150
  %v159 = vpack.c.b16 %v151, %v151
  %v160 = vpack.c.b16 %v152, %v152
  %v161 = vpack.c.b16 %v153, %v153
  %v162 = vpack.c.b16 %v154, %v154
  %v163 = vpack.c.b16 %v155, %v155
  %v164 = vpack.c.b16 %v156, %v156
  %173 = vst [vmem:[%s3] sm:$0xf] %v157
  %174 = vst [vmem:[%s3 + $0x4] sm:$0xf] %v158
  %175 = vst [vmem:[%s3 + $0x8] sm:$0xf] %v159
  %176 = vst [vmem:[%s3 + $0xc] sm:$0xf] %v160
  %177 = vst [vmem:[%s3 + $0x10] sm:$0xf] %v161
  %178 = vst [vmem:[%s3 + $0x14] sm:$0xf] %v162
  %179 = vst [vmem:[%s3 + $0x18] sm:$0xf] %v163
  %180 = vst [vmem:[%s3 + $0x1c] sm:$0xf] %v164
  // Predicated region
  $region14: #{image_encoder_forward.19} parent=0 // pred_check
    _
  $region15: #{image_encoder_forward.19} parent=0 // pred_check_branch
    %182 = sbr.rel (0) target = $region17
  $region16: #{image_encoder_forward.19} parent=0 // pred_region
    _
  $region17: #{image_encoder_forward.19} parent=0 // pred_fallthru
    _
  // Predicated region
  $region18: #{image_encoder_forward.19} parent=0 // pred_check
    _
  $region19: #{image_encoder_forward.19} parent=0 // pred_check_branch
    %184 = sbr.rel (0) target = $region21
  $region20: #{image_encoder_forward.19} parent=0 // pred_region
    _
  $region21: #{image_encoder_forward.19} parent=0 // pred_fallthru
    _

// kernel: image_encoder_forward.18
$region0: #{image_encoder_forward.18}
  #allocation0 [shape = 'u32[]', space=smem, size = 0x4, offset = 0x4, fixed_abs, tag = 'smem constant byte address 0x4 - core index']
  #allocation1 [shape = 'u32[144,128]{1,0:T(1,128)}', space=vmem, size = 0x12000, scoped, tag = 'internal scratch']
  %s0 = inlined_call_operand.vmem [shape: f32[2,16,128], index: 0, kind: input, shape index: {}]
  %s1 = inlined_call_operand.vmem [shape: f32[32,128], index: 1, kind: input, shape index: {}]
  %s2 = inlined_call_operand.vmem [shape: f32[1,128], index: 2, kind: input, shape index: {}]
  %s3 = inlined_call_operand.vmem [shape: f32[1,128], index: 3, kind: input, shape index: {}]
  %s4 = inlined_call_operand.vmem [shape: f32[2,32,128], index: 4, kind: output, shape index: {}]
  %s5 = sld [smem:[#allocation0]]
  $region49: #{image_encoder_forward.18} parent=0
    _
  %s7 = ssub.s32 1, %s5
  %s8 = scalar_select 0, %s7, %s5
  loop: start=0, step=1, limit=4
  $region2: #{image_encoder_forward.18} parent=0 // loop_pre_header
    _
  $region3: #{image_encoder_forward.18} parent=0 // loop_header
    %s10 = sphi 0, %s14
    %p11 = scmp.ge.s32.totalorder %s10, 4
    %s20 = sphi 0, %s22
    %s23 = sphi 0, %s20
    %s24 = sphi 0, %s23
    %s40 = sphi 0, %s24
    %s44 = sphi 0, %s44
    %s46 = sphi 0, %s44
    %s47 = sphi 0, %s46
    %s61 = sphi 0, %s47
    %s65 = sphi 0, %s65
    %s67 = sphi 0, %s65
    %s68 = sphi 0, %s67
    %s82 = sphi 0, %s68
    %s86 = sphi 0, %s86
    %s88 = sphi 0, %s86
    %s89 = sphi 0, %s88
    %s103 = sphi 0, %s89
    %s109 = sphi 0, %s111
    %s112 = sphi 0, %s109
    %s113 = sphi 0, %s112
    %s129 = sphi 0, %s113
  $region4: #{image_encoder_forward.18} parent=0 // loop_header_branch
    %13 = sbr.rel (%p11) target = $region8
  $region5: #{image_encoder_forward.18} parent=0 // loop_body
    %s15 = ssub.s32 %s10, 1
    %s16 = ssub.s32 %s10, 2
    %s17 = sadd.s32 %s10, 1
    %s18 = ssub.s32 %s10, %s17
    %p19 = scmp.eq.s32.totalorder %s18, 0
    %s21 = sadd.s32 %s20, 1
    %s22 = scalar_select %p19, %s20, %s21
    %p25 = pneg %p19
    %p26 = scmp.eq.s32.totalorder %s10, 1
    %p27 = por %p25, %p26
    %p28 = scmp.ne.s32.totalorder %s20, %s23
    %p29 = scmp.eq.s32.totalorder %s10, 0
    %p30 = por %p28, %p29
    %p31 = scmp.ne.s32.totalorder %s20, %s23
    %p32 = scmp.eq.s32.totalorder %s15, 1
    %p33 = por %p31, %p32
    %p34 = scmp.ne.s32.totalorder %s23, %s24
    %p35 = scmp.eq.s32.totalorder %s15, 0
    %p36 = por %p34, %p35
    %p37 = scmp.ne.s32.totalorder %s23, %s24
    %p38 = scmp.eq.s32.totalorder %s16, 1
    %p39 = por %p37, %p38
    %p41 = scmp.ne.s32.totalorder %s24, %s40
    %p42 = scmp.eq.s32.totalorder %s16, 0
    %p43 = por %p41, %p42
    %s45 = sadd.s32 %s44, 1
    %p48 = scmp.eq.s32.totalorder %s10, 1
    %p49 = scmp.ne.s32.totalorder %s44, %s46
    %p50 = scmp.eq.s32.totalorder %s10, 0
    %p51 = por %p49, %p50
    %p52 = scmp.ne.s32.totalorder %s44, %s46
    %p53 = scmp.eq.s32.totalorder %s15, 1
    %p54 = por %p52, %p53
    %p55 = scmp.ne.s32.totalorder %s46, %s47
    %p56 = scmp.eq.s32.totalorder %s15, 0
    %p57 = por %p55, %p56
    %p58 = scmp.ne.s32.totalorder %s46, %s47
    %p59 = scmp.eq.s32.totalorder %s16, 1
    %p60 = por %p58, %p59
    %p62 = scmp.ne.s32.totalorder %s47, %s61
    %p63 = scmp.eq.s32.totalorder %s16, 0
    %p64 = por %p62, %p63
    %s66 = sadd.s32 %s65, 1
    %p69 = scmp.eq.s32.totalorder %s10, 1
    %p70 = scmp.ne.s32.totalorder %s65, %s67
    %p71 = scmp.eq.s32.totalorder %s10, 0
    %p72 = por %p70, %p71
    %p73 = scmp.ne.s32.totalorder %s65, %s67
    %p74 = scmp.eq.s32.totalorder %s15, 1
    %p75 = por %p73, %p74
    %p76 = scmp.ne.s32.totalorder %s67, %s68
    %p77 = scmp.eq.s32.totalorder %s15, 0
    %p78 = por %p76, %p77
    %p79 = scmp.ne.s32.totalorder %s67, %s68
    %p80 = scmp.eq.s32.totalorder %s16, 1
    %p81 = por %p79, %p80
    %p83 = scmp.ne.s32.totalorder %s68, %s82
    %p84 = scmp.eq.s32.totalorder %s16, 0
    %p85 = por %p83, %p84
    %s87 = sadd.s32 %s86, 1
    %p90 = scmp.eq.s32.totalorder %s10, 1
    %p91 = scmp.ne.s32.totalorder %s86, %s88
    %p92 = scmp.eq.s32.totalorder %s10, 0
    %p93 = por %p91, %p92
    %p94 = scmp.ne.s32.totalorder %s86, %s88
    %p95 = scmp.eq.s32.totalorder %s15, 1
    %p96 = por %p94, %p95
    %p97 = scmp.ne.s32.totalorder %s88, %s89
    %p98 = scmp.eq.s32.totalorder %s15, 0
    %p99 = por %p97, %p98
    %p100 = scmp.ne.s32.totalorder %s88, %s89
    %p101 = scmp.eq.s32.totalorder %s16, 1
    %p102 = por %p100, %p101
    %p104 = scmp.ne.s32.totalorder %s89, %s103
    %p105 = scmp.eq.s32.totalorder %s16, 0
    %p106 = por %p104, %p105
    %s107 = ssub.s32 %s10, %s17
    %p108 = scmp.eq.s32.totalorder %s107, 0
    %s110 = sadd.s32 %s109, 1
    %s111 = scalar_select %p108, %s109, %s110
    %p114 = pneg %p108
    %p115 = scmp.eq.s32.totalorder %s10, 1
    %p116 = por %p114, %p115
    %p117 = scmp.ne.s32.totalorder %s109, %s112
    %p118 = scmp.eq.s32.totalorder %s10, 0
    %p119 = por %p117, %p118
    %p120 = scmp.ne.s32.totalorder %s109, %s112
    %p121 = scmp.eq.s32.totalorder %s15, 1
    %p122 = por %p120, %p121
    %p123 = scmp.ne.s32.totalorder %s112, %s113
    %p124 = scmp.eq.s32.totalorder %s15, 0
    %p125 = por %p123, %p124
    %p126 = scmp.ne.s32.totalorder %s112, %s113
    %p127 = scmp.eq.s32.totalorder %s16, 1
    %p128 = por %p126, %p127
    %p130 = scmp.ne.s32.totalorder %s113, %s129
    %p131 = scmp.eq.s32.totalorder %s16, 0
    %p132 = por %p130, %p131
    %p133 = scmp.le.s32.totalorder 1, %s10
    %p134 = scmp.lt.s32.totalorder %s10, 3
    %p135 = pnand %p133, %p134
    %p136 = pneg %p135
    // Predicated region
    $region9: #{image_encoder_forward.18} parent=5 // pred_check
      _
    $region10: #{image_encoder_forward.18} parent=5 // pred_check_branch
      %138 = sbr.rel (%p135) target = $region12
    $region11: #{image_encoder_forward.18} parent=5 // pred_region
      %s139 = ssub.s32 %s10, 1
      // Predicated region
      $region13: #{image_encoder_forward.18} parent=11 // pred_check
        %p140 = pneg %p57
      $region14: #{image_encoder_forward.18} parent=11 // pred_check_branch
        %142 = sbr.rel (%p140) target = $region16
      $region15: #{image_encoder_forward.18} parent=11 // pred_region
        _
      $region16: #{image_encoder_forward.18} parent=11 // pred_fallthru
        _
      // Predicated region
      $region17: #{image_encoder_forward.18} parent=11 // pred_check
        %p143 = pneg %p78
      $region18: #{image_encoder_forward.18} parent=11 // pred_check_branch
        %145 = sbr.rel (%p143) target = $region20
      $region19: #{image_encoder_forward.18} parent=11 // pred_region
        _
      $region20: #{image_encoder_forward.18} parent=11 // pred_fallthru
        _
      // Predicated region
      $region21: #{image_encoder_forward.18} parent=11 // pred_check
        %p146 = pneg %p99
      $region22: #{image_encoder_forward.18} parent=11 // pred_check_branch
        %148 = sbr.rel (%p146) target = $region24
      $region23: #{image_encoder_forward.18} parent=11 // pred_region
        _
      $region24: #{image_encoder_forward.18} parent=11 // pred_fallthru
        _
    $region12: #{image_encoder_forward.18} parent=5 // pred_fallthru
      _
    %p149 = scmp.lt.s32.totalorder %s10, 2
    // Predicated region
    $region25: #{image_encoder_forward.18} parent=5 // pred_check
      %p150 = pneg %p149
    $region26: #{image_encoder_forward.18} parent=5 // pred_check_branch
      %152 = sbr.rel (%p150) target = $region28
    $region27: #{image_encoder_forward.18} parent=5 // pred_region
      // Predicated region
      $region29: #{image_encoder_forward.18} parent=27 // pred_check
        %p153 = pneg %p30
      $region30: #{image_encoder_forward.18} parent=27 // pred_check_branch
        %155 = sbr.rel (%p153) target = $region32
      $region31: #{image_encoder_forward.18} parent=27 // pred_region
        %p156 = scmp.lt.s32.totalorder %s10, 1
        %s157 = scalar_select %p156, %s10, 1
        %s158 = smul.addr %s157, 2
        %s159 = smul.addr %s158, 8
        %s160 = scalar_lea.vmem %s0, %s159
      $region32: #{image_encoder_forward.18} parent=27 // pred_fallthru
        _
    $region28: #{image_encoder_forward.18} parent=5 // pred_fallthru
      _
    %p161 = scmp.le.s32.totalorder 1, %s10
    %p162 = scmp.lt.s32.totalorder %s10, 3
    %p163 = pnand %p161, %p162
    %p164 = pneg %p163
    // Predicated region
    $region33: #{image_encoder_forward.18} parent=5 // pred_check
      _
    $region34: #{image_encoder_forward.18} parent=5 // pred_check_branch
      %166 = sbr.rel (%p163) target = $region36
    $region35: #{image_encoder_forward.18} parent=5 // pred_region
      %s167 = ssub.s32 %s10, 1
      %p168 = scmp.lt.s32.totalorder %s15, 1
      %s169 = scalar_select %p168, %s15, 1
      %s170 = smul.addr %s169, 2
      %s171 = smul.addr %s170, 8
      %s172 = scalar_lea.vmem %s0, %s171
      %p173 = pneg %p36
      %p174 = pneg %p33
      %p175 = pneg %p57
      %p176 = pneg %p54
      %p177 = pneg %p78
      %p178 = pneg %p75
      %p179 = pneg %p99
      %p180 = pneg %p96
      %p181 = pneg %p125
      %p182 = pneg %p122
      %p183 = scmp.lt.s32.totalorder %s15, 1
      %s184 = scalar_select %p183, %s15, 1
      %s185 = smul.addr %s184, 4
      %s186 = smul.addr %s185, 8
      %s187 = scalar_lea.vmem %s4, %s186
      %p188 = scmp.lt.s32.totalorder %s15, 1
      %s189 = scalar_select %p188, %s15, 1
      %s190 = smul.addr %s189, 2
      %s191 = smul.addr %s190, 8
      %s192 = scalar_lea.vmem %s0, %s191
      %p193 = scmp.lt.s32.totalorder %s15, 1
      %s194 = scalar_select %p193, %s15, 1
      %s195 = smul.addr %s194, 4
      %s196 = smul.addr %s195, 8
      %s197 = scalar_lea.vmem %s4, %s196
      %v198 = vld [vmem:[%s2] sm:$0x1]
      %v199 = vld [vmem:[%s3] sm:$0x1]
      %v200 = vld [vmem:[%s1] sm:$0x1]
      %vm201 = vcmask 1040384
      %v202 = vsel %vm201, %v200, 0.0
      %203 = vadd.xlane.f32.xlu0 %v202
      %v204 = vpop.xlane.xlu0 %203
      %v205 = vrcp.pop 128.0
      %v206 = vmul.f32 %v204, %v205
      %v207 = vsub.f32 %v200, %v206
      %v208 = vmul.f32 %v207, %v207
      %v209 = vsel %vm201, %v208, 0.0
      %210 = vadd.xlane.f32.xlu0 %v209
      %v211 = vpop.xlane.xlu0 %210
      %v212 = vmul.f32 %v211, %v205
      %v213 = vadd.f32 %v212, 1e-05
      %v214 = vrsqrt.pop %v213
      %v215 = vmul.f32 %v207, %v214
      %v216 = vmul.f32 %v215, %v198
      %v217 = vadd.f32 %v216, %v199
      %218 = vst [vmem:[%s197] sm:$0x1] %v217
      %v219 = vld [vmem:[%s192] sm:$0xff]
      %v220 = vld [vmem:[%s192 + $0x8] sm:$0xff]
      %v221 = vld [vmem:[%s1 + $0x1] sm:$0xff]
      %v222 = vld [vmem:[%s1 + $0x9] sm:$0xff]
      %v223 = vadd.f32 %v219, %v221
      %v224 = vadd.f32 %v220, %v222
      %225 = vadd.xlane.f32.xlu0 %v223
      %v226 = vpop.xlane.xlu0 %225
      %227 = vadd.xlane.f32.xlu0 %v224
      %v228 = vpop.xlane.xlu0 %227
      %v229 = vmul.f32 %v226, %v205
      %v230 = vmul.f32 %v228, %v205
      %v231 = vsub.f32 %v223, %v229
      %v232 = vsub.f32 %v224, %v230
      %v233 = vmul.f32 %v231, %v231
      %v234 = vmul.f32 %v232, %v232
      %235 = vadd.xlane.f32.xlu0 %v233
      %v236 = vpop.xlane.xlu0 %235
      %237 = vadd.xlane.f32.xlu0 %v234
      %v238 = vpop.xlane.xlu0 %237
      %v239 = vmul.f32 %v236, %v205
      %v240 = vmul.f32 %v238, %v205
      %v241 = vadd.f32 %v239, 1e-05
      %v242 = vadd.f32 %v240, 1e-05
      %v243 = vrsqrt.pop %v241
      %v244 = vrsqrt.pop %v242
      %v245 = vmul.f32 %v231, %v243
      %v246 = vmul.f32 %v232, %v244
      %v248 = vlaneseq
      %v249 = vshrl.u32 %v248, 7
      %v250 = vsub.s32 0, %v249
      %v251 = vrot.slane %v198, %v250
      %v253 = vmul.f32 %v245, %v251
      %v254 = vmul.f32 %v246, %v251
      %v256 = vlaneseq
      %v257 = vshrl.u32 %v256, 7
      %v258 = vsub.s32 0, %v257
      %v259 = vrot.slane %v199, %v258
      %v261 = vadd.f32 %v253, %v259
      %v262 = vadd.f32 %v254, %v259
      %263 = vst [vmem:[%s197 + $0x1] sm:$0xff] %v261
      %264 = vst [vmem:[%s197 + $0x9] sm:$0xff] %v262
      %265 = vst [vmem:[%s197 + $0x11] sm:$0xff] 0.0
      %266 = vst [vmem:[%s197 + $0x19] sm:$0x7f] 0.0
      %p267 = scmp.lt.s32.totalorder %s15, 1
      %s268 = scalar_select %p267, %s15, 1
      %s269 = smul.addr %s268, 4
      %s270 = smul.addr %s269, 8
      %s271 = scalar_lea.vmem %s4, %s270
      // Predicated region
      $region37: #{image_encoder_forward.18} parent=35 // pred_check
        %p272 = pneg %p122
      $region38: #{image_encoder_forward.18} parent=35 // pred_check_branch
        %274 = sbr.rel (%p272) target = $region40
      $region39: #{image_encoder_forward.18} parent=35 // pred_region
        _
      $region40: #{image_encoder_forward.18} parent=35 // pred_fallthru
        _
    $region36: #{image_encoder_forward.18} parent=5 // pred_fallthru
      _
    %p275 = scmp.le.s32.totalorder 2, %s10
    // Predicated region
    $region41: #{image_encoder_forward.18} parent=5 // pred_check
      %p276 = pneg %p275
    $region42: #{image_encoder_forward.18} parent=5 // pred_check_branch
      %278 = sbr.rel (%p276) target = $region44
    $region43: #{image_encoder_forward.18} parent=5 // pred_region
      %s279 = ssub.s32 %s10, 2
      // Predicated region
      $region45: #{image_encoder_forward.18} parent=43 // pred_check
        %p280 = pneg %p128
      $region46: #{image_encoder_forward.18} parent=43 // pred_check_branch
        %282 = sbr.rel (%p280) target = $region48
      $region47: #{image_encoder_forward.18} parent=43 // pred_region
        %p283 = scmp.lt.s32.totalorder %s16, 1
        %s284 = scalar_select %p283, %s16, 1
        %s285 = smul.addr %s284, 4
        %s286 = smul.addr %s285, 8
        %s287 = scalar_lea.vmem %s4, %s286
      $region48: #{image_encoder_forward.18} parent=43 // pred_fallthru
        _
    $region44: #{image_encoder_forward.18} parent=5 // pred_fallthru
      _
  $region6: #{image_encoder_forward.18} parent=0 // loop_footer
    %s14 = sadd.s32 1, %s10
  $region7: #{image_encoder_forward.18} parent=0 // loop_footer_branch
    %9 = sbr.rel target = $region3
  $region8: #{image_encoder_forward.18} parent=0 // loop_exit
    _

// kernel: image_encoder_forward.17
$region0: #{image_encoder_forward.17}
  #allocation0 [shape = 'u32[]', space=smem, size = 0x4, offset = 0x4, fixed_abs, tag = 'smem constant byte address 0x4 - core index']
  #allocation1 [shape = 'u32[144,128]{1,0:T(1,128)}', space=vmem, size = 0x12000, scoped, tag = 'internal scratch']
  %s0 = inlined_call_operand.vmem [shape: bf16[32,192], index: 0, kind: input, shape index: {}]
  %s1 = inlined_call_operand.vmem [shape: bf16[192,128], index: 1, kind: input, shape index: {}]
  %s2 = inlined_call_operand.vmem [shape: f32[1,128], index: 2, kind: input, shape index: {}]
  %s3 = inlined_call_operand.vmem [shape: f32[32,128], index: 3, kind: output, shape index: {}]
  %s4 = sld [smem:[#allocation0]]
  $region22: #{image_encoder_forward.17} parent=0
    _
  %s6 = ssub.s32 1, %s4
  %s7 = scalar_select 0, %s6, %s4
  // Predicated region
  $region2: #{image_encoder_forward.17} parent=0 // pred_check
    _
  $region3: #{image_encoder_forward.17} parent=0 // pred_check_branch
    %9 = sbr.rel (0) target = $region5
  $region4: #{image_encoder_forward.17} parent=0 // pred_region
    _
  $region5: #{image_encoder_forward.17} parent=0 // pred_fallthru
    _
  // Predicated region
  $region6: #{image_encoder_forward.17} parent=0 // pred_check
    _
  $region7: #{image_encoder_forward.17} parent=0 // pred_check_branch
    %11 = sbr.rel (0) target = $region9
  $region8: #{image_encoder_forward.17} parent=0 // pred_region
    _
  $region9: #{image_encoder_forward.17} parent=0 // pred_fallthru
    _
  // Predicated region
  $region10: #{image_encoder_forward.17} parent=0 // pred_check
    _
  $region11: #{image_encoder_forward.17} parent=0 // pred_check_branch
    %13 = sbr.rel (0) target = $region13
  $region12: #{image_encoder_forward.17} parent=0 // pred_region
    _
  $region13: #{image_encoder_forward.17} parent=0 // pred_fallthru
    _
  %v15 = vld [vmem:[%s0] sm:$0xff]
  %v16 = vld [vmem:[%s0 + $0x8] sm:$0xff]
  %v17 = vld [vmem:[%s0 + $0x10] sm:$0xff]
  %v18 = vld [vmem:[%s0 + $0x18] sm:$0xff]
  %v19 = vld [vmem:[%s1] sm:$0xf]
  %v20 = vld [vmem:[%s1 + $0x4] sm:$0xf]
  %v21 = vld [vmem:[%s1 + $0x8] sm:$0xf]
  %v22 = vld [vmem:[%s1 + $0xc] sm:$0xf]
  %v23 = vld [vmem:[%s1 + $0x10] sm:$0xf]
  %v24 = vld [vmem:[%s1 + $0x14] sm:$0xf]
  %v25 = vld [vmem:[%s1 + $0x18] sm:$0xf]
  %v26 = vld [vmem:[%s1 + $0x1c] sm:$0xf]
  %v27 = vld [vmem:[%s1 + $0x20] sm:$0xf]
  %v28 = vld [vmem:[%s1 + $0x24] sm:$0xf]
  %v29 = vld [vmem:[%s1 + $0x28] sm:$0xf]
  %v30 = vld [vmem:[%s1 + $0x2c] sm:$0xf]
  %v31 = vld [vmem:[%s1 + $0x30] sm:$0xf]
  %v32 = vld [vmem:[%s1 + $0x34] sm:$0xf]
  %v33 = vld [vmem:[%s1 + $0x38] sm:$0xf]
  %v34 = vld [vmem:[%s1 + $0x3c] sm:$0xf]
  %v35 = vld [vmem:[%s1 + $0x40] sm:$0xf]
  %v36 = vld [vmem:[%s1 + $0x44] sm:$0xf]
  %v37 = vld [vmem:[%s1 + $0x48] sm:$0xf]
  %v38 = vld [vmem:[%s1 + $0x4c] sm:$0xf]
  %v39 = vld [vmem:[%s1 + $0x50] sm:$0xf]
  %v40 = vld [vmem:[%s1 + $0x54] sm:$0xf]
  %v41 = vld [vmem:[%s1 + $0x58] sm:$0xf]
  %v42 = vld [vmem:[%s1 + $0x5c] sm:$0xf]
  %v43 = vld [vmem:[%s2] sm:$0x1]
  %v45 = vlaneseq
  %v46 = vshrl.u32 %v45, 7
  %v47 = vsub.s32 0, %v46
  %v48 = vrot.slane %v43, %v47
  %v54 = vunpack.c.l.b16 %v15
  %v55 = vunpack.c.h.b16 %v15
  %v56 = vunpack.c.l.b16 %v16
  %v57 = vunpack.c.h.b16 %v16
  %v58 = vunpack.c.l.b16 %v17
  %v59 = vunpack.c.h.b16 %v17
  %v60 = vunpack.c.l.b16 %v18
  %v61 = vunpack.c.h.b16 %v18
  %v62 = vpack.c.b16 %v56, %v54
  %v63 = vpack.c.b16 %v57, %v55
  %v64 = vpack.c.b16 %v60, %v58
  %v65 = vpack.c.b16 %v61, %v59
  %v92 = vunpack.c.l.b16 %v19
  %v93 = vunpack.c.l.b16 %v20
  %v94 = vunpack.c.l.b16 %v21
  %v95 = vunpack.c.l.b16 %v22
  %v96 = vunpack.c.l.b16 %v23
  %v97 = vunpack.c.l.b16 %v24
  %v98 = vunpack.c.l.b16 %v25
  %v99 = vunpack.c.l.b16 %v26
  %v100 = vunpack.c.l.b16 %v27
  %v101 = vunpack.c.l.b16 %v28
  %v102 = vunpack.c.l.b16 %v29
  %v103 = vunpack.c.l.b16 %v30
  %v104 = vunpack.c.l.b16 %v31
  %v105 = vunpack.c.l.b16 %v32
  %v106 = vunpack.c.l.b16 %v33
  %v107 = vunpack.c.l.b16 %v34
  %v108 = vunpack.c.l.b16 %v35
  %v109 = vunpack.c.l.b16 %v36
  %v110 = vunpack.c.l.b16 %v37
  %v111 = vunpack.c.l.b16 %v38
  %v112 = vunpack.c.l.b16 %v39
  %v113 = vunpack.c.l.b16 %v40
  %v114 = vunpack.c.l.b16 %v41
  %v115 = vunpack.c.l.b16 %v42
  %v116 = vpack.c.b16 %v93, %v92
  %v117 = vpack.c.b16 %v95, %v94
  %v118 = vpack.c.b16 %v97, %v96
  %v119 = vpack.c.b16 %v99, %v98
  %v120 = vpack.c.b16 %v101, %v100
  %v121 = vpack.c.b16 %v103, %v102
  %v122 = vpack.c.b16 %v105, %v104
  %v123 = vpack.c.b16 %v107, %v106
  %v124 = vpack.c.b16 %v109, %v108
  %v125 = vpack.c.b16 %v111, %v110
  %v126 = vpack.c.b16 %v113, %v112
  %v127 = vpack.c.b16 %v115, %v114
  %vm140 = vcmask 523264
  %v142 = vsel %vm140, %v63, 0
  %v145 = vsel %vm140, %v65, 0
  %147 = vmatprep.subr.bf16.mxu0 0
  %148 = vmatpush1.bf16.msra.mxu0 %v116
  %149 = vmatprep.subr.bf16.mxu0 0
  %150 = vmatpush1.bf16.msra.mxu0 %v117
  %151 = vmatprep.subr.bf16.mxu0 0
  %152 = vmatpush1.bf16.msra.mxu0 %v118
  %153 = vmatprep.subr.bf16.mxu0 0
  %154 = vmatpush1.bf16.msra.mxu0 %v119
  %155 = vmatprep.subr.bf16.mxu0 0
  %156 = vmatpush1.bf16.msra.mxu0 %v120
  %157 = vmatprep.subr.bf16.mxu0 0
  %158 = vmatpush1.bf16.msra.mxu0 %v121
  %159 = vmatprep.subr.bf16.mxu0 0
  %160 = vmatpush1.bf16.msra.mxu0 %v122
  %161 = vmatprep.subr.bf16.mxu0 0
  %162 = vmatpush1.bf16.msra.mxu0 %v123
  %163 = vmatprep.subr.bf16.mxu0 0
  %164 = vmatpush1.bf16.msra.mxu0 %v124
  %165 = vmatprep.subr.bf16.mxu0 0
  %166 = vmatpush1.bf16.msra.mxu0 %v125
  %167 = vmatprep.subr.bf16.mxu0 0
  %168 = vmatpush1.bf16.msra.mxu0 %v126
  %169 = vmatprep.subr.bf16.mxu0 0
  %170 = vmatpush1.bf16.msra.mxu0 %v127
  %171 = vmatprep.subr.bf16.mxu0 0
  %172 = vmatpush1.bf16.msra.mxu0 0
  %173 = vmatprep.subr.bf16.mxu0 0
  %174 = vmatpush1.bf16.msra.mxu0 0
  %175 = vmatprep.subr.bf16.mxu0 0
  %176 = vmatpush1.bf16.msra.mxu0 0
  %177 = vmatprep.subr.bf16.mxu0 0
  %178 = vmatpush1.bf16.msra.mxu0 0
  %179 = vmatprep.mubr.bf16.mxu0 %v142
  %180 = vmatmul.mubr.bf16.gmra.mrb[0].mxu0 %v62
  %v181 = vpop.f32.mrb[0].mxu0
  %v182 = vadd.f32 %v48, %v181
  %v183 = vpop.f32.mrb[0].mxu0
  %v184 = vpop.f32.mrb[0].mxu0
  %v185 = vadd.f32 %v48, %v184
  %v186 = vpop.f32.mrb[0].mxu0
  %187 = vmatprep.mubr.bf16.mxu0 %v145
  %188 = vmatmul.mubr.bf16.gmra.mrb[0].mxu0 %v64
  %v189 = vpop.f32.mrb[0].mxu0
  %v190 = vadd.f32 %v48, %v189
  %v191 = vpop.f32.mrb[0].mxu0
  %v192 = vpop.f32.mrb[0].mxu0
  %v193 = vadd.f32 %v48, %v192
  %v194 = vpop.f32.mrb[0].mxu0
  %195 = vdwg.mxu0
  %196 = vst [vmem:[%s3] sm:$0xff] %v182
  %197 = vst [vmem:[%s3 + $0x8] sm:$0xff] %v185
  %198 = vst [vmem:[%s3 + $0x10] sm:$0xff] %v190
  %199 = vst [vmem:[%s3 + $0x18] sm:$0xff] %v193
  // Predicated region
  $region14: #{image_encoder_forward.17} parent=0 // pred_check
    _
  $region15: #{image_encoder_forward.17} parent=0 // pred_check_branch
    %201 = sbr.rel (0) target = $region17
  $region16: #{image_encoder_forward.17} parent=0 // pred_region
    _
  $region17: #{image_encoder_forward.17} parent=0 // pred_fallthru
    _
  // Predicated region
  $region18: #{image_encoder_forward.17} parent=0 // pred_check
    _
  $region19: #{image_encoder_forward.17} parent=0 // pred_check_branch
    %203 = sbr.rel (0) target = $region21
  $region20: #{image_encoder_forward.17} parent=0 // pred_region
    _
  $region21: #{image_encoder_forward.17} parent=0 // pred_fallthru
    _

// kernel: image_encoder_forward.20
$region0: #{image_encoder_forward.20}
  #allocation0 [shape = 'u32[]', space=smem, size = 0x4, offset = 0x4, fixed_abs, tag = 'smem constant byte address 0x4 - core index']
  #allocation1 [shape = 'u32[144,128]{1,0:T(1,128)}', space=vmem, size = 0x12000, scoped, tag = 'internal scratch']
  %s0 = inlined_call_operand.vmem [shape: bf16[64,128], index: 0, kind: input, shape index: {}]
  %s1 = inlined_call_operand.vmem [shape: bf16[128,384], index: 1, kind: input, shape index: {}]
  %s2 = inlined_call_operand.vmem [shape: f32[1,384], index: 2, kind: input, shape index: {}]
  %s3 = inlined_call_operand.vmem [shape: bf16[64,384], index: 3, kind: output, shape index: {}]
  %s4 = sld [smem:[#allocation0]]
  $region22: #{image_encoder_forward.20} parent=0
    _
  %s6 = ssub.s32 1, %s4
  %s7 = scalar_select 0, %s6, %s4
  // Predicated region
  $region2: #{image_encoder_forward.20} parent=0 // pred_check
    _
  $region3: #{image_encoder_forward.20} parent=0 // pred_check_branch
    %9 = sbr.rel (0) target = $region5
  $region4: #{image_encoder_forward.20} parent=0 // pred_region
    _
  $region5: #{image_encoder_forward.20} parent=0 // pred_fallthru
    _
  // Predicated region
  $region6: #{image_encoder_forward.20} parent=0 // pred_check
    _
  $region7: #{image_encoder_forward.20} parent=0 // pred_check_branch
    %11 = sbr.rel (0) target = $region9
  $region8: #{image_encoder_forward.20} parent=0 // pred_region
    _
  $region9: #{image_encoder_forward.20} parent=0 // pred_fallthru
    _
  // Predicated region
  $region10: #{image_encoder_forward.20} parent=0 // pred_check
    _
  $region11: #{image_encoder_forward.20} parent=0 // pred_check_branch
    %13 = sbr.rel (0) target = $region13
  $region12: #{image_encoder_forward.20} parent=0 // pred_region
    _
  $region13: #{image_encoder_forward.20} parent=0 // pred_fallthru
    _
  %v15 = vld [vmem:[%s0] sm:$0xf]
  %v16 = vld [vmem:[%s0 + $0x4] sm:$0xf]
  %v17 = vld [vmem:[%s0 + $0x8] sm:$0xf]
  %v18 = vld [vmem:[%s0 + $0xc] sm:$0xf]
  %v19 = vld [vmem:[%s0 + $0x10] sm:$0xf]
  %v20 = vld [vmem:[%s0 + $0x14] sm:$0xf]
  %v21 = vld [vmem:[%s0 + $0x18] sm:$0xf]
  %v22 = vld [vmem:[%s0 + $0x1c] sm:$0xf]
  %v23 = vld [vmem:[%s1] sm:$0xff]
  %v24 = vld [vmem:[%s1 + $0x8] sm:$0xf]
  %v25 = vld [vmem:[%s1 + $0xc] sm:$0xff]
  %v26 = vld [vmem:[%s1 + $0x14] sm:$0xf]
  %v27 = vld [vmem:[%s1 + $0x18] sm:$0xff]
  %v28 = vld [vmem:[%s1 + $0x20] sm:$0xf]
  %v29 = vld [vmem:[%s1 + $0x24] sm:$0xff]
  %v30 = vld [vmem:[%s1 + $0x2c] sm:$0xf]
  %v31 = vld [vmem:[%s1 + $0x30] sm:$0xff]
  %v32 = vld [vmem:[%s1 + $0x38] sm:$0xf]
  %v33 = vld [vmem:[%s1 + $0x3c] sm:$0xff]
  %v34 = vld [vmem:[%s1 + $0x44] sm:$0xf]
  %v35 = vld [vmem:[%s1 + $0x48] sm:$0xff]
  %v36 = vld [vmem:[%s1 + $0x50] sm:$0xf]
  %v37 = vld [vmem:[%s1 + $0x54] sm:$0xff]
  %v38 = vld [vmem:[%s1 + $0x5c] sm:$0xf]
  %v39 = vld [vmem:[%s1 + $0x60] sm:$0xff]
  %v40 = vld [vmem:[%s1 + $0x68] sm:$0xf]
  %v41 = vld [vmem:[%s1 + $0x6c] sm:$0xff]
  %v42 = vld [vmem:[%s1 + $0x74] sm:$0xf]
  %v43 = vld [vmem:[%s1 + $0x78] sm:$0xff]
  %v44 = vld [vmem:[%s1 + $0x80] sm:$0xf]
  %v45 = vld [vmem:[%s1 + $0x84] sm:$0xff]
  %v46 = vld [vmem:[%s1 + $0x8c] sm:$0xf]
  %v47 = vld [vmem:[%s1 + $0x90] sm:$0xff]
  %v48 = vld [vmem:[%s1 + $0x98] sm:$0xf]
  %v49 = vld [vmem:[%s1 + $0x9c] sm:$0xff]
  %v50 = vld [vmem:[%s1 + $0xa4] sm:$0xf]
  %v51 = vld [vmem:[%s1 + $0xa8] sm:$0xff]
  %v52 = vld [vmem:[%s1 + $0xb0] sm:$0xf]
  %v53 = vld [vmem:[%s1 + $0xb4] sm:$0xff]
  %v54 = vld [vmem:[%s1 + $0xbc] sm:$0xf]
  %v55 = vld [vmem:[%s2] sm:$0x7]
  %v57 = vlaneseq
  %v58 = vshrl.u32 %v57, 7
  %v59 = vsub.s32 0, %v58
  %v60 = vrot.slane %v55, %v59
  %v61 = vlaneseq
  %v62 = vshrl.u32 %v61, 7
  %v63 = vsub.s32 1, %v62
  %v64 = vrot.slane %v55, %v63
  %v65 = vlaneseq
  %v66 = vshrl.u32 %v65, 7
  %v67 = vsub.s32 2, %v66
  %v68 = vrot.slane %v55, %v67
  %v80 = vunpack.c.l.b16 %v15
  %v81 = vunpack.c.l.b16 %v16
  %v82 = vunpack.c.l.b16 %v17
  %v83 = vunpack.c.l.b16 %v18
  %v84 = vunpack.c.l.b16 %v19
  %v85 = vunpack.c.l.b16 %v20
  %v86 = vunpack.c.l.b16 %v21
  %v87 = vunpack.c.l.b16 %v22
  %v88 = vpack.c.b16 %v81, %v80
  %v89 = vpack.c.b16 %v83, %v82
  %v90 = vpack.c.b16 %v85, %v84
  %v91 = vpack.c.b16 %v87, %v86
  %v128 = vunpack.c.l.b16 %v23
  %v129 = vunpack.c.h.b16 %v23
  %v130 = vunpack.c.l.b16 %v24
  %v131 = vunpack.c.l.b16 %v25
  %v132 = vunpack.c.h.b16 %v25
  %v133 = vunpack.c.l.b16 %v26
  %v134 = vunpack.c.l.b16 %v27
  %v135 = vunpack.c.h.b16 %v27
  %v136 = vunpack.c.l.b16 %v28
  %v137 = vunpack.c.l.b16 %v29
  %v138 = vunpack.c.h.b16 %v29
  %v139 = vunpack.c.l.b16 %v30
  %v140 = vunpack.c.l.b16 %v31
  %v141 = vunpack.c.h.b16 %v31
  %v142 = vunpack.c.l.b16 %v32
  %v143 = vunpack.c.l.b16 %v33
  %v144 = vunpack.c.h.b16 %v33
  %v145 = vunpack.c.l.b16 %v34
  %v146 = vunpack.c.l.b16 %v35
  %v147 = vunpack.c.h.b16 %v35
  %v148 = vunpack.c.l.b16 %v36
  %v149 = vunpack.c.l.b16 %v37
  %v150 = vunpack.c.h.b16 %v37
  %v151 = vunpack.c.l.b16 %v38
  %v152 = vunpack.c.l.b16 %v39
  %v153 = vunpack.c.h.b16 %v39
  %v154 = vunpack.c.l.b16 %v40
  %v155 = vunpack.c.l.b16 %v41
  %v156 = vunpack.c.h.b16 %v41
  %v157 = vunpack.c.l.b16 %v42
  %v158 = vunpack.c.l.b16 %v43
  %v159 = vunpack.c.h.b16 %v43
  %v160 = vunpack.c.l.b16 %v44
  %v161 = vunpack.c.l.b16 %v45
  %v162 = vunpack.c.h.b16 %v45
  %v163 = vunpack.c.l.b16 %v46
  %v164 = vunpack.c.l.b16 %v47
  %v165 = vunpack.c.h.b16 %v47
  %v166 = vunpack.c.l.b16 %v48
  %v167 = vunpack.c.l.b16 %v49
  %v168 = vunpack.c.h.b16 %v49
  %v169 = vunpack.c.l.b16 %v50
  %v170 = vunpack.c.l.b16 %v51
  %v171 = vunpack.c.h.b16 %v51
  %v172 = vunpack.c.l.b16 %v52
  %v173 = vunpack.c.l.b16 %v53
  %v174 = vunpack.c.h.b16 %v53
  %v175 = vunpack.c.l.b16 %v54
  %v176 = vpack.c.b16 %v131, %v128
  %v177 = vpack.c.b16 %v132, %v129
  %v178 = vpack.c.b16 %v133, %v130
  %v179 = vpack.c.b16 %v137, %v134
  %v180 = vpack.c.b16 %v138, %v135
  %v181 = vpack.c.b16 %v139, %v136
  %v182 = vpack.c.b16 %v143, %v140
  %v183 = vpack.c.b16 %v144, %v141
  %v184 = vpack.c.b16 %v145, %v142
  %v185 = vpack.c.b16 %v149, %v146
  %v186 = vpack.c.b16 %v150, %v147
  %v187 = vpack.c.b16 %v151, %v148
  %v188 = vpack.c.b16 %v155, %v152
  %v189 = vpack.c.b16 %v156, %v153
  %v190 = vpack.c.b16 %v157, %v154
  %v191 = vpack.c.b16 %v161, %v158
  %v192 = vpack.c.b16 %v162, %v159
  %v193 = vpack.c.b16 %v163, %v160
  %v194 = vpack.c.b16 %v167, %v164
  %v195 = vpack.c.b16 %v168, %v165
  %v196 = vpack.c.b16 %v169, %v166
  %v197 = vpack.c.b16 %v173, %v170
  %v198 = vpack.c.b16 %v174, %v171
  %v199 = vpack.c.b16 %v175, %v172
  %224 = vmatprep.subr.bf16.mxu0 %v177
  %225 = vmatpush1.bf16.msra.mxu0 %v176
  %226 = vmatprep.subr.bf16.mxu0 %v180
  %227 = vmatpush1.bf16.msra.mxu0 %v179
  %228 = vmatprep.subr.bf16.mxu0 %v183
  %229 = vmatpush1.bf16.msra.mxu0 %v182
  %230 = vmatprep.subr.bf16.mxu0 %v186
  %231 = vmatpush1.bf16.msra.mxu0 %v185
  %232 = vmatprep.subr.bf16.mxu0 %v189
  %233 = vmatpush1.bf16.msra.mxu0 %v188
  %234 = vmatprep.subr.bf16.mxu0 %v192
  %235 = vmatpush1.bf16.msra.mxu0 %v191
  %236 = vmatprep.subr.bf16.mxu0 %v195
  %237 = vmatpush1.bf16.msra.mxu0 %v194
  %238 = vmatprep.subr.bf16.mxu0 %v198
  %239 = vmatpush1.bf16.msra.mxu0 %v197
  %240 = vmatprep.subr.bf16.mxu0 0
  %241 = vmatpush1.bf16.msra.mxu0 0
  %242 = vmatprep.subr.bf16.mxu0 0
  %243 = vmatpush1.bf16.msra.mxu0 0
  %244 = vmatprep.subr.bf16.mxu0 0
  %245 = vmatpush1.bf16.msra.mxu0 0
  %246 = vmatprep.subr.bf16.mxu0 0
  %247 = vmatpush1.bf16.msra.mxu0 0
  %248 = vmatprep.subr.bf16.mxu0 0
  %249 = vmatpush1.bf16.msra.mxu0 0
  %250 = vmatprep.subr.bf16.mxu0 0
  %251 = vmatpush1.bf16.msra.mxu0 0
  %252 = vmatprep.subr.bf16.mxu0 0
  %253 = vmatpush1.bf16.msra.mxu0 0
  %254 = vmatprep.subr.bf16.mxu0 0
  %255 = vmatpush1.bf16.msra.mxu0 0
  %256 = vmatprep.mubr.bf16.mxu0 0
  %257 = vmatmul.mubr.bf16.gmra.mrb[0].mxu0 %v88
  %v258 = vpop.f32.mrb[0].mxu0
  %v259 = vadd.f32 %v60, %v258
  %v260 = vpop.f32.mrb[0].mxu0
  %v261 = vadd.f32 %v64, %v260
  %v262 = vpop.f32.mrb[0].mxu0
  %v263 = vadd.f32 %v60, %v262
  %v264 = vpop.f32.mrb[0].mxu0
  %v265 = vadd.f32 %v64, %v264
  %266 = vmatprep.mubr.bf16.mxu0 0
  %267 = vmatmul.mubr.bf16.gmra.mrb[0].mxu0 %v89
  %v268 = vpop.f32.mrb[0].mxu0
  %v269 = vadd.f32 %v60, %v268
  %v270 = vpop.f32.mrb[0].mxu0
  %v271 = vadd.f32 %v64, %v270
  %v272 = vpop.f32.mrb[0].mxu0
  %v273 = vadd.f32 %v60, %v272
  %v274 = vpop.f32.mrb[0].mxu0
  %v275 = vadd.f32 %v64, %v274
  %276 = vmatprep.mubr.bf16.mxu0 0
  %277 = vmatmul.mubr.bf16.gmra.mrb[0].mxu0 %v90
  %v278 = vpop.f32.mrb[0].mxu0
  %v279 = vadd.f32 %v60, %v278
  %v280 = vpop.f32.mrb[0].mxu0
  %v281 = vadd.f32 %v64, %v280
  %v282 = vpop.f32.mrb[0].mxu0
  %v283 = vadd.f32 %v60, %v282
  %v284 = vpop.f32.mrb[0].mxu0
  %v285 = vadd.f32 %v64, %v284
  %286 = vmatprep.mubr.bf16.mxu0 0
  %287 = vmatmul.mubr.bf16.gmra.mrb[0].mxu0 %v91
  %v288 = vpop.f32.mrb[0].mxu0
  %v289 = vadd.f32 %v60, %v288
  %v290 = vpop.f32.mrb[0].mxu0
  %v291 = vadd.f32 %v64, %v290
  %v292 = vpop.f32.mrb[0].mxu0
  %v293 = vadd.f32 %v60, %v292
  %v294 = vpop.f32.mrb[0].mxu0
  %v295 = vadd.f32 %v64, %v294
  %296 = vdwg.mxu0
  %297 = vmatprep.subr.bf16.mxu0 0
  %298 = vmatpush1.bf16.msra.mxu0 %v178
  %299 = vmatprep.subr.bf16.mxu0 0
  %300 = vmatpush1.bf16.msra.mxu0 %v181
  %301 = vmatprep.subr.bf16.mxu0 0
  %302 = vmatpush1.bf16.msra.mxu0 %v184
  %303 = vmatprep.subr.bf16.mxu0 0
  %304 = vmatpush1.bf16.msra.mxu0 %v187
  %305 = vmatprep.subr.bf16.mxu0 0
  %306 = vmatpush1.bf16.msra.mxu0 %v190
  %307 = vmatprep.subr.bf16.mxu0 0
  %308 = vmatpush1.bf16.msra.mxu0 %v193
  %309 = vmatprep.subr.bf16.mxu0 0
  %310 = vmatpush1.bf16.msra.mxu0 %v196
  %311 = vmatprep.subr.bf16.mxu0 0
  %312 = vmatpush1.bf16.msra.mxu0 %v199
  %313 = vmatprep.subr.bf16.mxu0 0
  %314 = vmatpush1.bf16.msra.mxu0 0
  %315 = vmatprep.subr.bf16.mxu0 0
  %316 = vmatpush1.bf16.msra.mxu0 0
  %317 = vmatprep.subr.bf16.mxu0 0
  %318 = vmatpush1.bf16.msra.mxu0 0
  %319 = vmatprep.subr.bf16.mxu0 0
  %320 = vmatpush1.bf16.msra.mxu0 0
  %321 = vmatprep.subr.bf16.mxu0 0
  %322 = vmatpush1.bf16.msra.mxu0 0
  %323 = vmatprep.subr.bf16.mxu0 0
  %324 = vmatpush1.bf16.msra.mxu0 0
  %325 = vmatprep.subr.bf16.mxu0 0
  %326 = vmatpush1.bf16.msra.mxu0 0
  %327 = vmatprep.subr.bf16.mxu0 0
  %328 = vmatpush1.bf16.msra.mxu0 0
  %329 = vmatprep.mubr.bf16.mxu0 0
  %330 = vmatmul.mubr.bf16.gmra.mrb[0].mxu0 %v88
  %v331 = vpop.f32.mrb[0].mxu0
  %v332 = vadd.f32 %v68, %v331
  %v333 = vpop.f32.mrb[0].mxu0
  %v334 = vpop.f32.mrb[0].mxu0
  %v335 = vadd.f32 %v68, %v334
  %v336 = vpop.f32.mrb[0].mxu0
  %337 = vmatprep.mubr.bf16.mxu0 0
  %338 = vmatmul.mubr.bf16.gmra.mrb[0].mxu0 %v89
  %v339 = vpop.f32.mrb[0].mxu0
  %v340 = vadd.f32 %v68, %v339
  %v341 = vpop.f32.mrb[0].mxu0
  %v342 = vpop.f32.mrb[0].mxu0
  %v343 = vadd.f32 %v68, %v342
  %v344 = vpop.f32.mrb[0].mxu0
  %345 = vmatprep.mubr.bf16.mxu0 0
  %346 = vmatmul.mubr.bf16.gmra.mrb[0].mxu0 %v90
  %v347 = vpop.f32.mrb[0].mxu0
  %v348 = vadd.f32 %v68, %v347
  %v349 = vpop.f32.mrb[0].mxu0
  %v350 = vpop.f32.mrb[0].mxu0
  %v351 = vadd.f32 %v68, %v350
  %v352 = vpop.f32.mrb[0].mxu0
  %353 = vmatprep.mubr.bf16.mxu0 0
  %354 = vmatmul.mubr.bf16.gmra.mrb[0].mxu0 %v91
  %v355 = vpop.f32.mrb[0].mxu0
  %v356 = vadd.f32 %v68, %v355
  %v357 = vpop.f32.mrb[0].mxu0
  %v358 = vpop.f32.mrb[0].mxu0
  %v359 = vadd.f32 %v68, %v358
  %v360 = vpop.f32.mrb[0].mxu0
  %361 = vdwg.mxu0
  %v362 = vpack.c.bf16 %v263, %v259
  %v363 = vpack.c.bf16 %v265, %v261
  %v364 = vpack.c.bf16 %v335, %v332
  %v365 = vpack.c.bf16 %v273, %v269
  %v366 = vpack.c.bf16 %v275, %v271
  %v367 = vpack.c.bf16 %v343, %v340
  %v368 = vpack.c.bf16 %v283, %v279
  %v369 = vpack.c.bf16 %v285, %v281
  %v370 = vpack.c.bf16 %v351, %v348
  %v371 = vpack.c.bf16 %v293, %v289
  %v372 = vpack.c.bf16 %v295, %v291
  %v373 = vpack.c.bf16 %v359, %v356
  %v386 = vunpack.c.l.b16 %v362
  %v387 = vunpack.c.l.b16 %v363
  %v388 = vunpack.c.l.b16 %v364
  %v389 = vunpack.c.h.b16 %v362
  %v390 = vunpack.c.h.b16 %v363
  %v391 = vunpack.c.h.b16 %v364
  %v392 = vunpack.c.l.b16 %v365
  %v393 = vunpack.c.l.b16 %v366
  %v394 = vunpack.c.l.b16 %v367
  %v395 = vunpack.c.h.b16 %v365
  %v396 = vunpack.c.h.b16 %v366
  %v397 = vunpack.c.h.b16 %v367
  %v398 = vunpack.c.l.b16 %v368
  %v399 = vunpack.c.l.b16 %v369
  %v400 = vunpack.c.l.b16 %v370
  %v401 = vunpack.c.h.b16 %v368
  %v402 = vunpack.c.h.b16 %v369
  %v403 = vunpack.c.h.b16 %v370
  %v404 = vunpack.c.l.b16 %v371
  %v405 = vunpack.c.l.b16 %v372
  %v406 = vunpack.c.l.b16 %v373
  %v407 = vunpack.c.h.b16 %v371
  %v408 = vunpack.c.h.b16 %v372
  %v409 = vunpack.c.h.b16 %v373
  %v410 = vpack.c.b16 %v387, %v386
  %v411 = vpack.c.b16 %v388, %v388
  %v412 = vpack.c.b16 %v390, %v389
  %v413 = vpack.c.b16 %v391, %v391
  %v414 = vpack.c.b16 %v393, %v392
  %v415 = vpack.c.b16 %v394, %v394
  %v416 = vpack.c.b16 %v396, %v395
  %v417 = vpack.c.b16 %v397, %v397
  %v418 = vpack.c.b16 %v399, %v398
  %v419 = vpack.c.b16 %v400, %v400
  %v420 = vpack.c.b16 %v402, %v401
  %v421 = vpack.c.b16 %v403, %v403
  %v422 = vpack.c.b16 %v405, %v404
  %v423 = vpack.c.b16 %v406, %v406
  %v424 = vpack.c.b16 %v408, %v407
  %v425 = vpack.c.b16 %v409, %v409
  %442 = vst [vmem:[%s3] sm:$0xff] %v410
  %443 = vst [vmem:[%s3 + $0x8] sm:$0xf] %v411
  %444 = vst [vmem:[%s3 + $0xc] sm:$0xff] %v412
  %445 = vst [vmem:[%s3 + $0x14] sm:$0xf] %v413
  %446 = vst [vmem:[%s3 + $0x18] sm:$0xff] %v414
  %447 = vst [vmem:[%s3 + $0x20] sm:$0xf] %v415
  %448 = vst [vmem:[%s3 + $0x24] sm:$0xff] %v416
  %449 = vst [vmem:[%s3 + $0x2c] sm:$0xf] %v417
  %450 = vst [vmem:[%s3 + $0x30] sm:$0xff] %v418
  %451 = vst [vmem:[%s3 + $0x38] sm:$0xf] %v419
  %452 = vst [vmem:[%s3 + $0x3c] sm:$0xff] %v420
  %453 = vst [vmem:[%s3 + $0x44] sm:$0xf] %v421
  %454 = vst [vmem:[%s3 + $0x48] sm:$0xff] %v422
  %455 = vst [vmem:[%s3 + $0x50] sm:$0xf] %v423
  %456 = vst [vmem:[%s3 + $0x54] sm:$0xff] %v424
  %457 = vst [vmem:[%s3 + $0x5c] sm:$0xf] %v425
  // Predicated region
  $region14: #{image_encoder_forward.20} parent=0 // pred_check
    _
  $region15: #{image_encoder_forward.20} parent=0 // pred_check_branch
    %459 = sbr.rel (0) target = $region17
  $region16: #{image_encoder_forward.20} parent=0 // pred_region
    _
  $region17: #{image_encoder_forward.20} parent=0 // pred_fallthru
    _
  // Predicated region
  $region18: #{image_encoder_forward.20} parent=0 // pred_check
    _
  $region19: #{image_encoder_forward.20} parent=0 // pred_check_branch
    %461 = sbr.rel (0) target = $region21
  $region20: #{image_encoder_forward.20} parent=0 // pred_region
    _
  $region21: #{image_encoder_forward.20} parent=0 // pred_fallthru
    _

// kernel: image_encoder_forward.22
$region0: #{image_encoder_forward.22}
  #allocation0 [shape = 'u32[]', space=smem, size = 0x4, offset = 0x4, fixed_abs, tag = 'smem constant byte address 0x4 - core index']
  #allocation1 [shape = 'u32[144,128]{1,0:T(1,128)}', space=vmem, size = 0x12000, scoped, tag = 'internal scratch']
  %s0 = inlined_call_operand.vmem [shape: bf16[64,128], index: 0, kind: input, shape index: {}]
  %s1 = inlined_call_operand.vmem [shape: bf16[128,128], index: 1, kind: input, shape index: {}]
  %s2 = inlined_call_operand.vmem [shape: f32[1,128], index: 2, kind: input, shape index: {}]
  %s3 = inlined_call_operand.vmem [shape: f32[64,128], index: 3, kind: input, shape index: {}]
  %s4 = inlined_call_operand.vmem [shape: f32[64,128], index: 4, kind: output, shape index: {}]
  %s5 = sld [smem:[#allocation0]]
  $region26: #{image_encoder_forward.22} parent=0
    _
  %s7 = ssub.s32 1, %s5
  %s8 = scalar_select 0, %s7, %s5
  // Predicated region
  $region2: #{image_encoder_forward.22} parent=0 // pred_check
    _
  $region3: #{image_encoder_forward.22} parent=0 // pred_check_branch
    %10 = sbr.rel (0) target = $region5
  $region4: #{image_encoder_forward.22} parent=0 // pred_region
    _
  $region5: #{image_encoder_forward.22} parent=0 // pred_fallthru
    _
  // Predicated region
  $region6: #{image_encoder_forward.22} parent=0 // pred_check
    _
  $region7: #{image_encoder_forward.22} parent=0 // pred_check_branch
    %12 = sbr.rel (0) target = $region9
  $region8: #{image_encoder_forward.22} parent=0 // pred_region
    _
  $region9: #{image_encoder_forward.22} parent=0 // pred_fallthru
    _
  // Predicated region
  $region10: #{image_encoder_forward.22} parent=0 // pred_check
    _
  $region11: #{image_encoder_forward.22} parent=0 // pred_check_branch
    %14 = sbr.rel (0) target = $region13
  $region12: #{image_encoder_forward.22} parent=0 // pred_region
    _
  $region13: #{image_encoder_forward.22} parent=0 // pred_fallthru
    _
  // Predicated region
  $region14: #{image_encoder_forward.22} parent=0 // pred_check
    _
  $region15: #{image_encoder_forward.22} parent=0 // pred_check_branch
    %16 = sbr.rel (0) target = $region17
  $region16: #{image_encoder_forward.22} parent=0 // pred_region
    _
  $region17: #{image_encoder_forward.22} parent=0 // pred_fallthru
    _
  %v18 = vld [vmem:[%s0] sm:$0xf]
  %v19 = vld [vmem:[%s0 + $0x4] sm:$0xf]
  %v20 = vld [vmem:[%s0 + $0x8] sm:$0xf]
  %v21 = vld [vmem:[%s0 + $0xc] sm:$0xf]
  %v22 = vld [vmem:[%s0 + $0x10] sm:$0xf]
  %v23 = vld [vmem:[%s0 + $0x14] sm:$0xf]
  %v24 = vld [vmem:[%s0 + $0x18] sm:$0xf]
  %v25 = vld [vmem:[%s0 + $0x1c] sm:$0xf]
  %v26 = vld [vmem:[%s1] sm:$0xf]
  %v27 = vld [vmem:[%s1 + $0x4] sm:$0xf]
  %v28 = vld [vmem:[%s1 + $0x8] sm:$0xf]
  %v29 = vld [vmem:[%s1 + $0xc] sm:$0xf]
  %v30 = vld [vmem:[%s1 + $0x10] sm:$0xf]
  %v31 = vld [vmem:[%s1 + $0x14] sm:$0xf]
  %v32 = vld [vmem:[%s1 + $0x18] sm:$0xf]
  %v33 = vld [vmem:[%s1 + $0x1c] sm:$0xf]
  %v34 = vld [vmem:[%s1 + $0x20] sm:$0xf]
  %v35 = vld [vmem:[%s1 + $0x24] sm:$0xf]
  %v36 = vld [vmem:[%s1 + $0x28] sm:$0xf]
  %v37 = vld [vmem:[%s1 + $0x2c] sm:$0xf]
  %v38 = vld [vmem:[%s1 + $0x30] sm:$0xf]
  %v39 = vld [vmem:[%s1 + $0x34] sm:$0xf]
  %v40 = vld [vmem:[%s1 + $0x38] sm:$0xf]
  %v41 = vld [vmem:[%s1 + $0x3c] sm:$0xf]
  %v42 = vld [vmem:[%s2] sm:$0x1]
  %v44 = vlaneseq
  %v45 = vshrl.u32 %v44, 7
  %v46 = vsub.s32 0, %v45
  %v47 = vrot.slane %v42, %v46
  %v57 = vunpack.c.l.b16 %v18
  %v58 = vunpack.c.l.b16 %v19
  %v59 = vunpack.c.l.b16 %v20
  %v60 = vunpack.c.l.b16 %v21
  %v61 = vunpack.c.l.b16 %v22
  %v62 = vunpack.c.l.b16 %v23
  %v63 = vunpack.c.l.b16 %v24
  %v64 = vunpack.c.l.b16 %v25
  %v65 = vpack.c.b16 %v58, %v57
  %v66 = vpack.c.b16 %v60, %v59
  %v67 = vpack.c.b16 %v62, %v61
  %v68 = vpack.c.b16 %v64, %v63
  %v89 = vunpack.c.l.b16 %v26
  %v90 = vunpack.c.l.b16 %v27
  %v91 = vunpack.c.l.b16 %v28
  %v92 = vunpack.c.l.b16 %v29
  %v93 = vunpack.c.l.b16 %v30
  %v94 = vunpack.c.l.b16 %v31
  %v95 = vunpack.c.l.b16 %v32
  %v96 = vunpack.c.l.b16 %v33
  %v97 = vunpack.c.l.b16 %v34
  %v98 = vunpack.c.l.b16 %v35
  %v99 = vunpack.c.l.b16 %v36
  %v100 = vunpack.c.l.b16 %v37
  %v101 = vunpack.c.l.b16 %v38
  %v102 = vunpack.c.l.b16 %v39
  %v103 = vunpack.c.l.b16 %v40
  %v104 = vunpack.c.l.b16 %v41
  %v105 = vpack.c.b16 %v90, %v89
  %v106 = vpack.c.b16 %v92, %v91
  %v107 = vpack.c.b16 %v94, %v93
  %v108 = vpack.c.b16 %v96, %v95
  %v109 = vpack.c.b16 %v98, %v97
  %v110 = vpack.c.b16 %v100, %v99
  %v111 = vpack.c.b16 %v102, %v101
  %v112 = vpack.c.b16 %v104, %v103
  %121 = vmatprep.subr.bf16.mxu0 0
  %122 = vmatpush1.bf16.msra.mxu0 %v105
  %123 = vmatprep.subr.bf16.mxu0 0
  %124 = vmatpush1.bf16.msra.mxu0 %v106
  %125 = vmatprep.subr.bf16.mxu0 0
  %126 = vmatpush1.bf16.msra.mxu0 %v107
  %127 = vmatprep.subr.bf16.mxu0 0
  %128 = vmatpush1.bf16.msra.mxu0 %v108
  %129 = vmatprep.subr.bf16.mxu0 0
  %130 = vmatpush1.bf16.msra.mxu0 %v109
  %131 = vmatprep.subr.bf16.mxu0 0
  %132 = vmatpush1.bf16.msra.mxu0 %v110
  %133 = vmatprep.subr.bf16.mxu0 0
  %134 = vmatpush1.bf16.msra.mxu0 %v111
  %135 = vmatprep.subr.bf16.mxu0 0
  %136 = vmatpush1.bf16.msra.mxu0 %v112
  %137 = vmatprep.subr.bf16.mxu0 0
  %138 = vmatpush1.bf16.msra.mxu0 0
  %139 = vmatprep.subr.bf16.mxu0 0
  %140 = vmatpush1.bf16.msra.mxu0 0
  %141 = vmatprep.subr.bf16.mxu0 0
  %142 = vmatpush1.bf16.msra.mxu0 0
  %143 = vmatprep.subr.bf16.mxu0 0
  %144 = vmatpush1.bf16.msra.mxu0 0
  %145 = vmatprep.subr.bf16.mxu0 0
  %146 = vmatpush1.bf16.msra.mxu0 0
  %147 = vmatprep.subr.bf16.mxu0 0
  %148 = vmatpush1.bf16.msra.mxu0 0
  %149 = vmatprep.subr.bf16.mxu0 0
  %150 = vmatpush1.bf16.msra.mxu0 0
  %151 = vmatprep.subr.bf16.mxu0 0
  %152 = vmatpush1.bf16.msra.mxu0 0
  %153 = vmatprep.mubr.bf16.mxu0 0
  %154 = vmatmul.mubr.bf16.gmra.mrb[0].mxu0 %v65
  %v155 = vpop.f32.mrb[0].mxu0
  %v156 = vadd.f32 %v47, %v155
  %v157 = vpop.f32.mrb[0].mxu0
  %v158 = vpop.f32.mrb[0].mxu0
  %v159 = vadd.f32 %v47, %v158
  %v160 = vpop.f32.mrb[0].mxu0
  %161 = vmatprep.mubr.bf16.mxu0 0
  %162 = vmatmul.mubr.bf16.gmra.mrb[0].mxu0 %v66
  %v163 = vpop.f32.mrb[0].mxu0
  %v164 = vadd.f32 %v47, %v163
  %v165 = vpop.f32.mrb[0].mxu0
  %v166 = vpop.f32.mrb[0].mxu0
  %v167 = vadd.f32 %v47, %v166
  %v168 = vpop.f32.mrb[0].mxu0
  %169 = vmatprep.mubr.bf16.mxu0 0
  %170 = vmatmul.mubr.bf16.gmra.mrb[0].mxu0 %v67
  %v171 = vpop.f32.mrb[0].mxu0
  %v172 = vadd.f32 %v47, %v171
  %v173 = vpop.f32.mrb[0].mxu0
  %v174 = vpop.f32.mrb[0].mxu0
  %v175 = vadd.f32 %v47, %v174
  %v176 = vpop.f32.mrb[0].mxu0
  %177 = vmatprep.mubr.bf16.mxu0 0
  %178 = vmatmul.mubr.bf16.gmra.mrb[0].mxu0 %v68
  %v179 = vpop.f32.mrb[0].mxu0
  %v180 = vadd.f32 %v47, %v179
  %v181 = vpop.f32.mrb[0].mxu0
  %v182 = vpop.f32.mrb[0].mxu0
  %v183 = vadd.f32 %v47, %v182
  %v184 = vpop.f32.mrb[0].mxu0
  %185 = vdwg.mxu0
  %v186 = vld [vmem:[%s3] sm:$0xff]
  %v187 = vld [vmem:[%s3 + $0x8] sm:$0xff]
  %v188 = vld [vmem:[%s3 + $0x10] sm:$0xff]
  %v189 = vld [vmem:[%s3 + $0x18] sm:$0xff]
  %v190 = vld [vmem:[%s3 + $0x20] sm:$0xff]
  %v191 = vld [vmem:[%s3 + $0x28] sm:$0xff]
  %v192 = vld [vmem:[%s3 + $0x30] sm:$0xff]
  %v193 = vld [vmem:[%s3 + $0x38] sm:$0xff]
  %v194 = vadd.f32 %v156, %v186
  %v195 = vadd.f32 %v159, %v187
  %v196 = vadd.f32 %v164, %v188
  %v197 = vadd.f32 %v167, %v189
  %v198 = vadd.f32 %v172, %v190
  %v199 = vadd.f32 %v175, %v191
  %v200 = vadd.f32 %v180, %v192
  %v201 = vadd.f32 %v183, %v193
  %202 = vst [vmem:[%s4] sm:$0xff] %v194
  %203 = vst [vmem:[%s4 + $0x8] sm:$0xff] %v195
  %204 = vst [vmem:[%s4 + $0x10] sm:$0xff] %v196
  %205 = vst [vmem:[%s4 + $0x18] sm:$0xff] %v197
  %206 = vst [vmem:[%s4 + $0x20] sm:$0xff] %v198
  %207 = vst [vmem:[%s4 + $0x28] sm:$0xff] %v199
  %208 = vst [vmem:[%s4 + $0x30] sm:$0xff] %v200
  %209 = vst [vmem:[%s4 + $0x38] sm:$0xff] %v201
  // Predicated region
  $region18: #{image_encoder_forward.22} parent=0 // pred_check
    _
  $region19: #{image_encoder_forward.22} parent=0 // pred_check_branch
    %211 = sbr.rel (0) target = $region21
  $region20: #{image_encoder_forward.22} parent=0 // pred_region
    _
  $region21: #{image_encoder_forward.22} parent=0 // pred_fallthru
    _
  // Predicated region
  $region22: #{image_encoder_forward.22} parent=0 // pred_check
    _
  $region23: #{image_encoder_forward.22} parent=0 // pred_check_branch
    %213 = sbr.rel (0) target = $region25
  $region24: #{image_encoder_forward.22} parent=0 // pred_region
    _
  $region25: #{image_encoder_forward.22} parent=0 // pred_fallthru
    _

// kernel: image_encoder_forward.25
$region0: #{image_encoder_forward.25}
  #allocation0 [shape = 'u32[]', space=smem, size = 0x4, offset = 0x4, fixed_abs, tag = 'smem constant byte address 0x4 - core index']
  #allocation1 [shape = 'u32[144,128]{1,0:T(1,128)}', space=vmem, size = 0x12000, scoped, tag = 'internal scratch']
  %s0 = inlined_call_operand.vmem [shape: bf16[64,512], index: 0, kind: input, shape index: {}]
  %s1 = inlined_call_operand.vmem [shape: bf16[512,128], index: 1, kind: input, shape index: {}]
  %s2 = inlined_call_operand.vmem [shape: f32[1,128], index: 2, kind: input, shape index: {}]
  %s3 = inlined_call_operand.vmem [shape: f32[64,128], index: 3, kind: input, shape index: {}]
  %s4 = inlined_call_operand.vmem [shape: f32[64,128], index: 4, kind: output, shape index: {}]
  %s5 = sld [smem:[#allocation0]]
  $region26: #{image_encoder_forward.25} parent=0
    _
  %s7 = ssub.s32 1, %s5
  %s8 = scalar_select 0, %s7, %s5
  // Predicated region
  $region2: #{image_encoder_forward.25} parent=0 // pred_check
    _
  $region3: #{image_encoder_forward.25} parent=0 // pred_check_branch
    %10 = sbr.rel (0) target = $region5
  $region4: #{image_encoder_forward.25} parent=0 // pred_region
    _
  $region5: #{image_encoder_forward.25} parent=0 // pred_fallthru
    _
  // Predicated region
  $region6: #{image_encoder_forward.25} parent=0 // pred_check
    _
  $region7: #{image_encoder_forward.25} parent=0 // pred_check_branch
    %12 = sbr.rel (0) target = $region9
  $region8: #{image_encoder_forward.25} parent=0 // pred_region
    _
  $region9: #{image_encoder_forward.25} parent=0 // pred_fallthru
    _
  // Predicated region
  $region10: #{image_encoder_forward.25} parent=0 // pred_check
    _
  $region11: #{image_encoder_forward.25} parent=0 // pred_check_branch
    %14 = sbr.rel (0) target = $region13
  $region12: #{image_encoder_forward.25} parent=0 // pred_region
    _
  $region13: #{image_encoder_forward.25} parent=0 // pred_fallthru
    _
  // Predicated region
  $region14: #{image_encoder_forward.25} parent=0 // pred_check
    _
  $region15: #{image_encoder_forward.25} parent=0 // pred_check_branch
    %16 = sbr.rel (0) target = $region17
  $region16: #{image_encoder_forward.25} parent=0 // pred_region
    _
  $region17: #{image_encoder_forward.25} parent=0 // pred_fallthru
    _
  %v18 = vld [vmem:[%s0] sm:$0xff]
  %v19 = vld [vmem:[%s0 + $0x8] sm:$0xff]
  %v20 = vld [vmem:[%s0 + $0x10] sm:$0xff]
  %v21 = vld [vmem:[%s0 + $0x18] sm:$0xff]
  %v22 = vld [vmem:[%s0 + $0x20] sm:$0xff]
  %v23 = vld [vmem:[%s0 + $0x28] sm:$0xff]
  %v24 = vld [vmem:[%s0 + $0x30] sm:$0xff]
  %v25 = vld [vmem:[%s0 + $0x38] sm:$0xff]
  %v26 = vld [vmem:[%s0 + $0x40] sm:$0xff]
  %v27 = vld [vmem:[%s0 + $0x48] sm:$0xff]
  %v28 = vld [vmem:[%s0 + $0x50] sm:$0xff]
  %v29 = vld [vmem:[%s0 + $0x58] sm:$0xff]
  %v30 = vld [vmem:[%s0 + $0x60] sm:$0xff]
  %v31 = vld [vmem:[%s0 + $0x68] sm:$0xff]
  %v32 = vld [vmem:[%s0 + $0x70] sm:$0xff]
  %v33 = vld [vmem:[%s0 + $0x78] sm:$0xff]
  %v34 = vld [vmem:[%s1] sm:$0xf]
  %v35 = vld [vmem:[%s1 + $0x4] sm:$0xf]
  %v36 = vld [vmem:[%s1 + $0x8] sm:$0xf]
  %v37 = vld [vmem:[%s1 + $0xc] sm:$0xf]
  %v38 = vld [vmem:[%s1 + $0x10] sm:$0xf]
  %v39 = vld [vmem:[%s1 + $0x14] sm:$0xf]
  %v40 = vld [vmem:[%s1 + $0x18] sm:$0xf]
  %v41 = vld [vmem:[%s1 + $0x1c] sm:$0xf]
  %v42 = vld [vmem:[%s1 + $0x20] sm:$0xf]
  %v43 = vld [vmem:[%s1 + $0x24] sm:$0xf]
  %v44 = vld [vmem:[%s1 + $0x28] sm:$0xf]
  %v45 = vld [vmem:[%s1 + $0x2c] sm:$0xf]
  %v46 = vld [vmem:[%s1 + $0x30] sm:$0xf]
  %v47 = vld [vmem:[%s1 + $0x34] sm:$0xf]
  %v48 = vld [vmem:[%s1 + $0x38] sm:$0xf]
  %v49 = vld [vmem:[%s1 + $0x3c] sm:$0xf]
  %v50 = vld [vmem:[%s1 + $0x40] sm:$0xf]
  %v51 = vld [vmem:[%s1 + $0x44] sm:$0xf]
  %v52 = vld [vmem:[%s1 + $0x48] sm:$0xf]
  %v53 = vld [vmem:[%s1 + $0x4c] sm:$0xf]
  %v54 = vld [vmem:[%s1 + $0x50] sm:$0xf]
  %v55 = vld [vmem:[%s1 + $0x54] sm:$0xf]
  %v56 = vld [vmem:[%s1 + $0x58] sm:$0xf]
  %v57 = vld [vmem:[%s1 + $0x5c] sm:$0xf]
  %v58 = vld [vmem:[%s1 + $0x60] sm:$0xf]
  %v59 = vld [vmem:[%s1 + $0x64] sm:$0xf]
  %v60 = vld [vmem:[%s1 + $0x68] sm:$0xf]
  %v61 = vld [vmem:[%s1 + $0x6c] sm:$0xf]
  %v62 = vld [vmem:[%s1 + $0x70] sm:$0xf]
  %v63 = vld [vmem:[%s1 + $0x74] sm:$0xf]
  %v64 = vld [vmem:[%s1 + $0x78] sm:$0xf]
  %v65 = vld [vmem:[%s1 + $0x7c] sm:$0xf]
  %v66 = vld [vmem:[%s1 + $0x80] sm:$0xf]
  %v67 = vld [vmem:[%s1 + $0x84] sm:$0xf]
  %v68 = vld [vmem:[%s1 + $0x88] sm:$0xf]
  %v69 = vld [vmem:[%s1 + $0x8c] sm:$0xf]
  %v70 = vld [vmem:[%s1 + $0x90] sm:$0xf]
  %v71 = vld [vmem:[%s1 + $0x94] sm:$0xf]
  %v72 = vld [vmem:[%s1 + $0x98] sm:$0xf]
  %v73 = vld [vmem:[%s1 + $0x9c] sm:$0xf]
  %v74 = vld [vmem:[%s1 + $0xa0] sm:$0xf]
  %v75 = vld [vmem:[%s1 + $0xa4] sm:$0xf]
  %v76 = vld [vmem:[%s1 + $0xa8] sm:$0xf]
  %v77 = vld [vmem:[%s1 + $0xac] sm:$0xf]
  %v78 = vld [vmem:[%s1 + $0xb0] sm:$0xf]
  %v79 = vld [vmem:[%s1 + $0xb4] sm:$0xf]
  %v80 = vld [vmem:[%s1 + $0xb8] sm:$0xf]
  %v81 = vld [vmem:[%s1 + $0xbc] sm:$0xf]
  %v82 = vld [vmem:[%s1 + $0xc0] sm:$0xf]
  %v83 = vld [vmem:[%s1 + $0xc4] sm:$0xf]
  %v84 = vld [vmem:[%s1 + $0xc8] sm:$0xf]
  %v85 = vld [vmem:[%s1 + $0xcc] sm:$0xf]
  %v86 = vld [vmem:[%s1 + $0xd0] sm:$0xf]
  %v87 = vld [vmem:[%s1 + $0xd4] sm:$0xf]
  %v88 = vld [vmem:[%s1 + $0xd8] sm:$0xf]
  %v89 = vld [vmem:[%s1 + $0xdc] sm:$0xf]
  %v90 = vld [vmem:[%s1 + $0xe0] sm:$0xf]
  %v91 = vld [vmem:[%s1 + $0xe4] sm:$0xf]
  %v92 = vld [vmem:[%s1 + $0xe8] sm:$0xf]
  %v93 = vld [vmem:[%s1 + $0xec] sm:$0xf]
  %v94 = vld [vmem:[%s1 + $0xf0] sm:$0xf]
  %v95 = vld [vmem:[%s1 + $0xf4] sm:$0xf]
  %v96 = vld [vmem:[%s1 + $0xf8] sm:$0xf]
  %v97 = vld [vmem:[%s1 + $0xfc] sm:$0xf]
  %v98 = vld [vmem:[%s2] sm:$0x1]
  %v100 = vlaneseq
  %v101 = vshrl.u32 %v100, 7
  %v102 = vsub.s32 0, %v101
  %v103 = vrot.slane %v98, %v102
  %v121 = vunpack.c.l.b16 %v18
  %v122 = vunpack.c.h.b16 %v18
  %v123 = vunpack.c.l.b16 %v19
  %v124 = vunpack.c.h.b16 %v19
  %v125 = vunpack.c.l.b16 %v20
  %v126 = vunpack.c.h.b16 %v20
  %v127 = vunpack.c.l.b16 %v21
  %v128 = vunpack.c.h.b16 %v21
  %v129 = vunpack.c.l.b16 %v22
  %v130 = vunpack.c.h.b16 %v22
  %v131 = vunpack.c.l.b16 %v23
  %v132 = vunpack.c.h.b16 %v23
  %v133 = vunpack.c.l.b16 %v24
  %v134 = vunpack.c.h.b16 %v24
  %v135 = vunpack.c.l.b16 %v25
  %v136 = vunpack.c.h.b16 %v25
  %v137 = vunpack.c.l.b16 %v26
  %v138 = vunpack.c.h.b16 %v26
  %v139 = vunpack.c.l.b16 %v27
  %v140 = vunpack.c.h.b16 %v27
  %v141 = vunpack.c.l.b16 %v28
  %v142 = vunpack.c.h.b16 %v28
  %v143 = vunpack.c.l.b16 %v29
  %v144 = vunpack.c.h.b16 %v29
  %v145 = vunpack.c.l.b16 %v30
  %v146 = vunpack.c.h.b16 %v30
  %v147 = vunpack.c.l.b16 %v31
  %v148 = vunpack.c.h.b16 %v31
  %v149 = vunpack.c.l.b16 %v32
  %v150 = vunpack.c.h.b16 %v32
  %v151 = vunpack.c.l.b16 %v33
  %v152 = vunpack.c.h.b16 %v33
  %v153 = vpack.c.b16 %v125, %v121
  %v154 = vpack.c.b16 %v126, %v122
  %v155 = vpack.c.b16 %v127, %v123
  %v156 = vpack.c.b16 %v128, %v124
  %v157 = vpack.c.b16 %v133, %v129
  %v158 = vpack.c.b16 %v134, %v130
  %v159 = vpack.c.b16 %v135, %v131
  %v160 = vpack.c.b16 %v136, %v132
  %v161 = vpack.c.b16 %v141, %v137
  %v162 = vpack.c.b16 %v142, %v138
  %v163 = vpack.c.b16 %v143, %v139
  %v164 = vpack.c.b16 %v144, %v140
  %v165 = vpack.c.b16 %v149, %v145
  %v166 = vpack.c.b16 %v150, %v146
  %v167 = vpack.c.b16 %v151, %v147
  %v168 = vpack.c.b16 %v152, %v148
  %v249 = vunpack.c.l.b16 %v34
  %v250 = vunpack.c.l.b16 %v35
  %v251 = vunpack.c.l.b16 %v36
  %v252 = vunpack.c.l.b16 %v37
  %v253 = vunpack.c.l.b16 %v38
  %v254 = vunpack.c.l.b16 %v39
  %v255 = vunpack.c.l.b16 %v40
  %v256 = vunpack.c.l.b16 %v41
  %v257 = vunpack.c.l.b16 %v42
  %v258 = vunpack.c.l.b16 %v43
  %v259 = vunpack.c.l.b16 %v44
  %v260 = vunpack.c.l.b16 %v45
  %v261 = vunpack.c.l.b16 %v46
  %v262 = vunpack.c.l.b16 %v47
  %v263 = vunpack.c.l.b16 %v48
  %v264 = vunpack.c.l.b16 %v49
  %v265 = vunpack.c.l.b16 %v50
  %v266 = vunpack.c.l.b16 %v51
  %v267 = vunpack.c.l.b16 %v52
  %v268 = vunpack.c.l.b16 %v53
  %v269 = vunpack.c.l.b16 %v54
  %v270 = vunpack.c.l.b16 %v55
  %v271 = vunpack.c.l.b16 %v56
  %v272 = vunpack.c.l.b16 %v57
  %v273 = vunpack.c.l.b16 %v58
  %v274 = vunpack.c.l.b16 %v59
  %v275 = vunpack.c.l.b16 %v60
  %v276 = vunpack.c.l.b16 %v61
  %v277 = vunpack.c.l.b16 %v62
  %v278 = vunpack.c.l.b16 %v63
  %v279 = vunpack.c.l.b16 %v64
  %v280 = vunpack.c.l.b16 %v65
  %v281 = vunpack.c.l.b16 %v66
  %v282 = vunpack.c.l.b16 %v67
  %v283 = vunpack.c.l.b16 %v68
  %v284 = vunpack.c.l.b16 %v69
  %v285 = vunpack.c.l.b16 %v70
  %v286 = vunpack.c.l.b16 %v71
  %v287 = vunpack.c.l.b16 %v72
  %v288 = vunpack.c.l.b16 %v73
  %v289 = vunpack.c.l.b16 %v74
  %v290 = vunpack.c.l.b16 %v75
  %v291 = vunpack.c.l.b16 %v76
  %v292 = vunpack.c.l.b16 %v77
  %v293 = vunpack.c.l.b16 %v78
  %v294 = vunpack.c.l.b16 %v79
  %v295 = vunpack.c.l.b16 %v80
  %v296 = vunpack.c.l.b16 %v81
  %v297 = vunpack.c.l.b16 %v82
  %v298 = vunpack.c.l.b16 %v83
  %v299 = vunpack.c.l.b16 %v84
  %v300 = vunpack.c.l.b16 %v85
  %v301 = vunpack.c.l.b16 %v86
  %v302 = vunpack.c.l.b16 %v87
  %v303 = vunpack.c.l.b16 %v88
  %v304 = vunpack.c.l.b16 %v89
  %v305 = vunpack.c.l.b16 %v90
  %v306 = vunpack.c.l.b16 %v91
  %v307 = vunpack.c.l.b16 %v92
  %v308 = vunpack.c.l.b16 %v93
  %v309 = vunpack.c.l.b16 %v94
  %v310 = vunpack.c.l.b16 %v95
  %v311 = vunpack.c.l.b16 %v96
  %v312 = vunpack.c.l.b16 %v97
  %v313 = vpack.c.b16 %v250, %v249
  %v314 = vpack.c.b16 %v252, %v251
  %v315 = vpack.c.b16 %v254, %v253
  %v316 = vpack.c.b16 %v256, %v255
  %v317 = vpack.c.b16 %v258, %v257
  %v318 = vpack.c.b16 %v260, %v259
  %v319 = vpack.c.b16 %v262, %v261
  %v320 = vpack.c.b16 %v264, %v263
  %v321 = vpack.c.b16 %v266, %v265
  %v322 = vpack.c.b16 %v268, %v267
  %v323 = vpack.c.b16 %v270, %v269
  %v324 = vpack.c.b16 %v272, %v271
  %v325 = vpack.c.b16 %v274, %v273
  %v326 = vpack.c.b16 %v276, %v275
  %v327 = vpack.c.b16 %v278, %v277
  %v328 = vpack.c.b16 %v280, %v279
  %v329 = vpack.c.b16 %v282, %v281
  %v330 = vpack.c.b16 %v284, %v283
  %v331 = vpack.c.b16 %v286, %v285
  %v332 = vpack.c.b16 %v288, %v287
  %v333 = vpack.c.b16 %v290, %v289
  %v334 = vpack.c.b16 %v292, %v291
  %v335 = vpack.c.b16 %v294, %v293
  %v336 = vpack.c.b16 %v296, %v295
  %v337 = vpack.c.b16 %v298, %v297
  %v338 = vpack.c.b16 %v300, %v299
  %v339 = vpack.c.b16 %v302, %v301
  %v340 = vpack.c.b16 %v304, %v303
  %v341 = vpack.c.b16 %v306, %v305
  %v342 = vpack.c.b16 %v308, %v307
  %v343 = vpack.c.b16 %v310, %v309
  %v344 = vpack.c.b16 %v312, %v311
  %377 = vmatprep.subr.bf16.mxu0 0
  %378 = vmatpush1.bf16.msra.mxu0 %v313
  %379 = vmatprep.subr.bf16.mxu0 0
  %380 = vmatpush1.bf16.msra.mxu0 %v314
  %381 = vmatprep.subr.bf16.mxu0 0
  %382 = vmatpush1.bf16.msra.mxu0 %v315
  %383 = vmatprep.subr.bf16.mxu0 0
  %384 = vmatpush1.bf16.msra.mxu0 %v316
  %385 = vmatprep.subr.bf16.mxu0 0
  %386 = vmatpush1.bf16.msra.mxu0 %v317
  %387 = vmatprep.subr.bf16.mxu0 0
  %388 = vmatpush1.bf16.msra.mxu0 %v318
  %389 = vmatprep.subr.bf16.mxu0 0
  %390 = vmatpush1.bf16.msra.mxu0 %v319
  %391 = vmatprep.subr.bf16.mxu0 0
  %392 = vmatpush1.bf16.msra.mxu0 %v320
  %393 = vmatprep.subr.bf16.mxu0 0
  %394 = vmatpush1.bf16.msra.mxu0 %v321
  %395 = vmatprep.subr.bf16.mxu0 0
  %396 = vmatpush1.bf16.msra.mxu0 %v322
  %397 = vmatprep.subr.bf16.mxu0 0
  %398 = vmatpush1.bf16.msra.mxu0 %v323
  %399 = vmatprep.subr.bf16.mxu0 0
  %400 = vmatpush1.bf16.msra.mxu0 %v324
  %401 = vmatprep.subr.bf16.mxu0 0
  %402 = vmatpush1.bf16.msra.mxu0 %v325
  %403 = vmatprep.subr.bf16.mxu0 0
  %404 = vmatpush1.bf16.msra.mxu0 %v326
  %405 = vmatprep.subr.bf16.mxu0 0
  %406 = vmatpush1.bf16.msra.mxu0 %v327
  %407 = vmatprep.subr.bf16.mxu0 0
  %408 = vmatpush1.bf16.msra.mxu0 %v328
  %409 = vmatprep.mubr.bf16.mxu0 %v154
  %410 = vmatmul.mubr.bf16.gmra.mrb[0].mxu0 %v153
  %v411 = vpop.f32.mrb[0].mxu0
  %v412 = vadd.f32 %v103, %v411
  %v413 = vpop.f32.mrb[0].mxu0
  %v414 = vpop.f32.mrb[0].mxu0
  %v415 = vadd.f32 %v103, %v414
  %v416 = vpop.f32.mrb[0].mxu0
  %417 = vmatprep.mubr.bf16.mxu0 %v158
  %418 = vmatmul.mubr.bf16.gmra.mrb[0].mxu0 %v157
  %v419 = vpop.f32.mrb[0].mxu0
  %v420 = vadd.f32 %v103, %v419
  %v421 = vpop.f32.mrb[0].mxu0
  %v422 = vpop.f32.mrb[0].mxu0
  %v423 = vadd.f32 %v103, %v422
  %v424 = vpop.f32.mrb[0].mxu0
  %425 = vmatprep.mubr.bf16.mxu0 %v162
  %426 = vmatmul.mubr.bf16.gmra.mrb[0].mxu0 %v161
  %v427 = vpop.f32.mrb[0].mxu0
  %v428 = vadd.f32 %v103, %v427
  %v429 = vpop.f32.mrb[0].mxu0
  %v430 = vpop.f32.mrb[0].mxu0
  %v431 = vadd.f32 %v103, %v430
  %v432 = vpop.f32.mrb[0].mxu0
  %433 = vmatprep.mubr.bf16.mxu0 %v166
  %434 = vmatmul.mubr.bf16.gmra.mrb[0].mxu0 %v165
  %v435 = vpop.f32.mrb[0].mxu0
  %v436 = vadd.f32 %v103, %v435
  %v437 = vpop.f32.mrb[0].mxu0
  %v438 = vpop.f32.mrb[0].mxu0
  %v439 = vadd.f32 %v103, %v438
  %v440 = vpop.f32.mrb[0].mxu0
  %441 = vdwg.mxu0
  %442 = vmatprep.subr.bf16.mxu0 0
  %443 = vmatpush1.bf16.msra.mxu0 %v329
  %444 = vmatprep.subr.bf16.mxu0 0
  %445 = vmatpush1.bf16.msra.mxu0 %v330
  %446 = vmatprep.subr.bf16.mxu0 0
  %447 = vmatpush1.bf16.msra.mxu0 %v331
  %448 = vmatprep.subr.bf16.mxu0 0
  %449 = vmatpush1.bf16.msra.mxu0 %v332
  %450 = vmatprep.subr.bf16.mxu0 0
  %451 = vmatpush1.bf16.msra.mxu0 %v333
  %452 = vmatprep.subr.bf16.mxu0 0
  %453 = vmatpush1.bf16.msra.mxu0 %v334
  %454 = vmatprep.subr.bf16.mxu0 0
  %455 = vmatpush1.bf16.msra.mxu0 %v335
  %456 = vmatprep.subr.bf16.mxu0 0
  %457 = vmatpush1.bf16.msra.mxu0 %v336
  %458 = vmatprep.subr.bf16.mxu0 0
  %459 = vmatpush1.bf16.msra.mxu0 %v337
  %460 = vmatprep.subr.bf16.mxu0 0
  %461 = vmatpush1.bf16.msra.mxu0 %v338
  %462 = vmatprep.subr.bf16.mxu0 0
  %463 = vmatpush1.bf16.msra.mxu0 %v339
  %464 = vmatprep.subr.bf16.mxu0 0
  %465 = vmatpush1.bf16.msra.mxu0 %v340
  %466 = vmatprep.subr.bf16.mxu0 0
  %467 = vmatpush1.bf16.msra.mxu0 %v341
  %468 = vmatprep.subr.bf16.mxu0 0
  %469 = vmatpush1.bf16.msra.mxu0 %v342
  %470 = vmatprep.subr.bf16.mxu0 0
  %471 = vmatpush1.bf16.msra.mxu0 %v343
  %472 = vmatprep.subr.bf16.mxu0 0
  %473 = vmatpush1.bf16.msra.mxu0 %v344
  %474 = vmatprep.mubr.bf16.mxu0 %v156
  %475 = vmatmul.mubr.bf16.gmra.mrb[0].mxu0 %v155
  %v476 = vpop.f32.mrb[0].mxu0
  %v477 = vadd.f32 %v412, %v476
  %v478 = vpop.f32.mrb[0].mxu0
  %v479 = vpop.f32.mrb[0].mxu0
  %v480 = vadd.f32 %v415, %v479
  %v481 = vpop.f32.mrb[0].mxu0
  %482 = vmatprep.mubr.bf16.mxu0 %v160
  %483 = vmatmul.mubr.bf16.gmra.mrb[0].mxu0 %v159
  %v484 = vpop.f32.mrb[0].mxu0
  %v485 = vadd.f32 %v420, %v484
  %v486 = vpop.f32.mrb[0].mxu0
  %v487 = vpop.f32.mrb[0].mxu0
  %v488 = vadd.f32 %v423, %v487
  %v489 = vpop.f32.mrb[0].mxu0
  %490 = vmatprep.mubr.bf16.mxu0 %v164
  %491 = vmatmul.mubr.bf16.gmra.mrb[0].mxu0 %v163
  %v492 = vpop.f32.mrb[0].mxu0
  %v493 = vadd.f32 %v428, %v492
  %v494 = vpop.f32.mrb[0].mxu0
  %v495 = vpop.f32.mrb[0].mxu0
  %v496 = vadd.f32 %v431, %v495
  %v497 = vpop.f32.mrb[0].mxu0
  %498 = vmatprep.mubr.bf16.mxu0 %v168
  %499 = vmatmul.mubr.bf16.gmra.mrb[0].mxu0 %v167
  %v500 = vpop.f32.mrb[0].mxu0
  %v501 = vadd.f32 %v436, %v500
  %v502 = vpop.f32.mrb[0].mxu0
  %v503 = vpop.f32.mrb[0].mxu0
  %v504 = vadd.f32 %v439, %v503
  %v505 = vpop.f32.mrb[0].mxu0
  %506 = vdwg.mxu0
  %v507 = vld [vmem:[%s3] sm:$0xff]
  %v508 = vld [vmem:[%s3 + $0x8] sm:$0xff]
  %v509 = vld [vmem:[%s3 + $0x10] sm:$0xff]
  %v510 = vld [vmem:[%s3 + $0x18] sm:$0xff]
  %v511 = vld [vmem:[%s3 + $0x20] sm:$0xff]
  %v512 = vld [vmem:[%s3 + $0x28] sm:$0xff]
  %v513 = vld [vmem:[%s3 + $0x30] sm:$0xff]
  %v514 = vld [vmem:[%s3 + $0x38] sm:$0xff]
  %v515 = vadd.f32 %v477, %v507
  %v516 = vadd.f32 %v480, %v508
  %v517 = vadd.f32 %v485, %v509
  %v518 = vadd.f32 %v488, %v510
  %v519 = vadd.f32 %v493, %v511
  %v520 = vadd.f32 %v496, %v512
  %v521 = vadd.f32 %v501, %v513
  %v522 = vadd.f32 %v504, %v514
  %523 = vst [vmem:[%s4] sm:$0xff] %v515
  %524 = vst [vmem:[%s4 + $0x8] sm:$0xff] %v516
  %525 = vst [vmem:[%s4 + $0x10] sm:$0xff] %v517
  %526 = vst [vmem:[%s4 + $0x18] sm:$0xff] %v518
  %527 = vst [vmem:[%s4 + $0x20] sm:$0xff] %v519
  %528 = vst [vmem:[%s4 + $0x28] sm:$0xff] %v520
  %529 = vst [vmem:[%s4 + $0x30] sm:$0xff] %v521
  %530 = vst [vmem:[%s4 + $0x38] sm:$0xff] %v522
  // Predicated region
  $region18: #{image_encoder_forward.25} parent=0 // pred_check
    _
  $region19: #{image_encoder_forward.25} parent=0 // pred_check_branch
    %532 = sbr.rel (0) target = $region21
  $region20: #{image_encoder_forward.25} parent=0 // pred_region
    _
  $region21: #{image_encoder_forward.25} parent=0 // pred_fallthru
    _
  // Predicated region
  $region22: #{image_encoder_forward.25} parent=0 // pred_check
    _
  $region23: #{image_encoder_forward.25} parent=0 // pred_check_branch
    %534 = sbr.rel (0) target = $region25
  $region24: #{image_encoder_forward.25} parent=0 // pred_region
    _
  $region25: #{image_encoder_forward.25} parent=0 // pred_fallthru
    _

// kernel: image_encoder_forward.21
$region0: #{image_encoder_forward.21}
  #allocation0 [shape = 'u32[]', space=smem, size = 0x4, offset = 0x4, fixed_abs, tag = 'smem constant byte address 0x4 - core index']
  #allocation1 [shape = 'u32[144,128]{1,0:T(1,128)}', space=vmem, size = 0x12000, scoped, tag = 'internal scratch']
  %s0 = inlined_call_operand.vmem [shape: bf16[2,32,384], index: 0, kind: input, shape index: {}, may-alias: {0,1,2}]
  %s1 = inlined_call_operand.vmem [shape: bf16[2,32,384], index: 1, kind: input, shape index: {}, may-alias: {0,1,2}]
  %s2 = inlined_call_operand.vmem [shape: bf16[2,32,384], index: 2, kind: input, shape index: {}, may-alias: {0,1,2}]
  %s3 = inlined_call_operand.vmem [shape: bf16[2,32,128], index: 3, kind: output, shape index: {}]
  %s4 = sld [smem:[#allocation0]]
  $region168: #{image_encoder_forward.21} parent=0
    _
  %s6 = ssub.s32 1, %s4
  %s7 = scalar_select 0, %s6, %s4
  $region1: #{image_encoder_forward.21} parent=0
    #allocation2 [shape = 'u8[16384]{0}', space=vmem, size = 0x4000, scoped, tag = 'input window, operand 0']
    #allocation3 [shape = 'u8[16384]{0}', space=vmem, size = 0x4000, scoped, tag = 'input window, operand 1']
    #allocation4 [shape = 'u8[16384]{0}', space=vmem, size = 0x4000, scoped, tag = 'input window, operand 2']
    loop: start=0, step=1, limit=4
    $region2: #{image_encoder_forward.21} parent=1 // loop_pre_header
      _
    $region3: #{image_encoder_forward.21} parent=1 // loop_header
      %s9 = sphi 0, %s13
      %p10 = scmp.ge.s32.totalorder %s9, 4
      %s16 = sphi 0, %s28
      %s17 = sphi 0, %s24
      %s18 = sphi 0, %s16
      %s19 = sphi 0, %s17
      %s20 = sphi 0, %s18
      %s21 = sphi 0, %s19
      %s33 = sphi 0, %s35
      %s36 = sphi 0, %s33
      %s37 = sphi 0, %s36
      %s53 = sphi 0, %s37
      %s63 = sphi 0, %s65
      %s66 = sphi 0, %s63
      %s67 = sphi 0, %s66
      %s83 = sphi 0, %s67
      %s93 = sphi 0, %s95
      %s96 = sphi 0, %s93
      %s97 = sphi 0, %s96
      %s113 = sphi 0, %s97
      %s121 = sphi 0, %s123
      %s124 = sphi 0, %s121
      %s125 = sphi 0, %s124
      %s141 = sphi 0, %s125
    $region4: #{image_encoder_forward.21} parent=1 // loop_header_branch
      %12 = sbr.rel (%p10) target = $region8
    $region5: #{image_encoder_forward.21} parent=1 // loop_body
      %s14 = ssub.s32 %s9, 1
      %s15 = ssub.s32 %s9, 2
      %s22 = sadd.s32 1, %s17
      %p23 = scmp.ge.s32.totalorder %s22, 1
      %s24 = scalar_select %p23, 0, %s22
      %s25 = sadd.s32 1, %s16
      %s26 = scalar_select %p23, %s25, %s16
      %p27 = scmp.ge.s32.totalorder %s26, 2
      %s28 = scalar_select %p27, 0, %s26
      %s29 = ssub.s32 %s16, %s28
      %s30 = ssub.s32 %s17, %s24
      %s31 = sor.u32 %s29, %s30
      %p32 = scmp.eq.s32.totalorder %s31, 0
      %s34 = sadd.s32 %s33, 1
      %s35 = scalar_select %p32, %s33, %s34
      %p38 = pneg %p32
      %p39 = scmp.eq.s32.totalorder %s9, 1
      %p40 = por %p38, %p39
      %p41 = scmp.ne.s32.totalorder %s33, %s36
      %p42 = scmp.eq.s32.totalorder %s9, 0
      %p43 = por %p41, %p42
      %p44 = scmp.ne.s32.totalorder %s33, %s36
      %p45 = scmp.eq.s32.totalorder %s14, 1
      %p46 = por %p44, %p45
      %p47 = scmp.ne.s32.totalorder %s36, %s37
      %p48 = scmp.eq.s32.totalorder %s14, 0
      %p49 = por %p47, %p48
      %p50 = scmp.ne.s32.totalorder %s36, %s37
      %p51 = scmp.eq.s32.totalorder %s15, 1
      %p52 = por %p50, %p51
      %p54 = scmp.ne.s32.totalorder %s37, %s53
      %p55 = scmp.eq.s32.totalorder %s15, 0
      %p56 = por %p54, %p55
      %s57 = sadd.s32 %s17, 1
      %s58 = sadd.s32 %s24, 1
      %s59 = ssub.s32 %s16, %s28
      %s60 = ssub.s32 %s57, %s58
      %s61 = sor.u32 %s59, %s60
      %p62 = scmp.eq.s32.totalorder %s61, 0
      %s64 = sadd.s32 %s63, 1
      %s65 = scalar_select %p62, %s63, %s64
      %p68 = pneg %p62
      %p69 = scmp.eq.s32.totalorder %s9, 1
      %p70 = por %p68, %p69
      %p71 = scmp.ne.s32.totalorder %s63, %s66
      %p72 = scmp.eq.s32.totalorder %s9, 0
      %p73 = por %p71, %p72
      %p74 = scmp.ne.s32.totalorder %s63, %s66
      %p75 = scmp.eq.s32.totalorder %s14, 1
      %p76 = por %p74, %p75
      %p77 = scmp.ne.s32.totalorder %s66, %s67
      %p78 = scmp.eq.s32.totalorder %s14, 0
      %p79 = por %p77, %p78
      %p80 = scmp.ne.s32.totalorder %s66, %s67
      %p81 = scmp.eq.s32.totalorder %s15, 1
      %p82 = por %p80, %p81
      %p84 = scmp.ne.s32.totalorder %s67, %s83
      %p85 = scmp.eq.s32.totalorder %s15, 0
      %p86 = por %p84, %p85
      %s87 = sadd.s32 %s17, 2
      %s88 = sadd.s32 %s24, 2
      %s89 = ssub.s32 %s16, %s28
      %s90 = ssub.s32 %s87, %s88
      %s91 = sor.u32 %s89, %s90
      %p92 = scmp.eq.s32.totalorder %s91, 0
      %s94 = sadd.s32 %s93, 1
      %s95 = scalar_select %p92, %s93, %s94
      %p98 = pneg %p92
      %p99 = scmp.eq.s32.totalorder %s9, 1
      %p100 = por %p98, %p99
      %p101 = scmp.ne.s32.totalorder %s93, %s96
      %p102 = scmp.eq.s32.totalorder %s9, 0
      %p103 = por %p101, %p102
      %p104 = scmp.ne.s32.totalorder %s93, %s96
      %p105 = scmp.eq.s32.totalorder %s14, 1
      %p106 = por %p104, %p105
      %p107 = scmp.ne.s32.totalorder %s96, %s97
      %p108 = scmp.eq.s32.totalorder %s14, 0
      %p109 = por %p107, %p108
      %p110 = scmp.ne.s32.totalorder %s96, %s97
      %p111 = scmp.eq.s32.totalorder %s15, 1
      %p112 = por %p110, %p111
      %p114 = scmp.ne.s32.totalorder %s97, %s113
      %p115 = scmp.eq.s32.totalorder %s15, 0
      %p116 = por %p114, %p115
      %s117 = ssub.s32 %s16, %s28
      %s118 = ssub.s32 %s17, %s24
      %s119 = sor.u32 %s117, %s118
      %p120 = scmp.eq.s32.totalorder %s119, 0
      %s122 = sadd.s32 %s121, 1
      %s123 = scalar_select %p120, %s121, %s122
      %p126 = pneg %p120
      %p127 = scmp.eq.s32.totalorder %s9, 1
      %p128 = por %p126, %p127
      %p129 = scmp.ne.s32.totalorder %s121, %s124
      %p130 = scmp.eq.s32.totalorder %s9, 0
      %p131 = por %p129, %p130
      %p132 = scmp.ne.s32.totalorder %s121, %s124
      %p133 = scmp.eq.s32.totalorder %s14, 1
      %p134 = por %p132, %p133
      %p135 = scmp.ne.s32.totalorder %s124, %s125
      %p136 = scmp.eq.s32.totalorder %s14, 0
      %p137 = por %p135, %p136
      %p138 = scmp.ne.s32.totalorder %s124, %s125
      %p139 = scmp.eq.s32.totalorder %s15, 1
      %p140 = por %p138, %p139
      %p142 = scmp.ne.s32.totalorder %s125, %s141
      %p143 = scmp.eq.s32.totalorder %s15, 0
      %p144 = por %p142, %p143
      %p145 = scmp.le.s32.totalorder 1, %s9
      %p146 = scmp.lt.s32.totalorder %s9, 3
      %p147 = pnand %p145, %p146
      %p148 = pneg %p147
      // Predicated region
      $region9: #{image_encoder_forward.21} parent=5 // pred_check
        _
      $region10: #{image_encoder_forward.21} parent=5 // pred_check_branch
        %150 = sbr.rel (%p147) target = $region12
      $region11: #{image_encoder_forward.21} parent=5 // pred_region
        %s151 = ssub.s32 %s9, 1
      $region12: #{image_encoder_forward.21} parent=5 // pred_fallthru
        _
      %p152 = scmp.lt.s32.totalorder %s9, 2
      // Predicated region
      $region13: #{image_encoder_forward.21} parent=5 // pred_check
        %p153 = pneg %p152
      $region14: #{image_encoder_forward.21} parent=5 // pred_check_branch
        %155 = sbr.rel (%p153) target = $region16
      $region15: #{image_encoder_forward.21} parent=5 // pred_region
        // Predicated region
        $region17: #{image_encoder_forward.21} parent=15 // pred_check
          %p156 = pneg %p43
        $region18: #{image_encoder_forward.21} parent=15 // pred_check_branch
          %158 = sbr.rel (%p156) target = $region20
        $region19: #{image_encoder_forward.21} parent=15 // pred_region
          %s159 = sand.u32 %s33, 1
          %s160 = sand.u32 %s33, 1
          %s161 = smul.addr %s160, 16
          %s162 = scalar_lea.vmem [#allocation2], %s161
          %s163 = smul.addr %s16, 12
          %s164 = sadd.s32 %s17, %s163
          %s165 = smul.addr %s164, 4
          %s166 = scalar_lea.vmem %s0, %s165
          // Predicated region
          $region21: #{image_encoder_forward.21} parent=19 // pred_check
            _
          $region22: #{image_encoder_forward.21} parent=19 // pred_check_branch
            %168 = sbr.rel (0) target = $region24
          $region23: #{image_encoder_forward.21} parent=19 // pred_region
            // Predicated region
            $region25: #{image_encoder_forward.21} parent=23 // pred_check
              _
            $region26: #{image_encoder_forward.21} parent=23 // pred_check_branch
              %170 = sbr.rel target = $region28
            $region27: #{image_encoder_forward.21} parent=23 // pred_region
              // Predicated region
              $region40: #{image_encoder_forward.21} parent=27 // pred_check
                _
              $region41: #{image_encoder_forward.21} parent=27 // pred_check_branch
                %191 = sbr.rel (0) target = $region43
              $region42: #{image_encoder_forward.21} parent=27 // pred_region
                loop: start=0, step=1, limit=1
                $region44: #{image_encoder_forward.21} parent=42 // loop_pre_header
                  _
                $region45: #{image_encoder_forward.21} parent=42 // loop_header
                  %s193 = sphi 0, %s197
                  %p194 = scmp.ge.s32.totalorder %s193, 1
                  %s198 = sphi %s166, %s166
                  %s199 = sphi %s162, %s162
                $region46: #{image_encoder_forward.21} parent=42 // loop_header_branch
                  %196 = sbr.rel (%p194) target = $region50
                $region47: #{image_encoder_forward.21} parent=42 // loop_body
                  _
                $region48: #{image_encoder_forward.21} parent=42 // loop_footer
                  %s197 = sadd.s32 1, %s193
                $region49: #{image_encoder_forward.21} parent=42 // loop_footer_branch
                  %192 = sbr.rel target = $region45
                $region50: #{image_encoder_forward.21} parent=42 // loop_exit
                  _
                loop: start=0, step=1, limit=1
                $region51: #{image_encoder_forward.21} parent=42 // loop_pre_header
                  _
                $region52: #{image_encoder_forward.21} parent=42 // loop_header
                  %s202 = sphi 0, %s206
                  %p203 = scmp.ge.s32.totalorder %s202, 1
                  %s207 = sphi %s166, %s166
                  %s208 = sphi %s162, %s162
                $region53: #{image_encoder_forward.21} parent=42 // loop_header_branch
                  %205 = sbr.rel (%p203) target = $region57
                $region54: #{image_encoder_forward.21} parent=42 // loop_body
                  %v209 = vld [vmem:[%s207] sm:$0xf]
                  %210 = vst [vmem:[%s208] sm:$0xf] %v209
                  %v211 = vld [vmem:[%s207 + $0xc] sm:$0xf]
                  %212 = vst [vmem:[%s208 + $0x4] sm:$0xf] %v211
                  %v213 = vld [vmem:[%s207 + $0x18] sm:$0xf]
                  %214 = vst [vmem:[%s208 + $0x8] sm:$0xf] %v213
                  %v215 = vld [vmem:[%s207 + $0x24] sm:$0xf]
                  %216 = vst [vmem:[%s208 + $0xc] sm:$0xf] %v215
                $region55: #{image_encoder_forward.21} parent=42 // loop_footer
                  %s206 = sadd.s32 1, %s202
                $region56: #{image_encoder_forward.21} parent=42 // loop_footer_branch
                  %201 = sbr.rel target = $region52
                $region57: #{image_encoder_forward.21} parent=42 // loop_exit
                  _
              $region43: #{image_encoder_forward.21} parent=27 // pred_fallthru
                _
            $region28: #{image_encoder_forward.21} parent=23 // pred_fallthru
              _
            // Predicated region
            $region29: #{image_encoder_forward.21} parent=23 // pred_check
              _
            $region30: #{image_encoder_forward.21} parent=23 // pred_check_branch
              %172 = sbr.rel (0) target = $region32
            $region31: #{image_encoder_forward.21} parent=23 // pred_region
              loop: start=0, step=1, limit=1
              $region33: #{image_encoder_forward.21} parent=31 // loop_pre_header
                _
              $region34: #{image_encoder_forward.21} parent=31 // loop_header
                %s175 = sphi 0, %s179
                %p176 = scmp.ge.s32.totalorder %s175, 1
                %s180 = sphi %s166, %s166
                %s181 = sphi %s162, %s162
              $region35: #{image_encoder_forward.21} parent=31 // loop_header_branch
                %178 = sbr.rel (%p176) target = $region39
              $region36: #{image_encoder_forward.21} parent=31 // loop_body
                %v182 = vld [vmem:[%s180] sm:$0xf]
                %183 = vst [vmem:[%s181] sm:$0xf] %v182
                %v184 = vld [vmem:[%s180 + $0xc] sm:$0xf]
                %185 = vst [vmem:[%s181 + $0x4] sm:$0xf] %v184
                %v186 = vld [vmem:[%s180 + $0x18] sm:$0xf]
                %187 = vst [vmem:[%s181 + $0x8] sm:$0xf] %v186
                %v188 = vld [vmem:[%s180 + $0x24] sm:$0xf]
                %189 = vst [vmem:[%s181 + $0xc] sm:$0xf] %v188
              $region37: #{image_encoder_forward.21} parent=31 // loop_footer
                %s179 = sadd.s32 1, %s175
              $region38: #{image_encoder_forward.21} parent=31 // loop_footer_branch
                %174 = sbr.rel target = $region34
              $region39: #{image_encoder_forward.21} parent=31 // loop_exit
                _
            $region32: #{image_encoder_forward.21} parent=23 // pred_fallthru
              _
          $region24: #{image_encoder_forward.21} parent=19 // pred_fallthru
            _
          %217 = vnop
        $region20: #{image_encoder_forward.21} parent=15 // pred_fallthru
          _
        // Predicated region
        $region58: #{image_encoder_forward.21} parent=15 // pred_check
          %p218 = pneg %p73
        $region59: #{image_encoder_forward.21} parent=15 // pred_check_branch
          %220 = sbr.rel (%p218) target = $region61
        $region60: #{image_encoder_forward.21} parent=15 // pred_region
          %s221 = sand.u32 %s63, 1
          %s222 = sand.u32 %s63, 1
          %s223 = smul.addr %s222, 16
          %s224 = scalar_lea.vmem [#allocation3], %s223
          %s225 = sadd.s32 %s17, 1
          %s226 = smul.addr %s16, 12
          %s227 = sadd.s32 %s225, %s226
          %s228 = smul.addr %s227, 4
          %s229 = scalar_lea.vmem %s1, %s228
          // Predicated region
          $region62: #{image_encoder_forward.21} parent=60 // pred_check
            _
          $region63: #{image_encoder_forward.21} parent=60 // pred_check_branch
            %231 = sbr.rel (0) target = $region65
          $region64: #{image_encoder_forward.21} parent=60 // pred_region
            // Predicated region
            $region66: #{image_encoder_forward.21} parent=64 // pred_check
              _
            $region67: #{image_encoder_forward.21} parent=64 // pred_check_branch
              %233 = sbr.rel target = $region69
            $region68: #{image_encoder_forward.21} parent=64 // pred_region
              // Predicated region
              $region81: #{image_encoder_forward.21} parent=68 // pred_check
                _
              $region82: #{image_encoder_forward.21} parent=68 // pred_check_branch
                %254 = sbr.rel (0) target = $region84
              $region83: #{image_encoder_forward.21} parent=68 // pred_region
                loop: start=0, step=1, limit=1
                $region85: #{image_encoder_forward.21} parent=83 // loop_pre_header
                  _
                $region86: #{image_encoder_forward.21} parent=83 // loop_header
                  %s256 = sphi 0, %s260
                  %p257 = scmp.ge.s32.totalorder %s256, 1
                  %s261 = sphi %s229, %s229
                  %s262 = sphi %s224, %s224
                $region87: #{image_encoder_forward.21} parent=83 // loop_header_branch
                  %259 = sbr.rel (%p257) target = $region91
                $region88: #{image_encoder_forward.21} parent=83 // loop_body
                  _
                $region89: #{image_encoder_forward.21} parent=83 // loop_footer
                  %s260 = sadd.s32 1, %s256
                $region90: #{image_encoder_forward.21} parent=83 // loop_footer_branch
                  %255 = sbr.rel target = $region86
                $region91: #{image_encoder_forward.21} parent=83 // loop_exit
                  _
                loop: start=0, step=1, limit=1
                $region92: #{image_encoder_forward.21} parent=83 // loop_pre_header
                  _
                $region93: #{image_encoder_forward.21} parent=83 // loop_header
                  %s265 = sphi 0, %s269
                  %p266 = scmp.ge.s32.totalorder %s265, 1
                  %s270 = sphi %s229, %s229
                  %s271 = sphi %s224, %s224
                $region94: #{image_encoder_forward.21} parent=83 // loop_header_branch
                  %268 = sbr.rel (%p266) target = $region98
                $region95: #{image_encoder_forward.21} parent=83 // loop_body
                  %v272 = vld [vmem:[%s270] sm:$0xf]
                  %273 = vst [vmem:[%s271] sm:$0xf] %v272
                  %v274 = vld [vmem:[%s270 + $0xc] sm:$0xf]
                  %275 = vst [vmem:[%s271 + $0x4] sm:$0xf] %v274
                  %v276 = vld [vmem:[%s270 + $0x18] sm:$0xf]
                  %277 = vst [vmem:[%s271 + $0x8] sm:$0xf] %v276
                  %v278 = vld [vmem:[%s270 + $0x24] sm:$0xf]
                  %279 = vst [vmem:[%s271 + $0xc] sm:$0xf] %v278
                $region96: #{image_encoder_forward.21} parent=83 // loop_footer
                  %s269 = sadd.s32 1, %s265
                $region97: #{image_encoder_forward.21} parent=83 // loop_footer_branch
                  %264 = sbr.rel target = $region93
                $region98: #{image_encoder_forward.21} parent=83 // loop_exit
                  _
              $region84: #{image_encoder_forward.21} parent=68 // pred_fallthru
                _
            $region69: #{image_encoder_forward.21} parent=64 // pred_fallthru
              _
            // Predicated region
            $region70: #{image_encoder_forward.21} parent=64 // pred_check
              _
            $region71: #{image_encoder_forward.21} parent=64 // pred_check_branch
              %235 = sbr.rel (0) target = $region73
            $region72: #{image_encoder_forward.21} parent=64 // pred_region
              loop: start=0, step=1, limit=1
              $region74: #{image_encoder_forward.21} parent=72 // loop_pre_header
                _
              $region75: #{image_encoder_forward.21} parent=72 // loop_header
                %s238 = sphi 0, %s242
                %p239 = scmp.ge.s32.totalorder %s238, 1
                %s243 = sphi %s229, %s229
                %s244 = sphi %s224, %s224
              $region76: #{image_encoder_forward.21} parent=72 // loop_header_branch
                %241 = sbr.rel (%p239) target = $region80
              $region77: #{image_encoder_forward.21} parent=72 // loop_body
                %v245 = vld [vmem:[%s243] sm:$0xf]
                %246 = vst [vmem:[%s244] sm:$0xf] %v245
                %v247 = vld [vmem:[%s243 + $0xc] sm:$0xf]
                %248 = vst [vmem:[%s244 + $0x4] sm:$0xf] %v247
                %v249 = vld [vmem:[%s243 + $0x18] sm:$0xf]
                %250 = vst [vmem:[%s244 + $0x8] sm:$0xf] %v249
                %v251 = vld [vmem:[%s243 + $0x24] sm:$0xf]
                %252 = vst [vmem:[%s244 + $0xc] sm:$0xf] %v251
              $region78: #{image_encoder_forward.21} parent=72 // loop_footer
                %s242 = sadd.s32 1, %s238
              $region79: #{image_encoder_forward.21} parent=72 // loop_footer_branch
                %237 = sbr.rel target = $region75
              $region80: #{image_encoder_forward.21} parent=72 // loop_exit
                _
            $region73: #{image_encoder_forward.21} parent=64 // pred_fallthru
              _
          $region65: #{image_encoder_forward.21} parent=60 // pred_fallthru
            _
          %280 = vnop
        $region61: #{image_encoder_forward.21} parent=15 // pred_fallthru
          _
        // Predicated region
        $region99: #{image_encoder_forward.21} parent=15 // pred_check
          %p281 = pneg %p103
        $region100: #{image_encoder_forward.21} parent=15 // pred_check_branch
          %283 = sbr.rel (%p281) target = $region102
        $region101: #{image_encoder_forward.21} parent=15 // pred_region
          %s284 = sand.u32 %s93, 1
          %s285 = sand.u32 %s93, 1
          %s286 = smul.addr %s285, 16
          %s287 = scalar_lea.vmem [#allocation4], %s286
          %s288 = sadd.s32 %s17, 2
          %s289 = smul.addr %s16, 12
          %s290 = sadd.s32 %s288, %s289
          %s291 = smul.addr %s290, 4
          %s292 = scalar_lea.vmem %s2, %s291
          // Predicated region
          $region103: #{image_encoder_forward.21} parent=101 // pred_check
            _
          $region104: #{image_encoder_forward.21} parent=101 // pred_check_branch
            %294 = sbr.rel (0) target = $region106
          $region105: #{image_encoder_forward.21} parent=101 // pred_region
            // Predicated region
            $region107: #{image_encoder_forward.21} parent=105 // pred_check
              _
            $region108: #{image_encoder_forward.21} parent=105 // pred_check_branch
              %296 = sbr.rel target = $region110
            $region109: #{image_encoder_forward.21} parent=105 // pred_region
              // Predicated region
              $region122: #{image_encoder_forward.21} parent=109 // pred_check
                _
              $region123: #{image_encoder_forward.21} parent=109 // pred_check_branch
                %317 = sbr.rel (0) target = $region125
              $region124: #{image_encoder_forward.21} parent=109 // pred_region
                loop: start=0, step=1, limit=1
                $region126: #{image_encoder_forward.21} parent=124 // loop_pre_header
                  _
                $region127: #{image_encoder_forward.21} parent=124 // loop_header
                  %s319 = sphi 0, %s323
                  %p320 = scmp.ge.s32.totalorder %s319, 1
                  %s324 = sphi %s292, %s292
                  %s325 = sphi %s287, %s287
                $region128: #{image_encoder_forward.21} parent=124 // loop_header_branch
                  %322 = sbr.rel (%p320) target = $region132
                $region129: #{image_encoder_forward.21} parent=124 // loop_body
                  _
                $region130: #{image_encoder_forward.21} parent=124 // loop_footer
                  %s323 = sadd.s32 1, %s319
                $region131: #{image_encoder_forward.21} parent=124 // loop_footer_branch
                  %318 = sbr.rel target = $region127
                $region132: #{image_encoder_forward.21} parent=124 // loop_exit
                  _
                loop: start=0, step=1, limit=1
                $region133: #{image_encoder_forward.21} parent=124 // loop_pre_header
                  _
                $region134: #{image_encoder_forward.21} parent=124 // loop_header
                  %s328 = sphi 0, %s332
                  %p329 = scmp.ge.s32.totalorder %s328, 1
                  %s333 = sphi %s292, %s292
                  %s334 = sphi %s287, %s287
                $region135: #{image_encoder_forward.21} parent=124 // loop_header_branch
                  %331 = sbr.rel (%p329) target = $region139
                $region136: #{image_encoder_forward.21} parent=124 // loop_body
                  %v335 = vld [vmem:[%s333] sm:$0xf]
                  %336 = vst [vmem:[%s334] sm:$0xf] %v335
                  %v337 = vld [vmem:[%s333 + $0xc] sm:$0xf]
                  %338 = vst [vmem:[%s334 + $0x4] sm:$0xf] %v337
                  %v339 = vld [vmem:[%s333 + $0x18] sm:$0xf]
                  %340 = vst [vmem:[%s334 + $0x8] sm:$0xf] %v339
                  %v341 = vld [vmem:[%s333 + $0x24] sm:$0xf]
                  %342 = vst [vmem:[%s334 + $0xc] sm:$0xf] %v341
                $region137: #{image_encoder_forward.21} parent=124 // loop_footer
                  %s332 = sadd.s32 1, %s328
                $region138: #{image_encoder_forward.21} parent=124 // loop_footer_branch
                  %327 = sbr.rel target = $region134
                $region139: #{image_encoder_forward.21} parent=124 // loop_exit
                  _
              $region125: #{image_encoder_forward.21} parent=109 // pred_fallthru
                _
            $region110: #{image_encoder_forward.21} parent=105 // pred_fallthru
              _
            // Predicated region
            $region111: #{image_encoder_forward.21} parent=105 // pred_check
              _
            $region112: #{image_encoder_forward.21} parent=105 // pred_check_branch
              %298 = sbr.rel (0) target = $region114
            $region113: #{image_encoder_forward.21} parent=105 // pred_region
              loop: start=0, step=1, limit=1
              $region115: #{image_encoder_forward.21} parent=113 // loop_pre_header
                _
              $region116: #{image_encoder_forward.21} parent=113 // loop_header
                %s301 = sphi 0, %s305
                %p302 = scmp.ge.s32.totalorder %s301, 1
                %s306 = sphi %s292, %s292
                %s307 = sphi %s287, %s287
              $region117: #{image_encoder_forward.21} parent=113 // loop_header_branch
                %304 = sbr.rel (%p302) target = $region121
              $region118: #{image_encoder_forward.21} parent=113 // loop_body
                %v308 = vld [vmem:[%s306] sm:$0xf]
                %309 = vst [vmem:[%s307] sm:$0xf] %v308
                %v310 = vld [vmem:[%s306 + $0xc] sm:$0xf]
                %311 = vst [vmem:[%s307 + $0x4] sm:$0xf] %v310
                %v312 = vld [vmem:[%s306 + $0x18] sm:$0xf]
                %313 = vst [vmem:[%s307 + $0x8] sm:$0xf] %v312
                %v314 = vld [vmem:[%s306 + $0x24] sm:$0xf]
                %315 = vst [vmem:[%s307 + $0xc] sm:$0xf] %v314
              $region119: #{image_encoder_forward.21} parent=113 // loop_footer
                %s305 = sadd.s32 1, %s301
              $region120: #{image_encoder_forward.21} parent=113 // loop_footer_branch
                %300 = sbr.rel target = $region116
              $region121: #{image_encoder_forward.21} parent=113 // loop_exit
                _
            $region114: #{image_encoder_forward.21} parent=105 // pred_fallthru
              _
          $region106: #{image_encoder_forward.21} parent=101 // pred_fallthru
            _
          %343 = vnop
        $region102: #{image_encoder_forward.21} parent=15 // pred_fallthru
          _
      $region16: #{image_encoder_forward.21} parent=5 // pred_fallthru
        _
      %p344 = scmp.le.s32.totalorder 1, %s9
      %p345 = scmp.lt.s32.totalorder %s9, 3
      %p346 = pnand %p344, %p345
      %p347 = pneg %p346
      // Predicated region
      $region140: #{image_encoder_forward.21} parent=5 // pred_check
        _
      $region141: #{image_encoder_forward.21} parent=5 // pred_check_branch
        %349 = sbr.rel (%p346) target = $region143
      $region142: #{image_encoder_forward.21} parent=5 // pred_region
        %s350 = ssub.s32 %s9, 1
        %s351 = sand.u32 %s36, 1
        %s352 = sand.u32 %s36, 1
        %s353 = smul.addr %s352, 16
        %s354 = scalar_lea.vmem [#allocation2], %s353
        // Predicated region
        $region144: #{image_encoder_forward.21} parent=142 // pred_check
          %p355 = pneg %p49
        $region145: #{image_encoder_forward.21} parent=142 // pred_check_branch
          %357 = sbr.rel (%p355) target = $region147
        $region146: #{image_encoder_forward.21} parent=142 // pred_region
          _
        $region147: #{image_encoder_forward.21} parent=142 // pred_fallthru
          _
        %s358 = sand.u32 %s66, 1
        %s359 = sand.u32 %s66, 1
        %s360 = smul.addr %s359, 16
        %s361 = scalar_lea.vmem [#allocation3], %s360
        // Predicated region
        $region148: #{image_encoder_forward.21} parent=142 // pred_check
          %p362 = pneg %p79
        $region149: #{image_encoder_forward.21} parent=142 // pred_check_branch
          %364 = sbr.rel (%p362) target = $region151
        $region150: #{image_encoder_forward.21} parent=142 // pred_region
          _
        $region151: #{image_encoder_forward.21} parent=142 // pred_fallthru
          _
        %s365 = sand.u32 %s96, 1
        %s366 = sand.u32 %s96, 1
        %s367 = smul.addr %s366, 16
        %s368 = scalar_lea.vmem [#allocation4], %s367
        // Predicated region
        $region152: #{image_encoder_forward.21} parent=142 // pred_check
          %p369 = pneg %p109
        $region153: #{image_encoder_forward.21} parent=142 // pred_check_branch
          %371 = sbr.rel (%p369) target = $region155
        $region154: #{image_encoder_forward.21} parent=142 // pred_region
          _
        $region155: #{image_encoder_forward.21} parent=142 // pred_fallthru
          _
        %s372 = sand.u32 %s36, 1
        %s373 = sand.u32 %s36, 1
        %s374 = smul.addr %s373, 16
        %s375 = scalar_lea.vmem [#allocation2], %s374
        %p376 = pneg %p49
        %p377 = pneg %p46
        %s378 = sand.u32 %s66, 1
        %s379 = sand.u32 %s66, 1
        %s380 = smul.addr %s379, 16
        %s381 = scalar_lea.vmem [#allocation3], %s380
        %p382 = pneg %p79
        %p383 = pneg %p76
        %s384 = sand.u32 %s96, 1
        %s385 = sand.u32 %s96, 1
        %s386 = smul.addr %s385, 16
        %s387 = scalar_lea.vmem [#allocation4], %s386
        %p388 = pneg %p109
        %p389 = pneg %p106
        %p390 = pneg %p137
        %p391 = pneg %p134
        %p392 = scmp.lt.s32.totalorder %s18, 1
        %s393 = scalar_select %p392, %s18, 1
        %p394 = scmp.lt.s32.totalorder %s19, 0
        %s395 = scalar_select %p394, %s19, 0
        %s396 = smul.addr %s393, 4
        %s397 = sadd.s32 %s395, %s396
        %s398 = smul.addr %s397, 4
        %s399 = scalar_lea.vmem %s3, %s398
        %s400 = sadd.s32 %s19, 1
        %s401 = sadd.s32 %s19, 2
        %p402 = scmp.lt.s32.totalorder %s18, 1
        %s403 = scalar_select %p402, %s18, 1
        %p404 = scmp.lt.s32.totalorder %s19, 0
        %s405 = scalar_select %p404, %s19, 0
        %s406 = smul.addr %s403, 4
        %s407 = sadd.s32 %s405, %s406
        %s408 = smul.addr %s407, 4
        %s409 = scalar_lea.vmem %s3, %s408
        %v411 = vlaneseq
        %v412 = vand.u32 %v411, 127
        %vm413 = vcmp.lt.s32.totalorder %v412, 17
        %v414 = vsel %vm413, 0.0, -1e+30
        %v415 = vld [vmem:[%s354] sm:$0xf]
        %v416 = vld [vmem:[%s354 + $0x4] sm:$0xf]
        %v417 = vld [vmem:[%s354 + $0x8] sm:$0xf]
        %v418 = vld [vmem:[%s354 + $0xc] sm:$0xf]
        %v419 = vld [vmem:[%s361] sm:$0xf]
        %v420 = vld [vmem:[%s361 + $0x4] sm:$0xf]
        %v421 = vld [vmem:[%s361 + $0x8] sm:$0xf]
        %v422 = vld [vmem:[%s361 + $0xc] sm:$0xf]
        %v423 = vld [vmem:[%s368] sm:$0xf]
        %v424 = vld [vmem:[%s368 + $0x4] sm:$0xf]
        %v425 = vld [vmem:[%s368 + $0x8] sm:$0xf]
        %v426 = vld [vmem:[%s368 + $0xc] sm:$0xf]
        %v431 = vunpack.c.l.b16 %v415
        %v432 = vunpack.c.l.b16 %v416
        %v433 = vunpack.c.l.b16 %v417
        %v434 = vunpack.c.l.b16 %v418
        %v435 = vpack.c.b16 %v432, %v431
        %v436 = vpack.c.b16 %v434, %v433
        %v441 = vunpack.c.l.b16 %v419
        %v442 = vunpack.c.l.b16 %v420
        %v443 = vunpack.c.l.b16 %v421
        %v444 = vunpack.c.l.b16 %v422
        %v445 = vpack.c.b16 %v442, %v441
        %v446 = vpack.c.b16 %v444, %v443
        %vm447 = vcmask 261120
        %v449 = vsel %vm447, %v435, 0
        %v452 = vsel %vm447, %v436, 0
        %v455 = vsel %vm447, %v445, 0
        %v458 = vsel %vm447, %v446, 0
        %460 = vmatprep.subr.bf16.mxu0 0
        %461 = vmatpush1.bf16.xpose.msra.mxu0 %v455
        %462 = vmatprep.subr.bf16.mxu0 0
        %463 = vmatpush1.bf16.xpose.msra.mxu0 %v458
        %464 = vmatprep.subr.bf16.mxu0 0
        %465 = vmatpush1.bf16.xpose.msra.mxu0 0
        %466 = vmatprep.subr.bf16.mxu0 0
        %467 = vmatpush1.bf16.xpose.msra.mxu0 0
        %468 = vmatprep.subr.bf16.mxu0 0
        %469 = vmatpush1.bf16.xpose.msra.mxu0 0
        %470 = vmatprep.subr.bf16.mxu0 0
        %471 = vmatpush1.bf16.xpose.msra.mxu0 0
        %472 = vmatprep.subr.bf16.mxu0 0
        %473 = vmatpush1.bf16.xpose.msra.mxu0 0
        %474 = vmatprep.subr.bf16.mxu0 0
        %475 = vmatpush1.bf16.xpose.msra.mxu0 0
        %476 = vmatprep.subr.bf16.mxu0 0
        %477 = vmatpush1.bf16.xpose.msra.mxu0 0
        %478 = vmatprep.subr.bf16.mxu0 0
        %479 = vmatpush1.bf16.xpose.msra.mxu0 0
        %480 = vmatprep.subr.bf16.mxu0 0
        %481 = vmatpush1.bf16.xpose.msra.mxu0 0
        %482 = vmatprep.subr.bf16.mxu0 0
        %483 = vmatpush1.bf16.xpose.msra.mxu0 0
        %484 = vmatprep.subr.bf16.mxu0 0
        %485 = vmatpush1.bf16.xpose.msra.mxu0 0
        %486 = vmatprep.subr.bf16.mxu0 0
        %487 = vmatpush1.bf16.xpose.msra.mxu0 0
        %488 = vmatprep.subr.bf16.mxu0 0
        %489 = vmatpush1.bf16.xpose.msra.mxu0 0
        %490 = vmatprep.subr.bf16.mxu0 0
        %491 = vmatpush1.bf16.xpose.msra.mxu0 0
        %492 = vmatprep.mubr.bf16.mxu0 0
        %493 = vmatmul.mubr.bf16.gmra.mrb[0].mxu0 %v449
        %v494 = vpop.f32.mrb[0].mxu0
        %v495 = vadd.f32 0.0, %v494
        %v496 = vpop.f32.mrb[0].mxu0
        %v497 = vpop.f32.mrb[0].mxu0
        %v498 = vadd.f32 0.0, %v497
        %v499 = vpop.f32.mrb[0].mxu0
        %500 = vmatprep.mubr.bf16.mxu0 0
        %501 = vmatmul.mubr.bf16.gmra.mrb[0].mxu0 %v452
        %v502 = vpop.f32.mrb[0].mxu0
        %v503 = vadd.f32 0.0, %v502
        %v504 = vpop.f32.mrb[0].mxu0
        %v505 = vpop.f32.mrb[0].mxu0
        %v506 = vadd.f32 0.0, %v505
        %v507 = vpop.f32.mrb[0].mxu0
        %508 = vdwg.mxu0
        %v509 = vmul.f32 %v495, 0.17677669
        %v510 = vmul.f32 %v498, 0.17677669
        %v511 = vmul.f32 %v503, 0.17677669
        %v512 = vmul.f32 %v506, 0.17677669
        %v513 = vadd.f32 %v509, %v414
        %v514 = vadd.f32 %v510, %v414
        %v515 = vadd.f32 %v511, %v414
        %v516 = vadd.f32 %v512, %v414
        %v517 = vsel %vm447, %v513, -inf
        %518 = vmax.xlane.f32.xlu0 %v517
        %v519 = vpop.xlane.xlu0 %518
        %v520 = vsel %vm447, %v514, -inf
        %521 = vmax.xlane.f32.xlu0 %v520
        %v522 = vpop.xlane.xlu0 %521
        %v523 = vsel %vm447, %v515, -inf
        %524 = vmax.xlane.f32.xlu0 %v523
        %v525 = vpop.xlane.xlu0 %524
        %v526 = vsel %vm447, %v516, -inf
        %527 = vmax.xlane.f32.xlu0 %v526
        %v528 = vpop.xlane.xlu0 %527
        %v529 = vsub.f32 %v513, %v519
        %v530 = vsub.f32 %v514, %v522
        %v531 = vsub.f32 %v515, %v525
        %v532 = vsub.f32 %v516, %v528
        %v533 = vmul.f32 %v529, 1.442695
        %v534 = vpow.pop %v533
        %v535 = vmul.f32 %v530, 1.442695
        %v536 = vpow.pop %v535
        %v537 = vmul.f32 %v531, 1.442695
        %v538 = vpow.pop %v537
        %v539 = vmul.f32 %v532, 1.442695
        %v540 = vpow.pop %v539
        %v541 = vsel %vm447, %v534, 0.0
        %542 = vadd.xlane.f32.xlu0 %v541
        %v543 = vpop.xlane.xlu0 %542
        %v544 = vsel %vm447, %v536, 0.0
        %545 = vadd.xlane.f32.xlu0 %v544
        %v546 = vpop.xlane.xlu0 %545
        %v547 = vsel %vm447, %v538, 0.0
        %548 = vadd.xlane.f32.xlu0 %v547
        %v549 = vpop.xlane.xlu0 %548
        %v550 = vsel %vm447, %v540, 0.0
        %551 = vadd.xlane.f32.xlu0 %v550
        %v552 = vpop.xlane.xlu0 %551
        %v553 = vrcp.pop %v543
        %v554 = vrcp.pop %v546
        %v555 = vrcp.pop %v549
        %v556 = vrcp.pop %v552
        %v557 = vmul.f32 %v534, %v553
        %v558 = vmul.f32 %v536, %v554
        %v559 = vmul.f32 %v538, %v555
        %v560 = vmul.f32 %v540, %v556
        %v561 = vpack.c.bf16 %v558, %v557
        %v562 = vpack.c.bf16 %v560, %v559
        %v567 = vunpack.c.l.b16 %v423
        %v568 = vunpack.c.l.b16 %v424
        %v569 = vunpack.c.l.b16 %v425
        %v570 = vunpack.c.l.b16 %v426
        %v571 = vpack.c.b16 %v568, %v567
        %v572 = vpack.c.b16 %v570, %v569
        %v576 = vsel %vm447, %v561, 0
        %v579 = vsel %vm447, %v562, 0
        %581 = vmatprep.subr.bf16.mxu0 0
        %582 = vmatpush1.bf16.msra.mxu0 %v571
        %583 = vmatprep.subr.bf16.mxu0 0
        %584 = vmatpush1.bf16.msra.mxu0 %v572
        %585 = vmatprep.subr.bf16.mxu0 0
        %586 = vmatpush1.bf16.msra.mxu0 0
        %587 = vmatprep.subr.bf16.mxu0 0
        %588 = vmatpush1.bf16.msra.mxu0 0
        %589 = vmatprep.subr.bf16.mxu0 0
        %590 = vmatpush1.bf16.msra.mxu0 0
        %591 = vmatprep.subr.bf16.mxu0 0
        %592 = vmatpush1.bf16.msra.mxu0 0
        %593 = vmatprep.subr.bf16.mxu0 0
        %594 = vmatpush1.bf16.msra.mxu0 0
        %595 = vmatprep.subr.bf16.mxu0 0
        %596 = vmatpush1.bf16.msra.mxu0 0
        %597 = vmatprep.subr.bf16.mxu0 0
        %598 = vmatpush1.bf16.msra.mxu0 0
        %599 = vmatprep.subr.bf16.mxu0 0
        %600 = vmatpush1.bf16.msra.mxu0 0
        %601 = vmatprep.subr.bf16.mxu0 0
        %602 = vmatpush1.bf16.msra.mxu0 0
        %603 = vmatprep.subr.bf16.mxu0 0
        %604 = vmatpush1.bf16.msra.mxu0 0
        %605 = vmatprep.subr.bf16.mxu0 0
        %606 = vmatpush1.bf16.msra.mxu0 0
        %607 = vmatprep.subr.bf16.mxu0 0
        %608 = vmatpush1.bf16.msra.mxu0 0
        %609 = vmatprep.subr.bf16.mxu0 0
        %610 = vmatpush1.bf16.msra.mxu0 0
        %611 = vmatprep.subr.bf16.mxu0 0
        %612 = vmatpush1.bf16.msra.mxu0 0
        %613 = vmatprep.mubr.bf16.mxu0 0
        %614 = vmatmul.mubr.bf16.gmra.mrb[0].mxu0 %v576
        %v615 = vpop.f32.mrb[0].mxu0
        %v616 = vadd.f32 0.0, %v615
        %v617 = vpop.f32.mrb[0].mxu0
        %v618 = vpop.f32.mrb[0].mxu0
        %v619 = vadd.f32 0.0, %v618
        %v620 = vpop.f32.mrb[0].mxu0
        %621 = vmatprep.mubr.bf16.mxu0 0
        %622 = vmatmul.mubr.bf16.gmra.mrb[0].mxu0 %v579
        %v623 = vpop.f32.mrb[0].mxu0
        %v624 = vadd.f32 0.0, %v623
        %v625 = vpop.f32.mrb[0].mxu0
        %v626 = vpop.f32.mrb[0].mxu0
        %v627 = vadd.f32 0.0, %v626
        %v628 = vpop.f32.mrb[0].mxu0
        %629 = vdwg.mxu0
        %630 = vrot.lane.b32.xlu0 %v435, 96
        %v631 = vpop.permute.xlu0 %630
        %632 = vrot.lane.b32.xlu0 %v436, 96
        %v633 = vpop.permute.xlu0 %632
        %634 = vrot.lane.b32.xlu0 %v445, 96
        %v635 = vpop.permute.xlu0 %634
        %636 = vrot.lane.b32.xlu0 %v446, 96
        %v637 = vpop.permute.xlu0 %636
        %v639 = vsel %vm447, %v631, 0
        %v642 = vsel %vm447, %v633, 0
        %v645 = vsel %vm447, %v635, 0
        %v648 = vsel %vm447, %v637, 0
        %650 = vmatprep.subr.bf16.mxu0 0
        %651 = vmatpush1.bf16.xpose.msra.mxu0 %v645
        %652 = vmatprep.subr.bf16.mxu0 0
        %653 = vmatpush1.bf16.xpose.msra.mxu0 %v648
        %654 = vmatprep.subr.bf16.mxu0 0
        %655 = vmatpush1.bf16.xpose.msra.mxu0 0
        %656 = vmatprep.subr.bf16.mxu0 0
        %657 = vmatpush1.bf16.xpose.msra.mxu0 0
        %658 = vmatprep.subr.bf16.mxu0 0
        %659 = vmatpush1.bf16.xpose.msra.mxu0 0
        %660 = vmatprep.subr.bf16.mxu0 0
        %661 = vmatpush1.bf16.xpose.msra.mxu0 0
        %662 = vmatprep.subr.bf16.mxu0 0
        %663 = vmatpush1.bf16.xpose.msra.mxu0 0
        %664 = vmatprep.subr.bf16.mxu0 0
        %665 = vmatpush1.bf16.xpose.msra.mxu0 0
        %666 = vmatprep.subr.bf16.mxu0 0
        %667 = vmatpush1.bf16.xpose.msra.mxu0 0
        %668 = vmatprep.subr.bf16.mxu0 0
        %669 = vmatpush1.bf16.xpose.msra.mxu0 0
        %670 = vmatprep.subr.bf16.mxu0 0
        %671 = vmatpush1.bf16.xpose.msra.mxu0 0
        %672 = vmatprep.subr.bf16.mxu0 0
        %673 = vmatpush1.bf16.xpose.msra.mxu0 0
        %674 = vmatprep.subr.bf16.mxu0 0
        %675 = vmatpush1.bf16.xpose.msra.mxu0 0
        %676 = vmatprep.subr.bf16.mxu0 0
        %677 = vmatpush1.bf16.xpose.msra.mxu0 0
        %678 = vmatprep.subr.bf16.mxu0 0
        %679 = vmatpush1.bf16.xpose.msra.mxu0 0
        %680 = vmatprep.subr.bf16.mxu0 0
        %681 = vmatpush1.bf16.xpose.msra.mxu0 0
        %682 = vmatprep.mubr.bf16.mxu0 0
        %683 = vmatmul.mubr.bf16.gmra.mrb[0].mxu0 %v639
        %v684 = vpop.f32.mrb[0].mxu0
        %v685 = vadd.f32 0.0, %v684
        %v686 = vpop.f32.mrb[0].mxu0
        %v687 = vpop.f32.mrb[0].mxu0
        %v688 = vadd.f32 0.0, %v687
        %v689 = vpop.f32.mrb[0].mxu0
        %690 = vmatprep.mubr.bf16.mxu0 0
        %691 = vmatmul.mubr.bf16.gmra.mrb[0].mxu0 %v642
        %v692 = vpop.f32.mrb[0].mxu0
        %v693 = vadd.f32 0.0, %v692
        %v694 = vpop.f32.mrb[0].mxu0
        %v695 = vpop.f32.mrb[0].mxu0
        %v696 = vadd.f32 0.0, %v695
        %v697 = vpop.f32.mrb[0].mxu0
        %698 = vdwg.mxu0
        %v699 = vmul.f32 %v685, 0.17677669
        %v700 = vmul.f32 %v688, 0.17677669
        %v701 = vmul.f32 %v693, 0.17677669
        %v702 = vmul.f32 %v696, 0.17677669
        %v703 = vadd.f32 %v699, %v414
        %v704 = vadd.f32 %v700, %v414
        %v705 = vadd.f32 %v701, %v414
        %v706 = vadd.f32 %v702, %v414
        %v707 = vsel %vm447, %v703, -inf
        %708 = vmax.xlane.f32.xlu0 %v707
        %v709 = vpop.xlane.xlu0 %708
        %v710 = vsel %vm447, %v704, -inf
        %711 = vmax.xlane.f32.xlu0 %v710
        %v712 = vpop.xlane.xlu0 %711
        %v713 = vsel %vm447, %v705, -inf
        %714 = vmax.xlane.f32.xlu0 %v713
        %v715 = vpop.xlane.xlu0 %714
        %v716 = vsel %vm447, %v706, -inf
        %717 = vmax.xlane.f32.xlu0 %v716
        %v718 = vpop.xlane.xlu0 %717
        %v719 = vsub.f32 %v703, %v709
        %v720 = vsub.f32 %v704, %v712
        %v721 = vsub.f32 %v705, %v715
        %v722 = vsub.f32 %v706, %v718
        %v723 = vmul.f32 %v719, 1.442695
        %v724 = vpow.pop %v723
        %v725 = vmul.f32 %v720, 1.442695
        %v726 = vpow.pop %v725
        %v727 = vmul.f32 %v721, 1.442695
        %v728 = vpow.pop %v727
        %v729 = vmul.f32 %v722, 1.442695
        %v730 = vpow.pop %v729
        %v731 = vsel %vm447, %v724, 0.0
        %732 = vadd.xlane.f32.xlu0 %v731
        %v733 = vpop.xlane.xlu0 %732
        %v734 = vsel %vm447, %v726, 0.0
        %735 = vadd.xlane.f32.xlu0 %v734
        %v736 = vpop.xlane.xlu0 %735
        %v737 = vsel %vm447, %v728, 0.0
        %738 = vadd.xlane.f32.xlu0 %v737
        %v739 = vpop.xlane.xlu0 %738
        %v740 = vsel %vm447, %v730, 0.0
        %741 = vadd.xlane.f32.xlu0 %v740
        %v742 = vpop.xlane.xlu0 %741
        %v743 = vrcp.pop %v733
        %v744 = vrcp.pop %v736
        %v745 = vrcp.pop %v739
        %v746 = vrcp.pop %v742
        %v747 = vmul.f32 %v724, %v743
        %v748 = vmul.f32 %v726, %v744
        %v749 = vmul.f32 %v728, %v745
        %v750 = vmul.f32 %v730, %v746
        %v751 = vpack.c.bf16 %v748, %v747
        %v752 = vpack.c.bf16 %v750, %v749
        %753 = vrot.lane.b32.xlu0 %v571, 96
        %v754 = vpop.permute.xlu0 %753
        %755 = vrot.lane.b32.xlu0 %v572, 96
        %v756 = vpop.permute.xlu0 %755
        %v760 = vsel %vm447, %v751, 0
        %v763 = vsel %vm447, %v752, 0
        %765 = vmatprep.subr.bf16.mxu0 0
        %766 = vmatpush1.bf16.msra.mxu0 %v754
        %767 = vmatprep.subr.bf16.mxu0 0
        %768 = vmatpush1.bf16.msra.mxu0 %v756
        %769 = vmatprep.subr.bf16.mxu0 0
        %770 = vmatpush1.bf16.msra.mxu0 0
        %771 = vmatprep.subr.bf16.mxu0 0
        %772 = vmatpush1.bf16.msra.mxu0 0
        %773 = vmatprep.subr.bf16.mxu0 0
        %774 = vmatpush1.bf16.msra.mxu0 0
        %775 = vmatprep.subr.bf16.mxu0 0
        %776 = vmatpush1.bf16.msra.mxu0 0
        %777 = vmatprep.subr.bf16.mxu0 0
        %778 = vmatpush1.bf16.msra.mxu0 0
        %779 = vmatprep.subr.bf16.mxu0 0
        %780 = vmatpush1.bf16.msra.mxu0 0
        %781 = vmatprep.subr.bf16.mxu0 0
        %782 = vmatpush1.bf16.msra.mxu0 0
        %783 = vmatprep.subr.bf16.mxu0 0
        %784 = vmatpush1.bf16.msra.mxu0 0
        %785 = vmatprep.subr.bf16.mxu0 0
        %786 = vmatpush1.bf16.msra.mxu0 0
        %787 = vmatprep.subr.bf16.mxu0 0
        %788 = vmatpush1.bf16.msra.mxu0 0
        %789 = vmatprep.subr.bf16.mxu0 0
        %790 = vmatpush1.bf16.msra.mxu0 0
        %791 = vmatprep.subr.bf16.mxu0 0
        %792 = vmatpush1.bf16.msra.mxu0 0
        %793 = vmatprep.subr.bf16.mxu0 0
        %794 = vmatpush1.bf16.msra.mxu0 0
        %795 = vmatprep.subr.bf16.mxu0 0
        %796 = vmatpush1.bf16.msra.mxu0 0
        %797 = vmatprep.mubr.bf16.mxu0 0
        %798 = vmatmul.mubr.bf16.gmra.mrb[0].mxu0 %v760
        %v799 = vpop.f32.mrb[0].mxu0
        %v800 = vadd.f32 0.0, %v799
        %v801 = vpop.f32.mrb[0].mxu0
        %v802 = vpop.f32.mrb[0].mxu0
        %v803 = vadd.f32 0.0, %v802
        %v804 = vpop.f32.mrb[0].mxu0
        %805 = vmatprep.mubr.bf16.mxu0 0
        %806 = vmatmul.mubr.bf16.gmra.mrb[0].mxu0 %v763
        %v807 = vpop.f32.mrb[0].mxu0
        %v808 = vadd.f32 0.0, %v807
        %v809 = vpop.f32.mrb[0].mxu0
        %v810 = vpop.f32.mrb[0].mxu0
        %v811 = vadd.f32 0.0, %v810
        %v812 = vpop.f32.mrb[0].mxu0
        %813 = vdwg.mxu0
        %814 = vrot.lane.b32.xlu0 %v435, 64
        %v815 = vpop.permute.xlu0 %814
        %816 = vrot.lane.b32.xlu0 %v436, 64
        %v817 = vpop.permute.xlu0 %816
        %818 = vrot.lane.b32.xlu0 %v445, 64
        %v819 = vpop.permute.xlu0 %818
        %820 = vrot.lane.b32.xlu0 %v446, 64
        %v821 = vpop.permute.xlu0 %820
        %v823 = vsel %vm447, %v815, 0
        %v826 = vsel %vm447, %v817, 0
        %v829 = vsel %vm447, %v819, 0
        %v832 = vsel %vm447, %v821, 0
        %834 = vmatprep.subr.bf16.mxu0 0
        %835 = vmatpush1.bf16.xpose.msra.mxu0 %v829
        %836 = vmatprep.subr.bf16.mxu0 0
        %837 = vmatpush1.bf16.xpose.msra.mxu0 %v832
        %838 = vmatprep.subr.bf16.mxu0 0
        %839 = vmatpush1.bf16.xpose.msra.mxu0 0
        %840 = vmatprep.subr.bf16.mxu0 0
        %841 = vmatpush1.bf16.xpose.msra.mxu0 0
        %842 = vmatprep.subr.bf16.mxu0 0
        %843 = vmatpush1.bf16.xpose.msra.mxu0 0
        %844 = vmatprep.subr.bf16.mxu0 0
        %845 = vmatpush1.bf16.xpose.msra.mxu0 0
        %846 = vmatprep.subr.bf16.mxu0 0
        %847 = vmatpush1.bf16.xpose.msra.mxu0 0
        %848 = vmatprep.subr.bf16.mxu0 0
        %849 = vmatpush1.bf16.xpose.msra.mxu0 0
        %850 = vmatprep.subr.bf16.mxu0 0
        %851 = vmatpush1.bf16.xpose.msra.mxu0 0
        %852 = vmatprep.subr.bf16.mxu0 0
        %853 = vmatpush1.bf16.xpose.msra.mxu0 0
        %854 = vmatprep.subr.bf16.mxu0 0
        %855 = vmatpush1.bf16.xpose.msra.mxu0 0
        %856 = vmatprep.subr.bf16.mxu0 0
        %857 = vmatpush1.bf16.xpose.msra.mxu0 0
        %858 = vmatprep.subr.bf16.mxu0 0
        %859 = vmatpush1.bf16.xpose.msra.mxu0 0
        %860 = vmatprep.subr.bf16.mxu0 0
        %861 = vmatpush1.bf16.xpose.msra.mxu0 0
        %862 = vmatprep.subr.bf16.mxu0 0
        %863 = vmatpush1.bf16.xpose.msra.mxu0 0
        %864 = vmatprep.subr.bf16.mxu0 0
        %865 = vmatpush1.bf16.xpose.msra.mxu0 0
        %866 = vmatprep.mubr.bf16.mxu0 0
        %867 = vmatmul.mubr.bf16.gmra.mrb[0].mxu0 %v823
        %v868 = vpop.f32.mrb[0].mxu0
        %v869 = vadd.f32 0.0, %v868
        %v870 = vpop.f32.mrb[0].mxu0
        %v871 = vpop.f32.mrb[0].mxu0
        %v872 = vadd.f32 0.0, %v871
        %v873 = vpop.f32.mrb[0].mxu0
        %874 = vmatprep.mubr.bf16.mxu0 0
        %875 = vmatmul.mubr.bf16.gmra.mrb[0].mxu0 %v826
        %v876 = vpop.f32.mrb[0].mxu0
        %v877 = vadd.f32 0.0, %v876
        %v878 = vpop.f32.mrb[0].mxu0
        %v879 = vpop.f32.mrb[0].mxu0
        %v880 = vadd.f32 0.0, %v879
        %v881 = vpop.f32.mrb[0].mxu0
        %882 = vdwg.mxu0
        %v883 = vmul.f32 %v869, 0.17677669
        %v884 = vmul.f32 %v872, 0.17677669
        %v885 = vmul.f32 %v877, 0.17677669
        %v886 = vmul.f32 %v880, 0.17677669
        %v887 = vadd.f32 %v883, %v414
        %v888 = vadd.f32 %v884, %v414
        %v889 = vadd.f32 %v885, %v414
        %v890 = vadd.f32 %v886, %v414
        %v891 = vsel %vm447, %v887, -inf
        %892 = vmax.xlane.f32.xlu0 %v891
        %v893 = vpop.xlane.xlu0 %892
        %v894 = vsel %vm447, %v888, -inf
        %895 = vmax.xlane.f32.xlu0 %v894
        %v896 = vpop.xlane.xlu0 %895
        %v897 = vsel %vm447, %v889, -inf
        %898 = vmax.xlane.f32.xlu0 %v897
        %v899 = vpop.xlane.xlu0 %898
        %v900 = vsel %vm447, %v890, -inf
        %901 = vmax.xlane.f32.xlu0 %v900
        %v902 = vpop.xlane.xlu0 %901
        %v903 = vsub.f32 %v887, %v893
        %v904 = vsub.f32 %v888, %v896
        %v905 = vsub.f32 %v889, %v899
        %v906 = vsub.f32 %v890, %v902
        %v907 = vmul.f32 %v903, 1.442695
        %v908 = vpow.pop %v907
        %v909 = vmul.f32 %v904, 1.442695
        %v910 = vpow.pop %v909
        %v911 = vmul.f32 %v905, 1.442695
        %v912 = vpow.pop %v911
        %v913 = vmul.f32 %v906, 1.442695
        %v914 = vpow.pop %v913
        %v915 = vsel %vm447, %v908, 0.0
        %916 = vadd.xlane.f32.xlu0 %v915
        %v917 = vpop.xlane.xlu0 %916
        %v918 = vsel %vm447, %v910, 0.0
        %919 = vadd.xlane.f32.xlu0 %v918
        %v920 = vpop.xlane.xlu0 %919
        %v921 = vsel %vm447, %v912, 0.0
        %922 = vadd.xlane.f32.xlu0 %v921
        %v923 = vpop.xlane.xlu0 %922
        %v924 = vsel %vm447, %v914, 0.0
        %925 = vadd.xlane.f32.xlu0 %v924
        %v926 = vpop.xlane.xlu0 %925
        %v927 = vrcp.pop %v917
        %v928 = vrcp.pop %v920
        %v929 = vrcp.pop %v923
        %v930 = vrcp.pop %v926
        %v931 = vmul.f32 %v908, %v927
        %v932 = vmul.f32 %v910, %v928
        %v933 = vmul.f32 %v912, %v929
        %v934 = vmul.f32 %v914, %v930
        %v935 = vpack.c.bf16 %v932, %v931
        %v936 = vpack.c.bf16 %v934, %v933
        %937 = vrot.lane.b32.xlu0 %v571, 64
        %v938 = vpop.permute.xlu0 %937
        %939 = vrot.lane.b32.xlu0 %v572, 64
        %v940 = vpop.permute.xlu0 %939
        %v944 = vsel %vm447, %v935, 0
        %v947 = vsel %vm447, %v936, 0
        %949 = vmatprep.subr.bf16.mxu0 0
        %950 = vmatpush1.bf16.msra.mxu0 %v938
        %951 = vmatprep.subr.bf16.mxu0 0
        %952 = vmatpush1.bf16.msra.mxu0 %v940
        %953 = vmatprep.subr.bf16.mxu0 0
        %954 = vmatpush1.bf16.msra.mxu0 0
        %955 = vmatprep.subr.bf16.mxu0 0
        %956 = vmatpush1.bf16.msra.mxu0 0
        %957 = vmatprep.subr.bf16.mxu0 0
        %958 = vmatpush1.bf16.msra.mxu0 0
        %959 = vmatprep.subr.bf16.mxu0 0
        %960 = vmatpush1.bf16.msra.mxu0 0
        %961 = vmatprep.subr.bf16.mxu0 0
        %962 = vmatpush1.bf16.msra.mxu0 0
        %963 = vmatprep.subr.bf16.mxu0 0
        %964 = vmatpush1.bf16.msra.mxu0 0
        %965 = vmatprep.subr.bf16.mxu0 0
        %966 = vmatpush1.bf16.msra.mxu0 0
        %967 = vmatprep.subr.bf16.mxu0 0
        %968 = vmatpush1.bf16.msra.mxu0 0
        %969 = vmatprep.subr.bf16.mxu0 0
        %970 = vmatpush1.bf16.msra.mxu0 0
        %971 = vmatprep.subr.bf16.mxu0 0
        %972 = vmatpush1.bf16.msra.mxu0 0
        %973 = vmatprep.subr.bf16.mxu0 0
        %974 = vmatpush1.bf16.msra.mxu0 0
        %975 = vmatprep.subr.bf16.mxu0 0
        %976 = vmatpush1.bf16.msra.mxu0 0
        %977 = vmatprep.subr.bf16.mxu0 0
        %978 = vmatpush1.bf16.msra.mxu0 0
        %979 = vmatprep.subr.bf16.mxu0 0
        %980 = vmatpush1.bf16.msra.mxu0 0
        %981 = vmatprep.mubr.bf16.mxu0 0
        %982 = vmatmul.mubr.bf16.gmra.mrb[0].mxu0 %v944
        %v983 = vpop.f32.mrb[0].mxu0
        %v984 = vadd.f32 0.0, %v983
        %v985 = vpop.f32.mrb[0].mxu0
        %v986 = vpop.f32.mrb[0].mxu0
        %v987 = vadd.f32 0.0, %v986
        %v988 = vpop.f32.mrb[0].mxu0
        %989 = vmatprep.mubr.bf16.mxu0 0
        %990 = vmatmul.mubr.bf16.gmra.mrb[0].mxu0 %v947
        %v991 = vpop.f32.mrb[0].mxu0
        %v992 = vadd.f32 0.0, %v991
        %v993 = vpop.f32.mrb[0].mxu0
        %v994 = vpop.f32.mrb[0].mxu0
        %v995 = vadd.f32 0.0, %v994
        %v996 = vpop.f32.mrb[0].mxu0
        %997 = vdwg.mxu0
        %998 = vrot.lane.b32.xlu0 %v435, 32
        %v999 = vpop.permute.xlu0 %998
        %1000 = vrot.lane.b32.xlu0 %v436, 32
        %v1001 = vpop.permute.xlu0 %1000
        %1002 = vrot.lane.b32.xlu0 %v445, 32
        %v1003 = vpop.permute.xlu0 %1002
        %1004 = vrot.lane.b32.xlu0 %v446, 32
        %v1005 = vpop.permute.xlu0 %1004
        %v1007 = vsel %vm447, %v999, 0
        %v1010 = vsel %vm447, %v1001, 0
        %v1013 = vsel %vm447, %v1003, 0
        %v1016 = vsel %vm447, %v1005, 0
        %1018 = vmatprep.subr.bf16.mxu0 0
        %1019 = vmatpush1.bf16.xpose.msra.mxu0 %v1013
        %1020 = vmatprep.subr.bf16.mxu0 0
        %1021 = vmatpush1.bf16.xpose.msra.mxu0 %v1016
        %1022 = vmatprep.subr.bf16.mxu0 0
        %1023 = vmatpush1.bf16.xpose.msra.mxu0 0
        %1024 = vmatprep.subr.bf16.mxu0 0
        %1025 = vmatpush1.bf16.xpose.msra.mxu0 0
        %1026 = vmatprep.subr.bf16.mxu0 0
        %1027 = vmatpush1.bf16.xpose.msra.mxu0 0
        %1028 = vmatprep.subr.bf16.mxu0 0
        %1029 = vmatpush1.bf16.xpose.msra.mxu0 0
        %1030 = vmatprep.subr.bf16.mxu0 0
        %1031 = vmatpush1.bf16.xpose.msra.mxu0 0
        %1032 = vmatprep.subr.bf16.mxu0 0
        %1033 = vmatpush1.bf16.xpose.msra.mxu0 0
        %1034 = vmatprep.subr.bf16.mxu0 0
        %1035 = vmatpush1.bf16.xpose.msra.mxu0 0
        %1036 = vmatprep.subr.bf16.mxu0 0
        %1037 = vmatpush1.bf16.xpose.msra.mxu0 0
        %1038 = vmatprep.subr.bf16.mxu0 0
        %1039 = vmatpush1.bf16.xpose.msra.mxu0 0
        %1040 = vmatprep.subr.bf16.mxu0 0
        %1041 = vmatpush1.bf16.xpose.msra.mxu0 0
        %1042 = vmatprep.subr.bf16.mxu0 0
        %1043 = vmatpush1.bf16.xpose.msra.mxu0 0
        %1044 = vmatprep.subr.bf16.mxu0 0
        %1045 = vmatpush1.bf16.xpose.msra.mxu0 0
        %1046 = vmatprep.subr.bf16.mxu0 0
        %1047 = vmatpush1.bf16.xpose.msra.mxu0 0
        %1048 = vmatprep.subr.bf16.mxu0 0
        %1049 = vmatpush1.bf16.xpose.msra.mxu0 0
        %1050 = vmatprep.mubr.bf16.mxu0 0
        %1051 = vmatmul.mubr.bf16.gmra.mrb[0].mxu0 %v1007
        %v1052 = vpop.f32.mrb[0].mxu0
        %v1053 = vadd.f32 0.0, %v1052
        %v1054 = vpop.f32.mrb[0].mxu0
        %v1055 = vpop.f32.mrb[0].mxu0
        %v1056 = vadd.f32 0.0, %v1055
        %v1057 = vpop.f32.mrb[0].mxu0
        %1058 = vmatprep.mubr.bf16.mxu0 0
        %1059 = vmatmul.mubr.bf16.gmra.mrb[0].mxu0 %v1010
        %v1060 = vpop.f32.mrb[0].mxu0
        %v1061 = vadd.f32 0.0, %v1060
        %v1062 = vpop.f32.mrb[0].mxu0
        %v1063 = vpop.f32.mrb[0].mxu0
        %v1064 = vadd.f32 0.0, %v1063
        %v1065 = vpop.f32.mrb[0].mxu0
        %1066 = vdwg.mxu0
        %v1067 = vmul.f32 %v1053, 0.17677669
        %v1068 = vmul.f32 %v1056, 0.17677669
        %v1069 = vmul.f32 %v1061, 0.17677669
        %v1070 = vmul.f32 %v1064, 0.17677669
        %v1071 = vadd.f32 %v1067, %v414
        %v1072 = vadd.f32 %v1068, %v414
        %v1073 = vadd.f32 %v1069, %v414
        %v1074 = vadd.f32 %v1070, %v414
        %v1075 = vsel %vm447, %v1071, -inf
        %1076 = vmax.xlane.f32.xlu0 %v1075
        %v1077 = vpop.xlane.xlu0 %1076
        %v1078 = vsel %vm447, %v1072, -inf
        %1079 = vmax.xlane.f32.xlu0 %v1078
        %v1080 = vpop.xlane.xlu0 %1079
        %v1081 = vsel %vm447, %v1073, -inf
        %1082 = vmax.xlane.f32.xlu0 %v1081
        %v1083 = vpop.xlane.xlu0 %1082
        %v1084 = vsel %vm447, %v1074, -inf
        %1085 = vmax.xlane.f32.xlu0 %v1084
        %v1086 = vpop.xlane.xlu0 %1085
        %v1087 = vsub.f32 %v1071, %v1077
        %v1088 = vsub.f32 %v1072, %v1080
        %v1089 = vsub.f32 %v1073, %v1083
        %v1090 = vsub.f32 %v1074, %v1086
        %v1091 = vmul.f32 %v1087, 1.442695
        %v1092 = vpow.pop %v1091
        %v1093 = vmul.f32 %v1088, 1.442695
        %v1094 = vpow.pop %v1093
        %v1095 = vmul.f32 %v1089, 1.442695
        %v1096 = vpow.pop %v1095
        %v1097 = vmul.f32 %v1090, 1.442695
        %v1098 = vpow.pop %v1097
        %v1099 = vsel %vm447, %v1092, 0.0
        %1100 = vadd.xlane.f32.xlu0 %v1099
        %v1101 = vpop.xlane.xlu0 %1100
        %v1102 = vsel %vm447, %v1094, 0.0
        %1103 = vadd.xlane.f32.xlu0 %v1102
        %v1104 = vpop.xlane.xlu0 %1103
        %v1105 = vsel %vm447, %v1096, 0.0
        %1106 = vadd.xlane.f32.xlu0 %v1105
        %v1107 = vpop.xlane.xlu0 %1106
        %v1108 = vsel %vm447, %v1098, 0.0
        %1109 = vadd.xlane.f32.xlu0 %v1108
        %v1110 = vpop.xlane.xlu0 %1109
        %v1111 = vrcp.pop %v1101
        %v1112 = vrcp.pop %v1104
        %v1113 = vrcp.pop %v1107
        %v1114 = vrcp.pop %v1110
        %v1115 = vmul.f32 %v1092, %v1111
        %v1116 = vmul.f32 %v1094, %v1112
        %v1117 = vmul.f32 %v1096, %v1113
        %v1118 = vmul.f32 %v1098, %v1114
        %v1119 = vpack.c.bf16 %v1116, %v1115
        %v1120 = vpack.c.bf16 %v1118, %v1117
        %1121 = vrot.lane.b32.xlu0 %v571, 32
        %v1122 = vpop.permute.xlu0 %1121
        %1123 = vrot.lane.b32.xlu0 %v572, 32
        %v1124 = vpop.permute.xlu0 %1123
        %v1128 = vsel %vm447, %v1119, 0
        %v1131 = vsel %vm447, %v1120, 0
        %1133 = vmatprep.subr.bf16.mxu0 0
        %1134 = vmatpush1.bf16.msra.mxu0 %v1122
        %1135 = vmatprep.subr.bf16.mxu0 0
        %1136 = vmatpush1.bf16.msra.mxu0 %v1124
        %1137 = vmatprep.subr.bf16.mxu0 0
        %1138 = vmatpush1.bf16.msra.mxu0 0
        %1139 = vmatprep.subr.bf16.mxu0 0
        %1140 = vmatpush1.bf16.msra.mxu0 0
        %1141 = vmatprep.subr.bf16.mxu0 0
        %1142 = vmatpush1.bf16.msra.mxu0 0
        %1143 = vmatprep.subr.bf16.mxu0 0
        %1144 = vmatpush1.bf16.msra.mxu0 0
        %1145 = vmatprep.subr.bf16.mxu0 0
        %1146 = vmatpush1.bf16.msra.mxu0 0
        %1147 = vmatprep.subr.bf16.mxu0 0
        %1148 = vmatpush1.bf16.msra.mxu0 0
        %1149 = vmatprep.subr.bf16.mxu0 0
        %1150 = vmatpush1.bf16.msra.mxu0 0
        %1151 = vmatprep.subr.bf16.mxu0 0
        %1152 = vmatpush1.bf16.msra.mxu0 0
        %1153 = vmatprep.subr.bf16.mxu0 0
        %1154 = vmatpush1.bf16.msra.mxu0 0
        %1155 = vmatprep.subr.bf16.mxu0 0
        %1156 = vmatpush1.bf16.msra.mxu0 0
        %1157 = vmatprep.subr.bf16.mxu0 0
        %1158 = vmatpush1.bf16.msra.mxu0 0
        %1159 = vmatprep.subr.bf16.mxu0 0
        %1160 = vmatpush1.bf16.msra.mxu0 0
        %1161 = vmatprep.subr.bf16.mxu0 0
        %1162 = vmatpush1.bf16.msra.mxu0 0
        %1163 = vmatprep.subr.bf16.mxu0 0
        %1164 = vmatpush1.bf16.msra.mxu0 0
        %1165 = vmatprep.mubr.bf16.mxu0 0
        %1166 = vmatmul.mubr.bf16.gmra.mrb[0].mxu0 %v1128
        %v1167 = vpop.f32.mrb[0].mxu0
        %v1168 = vadd.f32 0.0, %v1167
        %v1169 = vpop.f32.mrb[0].mxu0
        %v1170 = vpop.f32.mrb[0].mxu0
        %v1171 = vadd.f32 0.0, %v1170
        %v1172 = vpop.f32.mrb[0].mxu0
        %1173 = vmatprep.mubr.bf16.mxu0 0
        %1174 = vmatmul.mubr.bf16.gmra.mrb[0].mxu0 %v1131
        %v1175 = vpop.f32.mrb[0].mxu0
        %v1176 = vadd.f32 0.0, %v1175
        %v1177 = vpop.f32.mrb[0].mxu0
        %v1178 = vpop.f32.mrb[0].mxu0
        %v1179 = vadd.f32 0.0, %v1178
        %v1180 = vpop.f32.mrb[0].mxu0
        %1181 = vdwg.mxu0
        %1186 = vrot.lane.b32.xlu0 %v800, 32
        %v1187 = vpop.permute.xlu0 %1186
        %1188 = vrot.lane.b32.xlu0 %v803, 32
        %v1189 = vpop.permute.xlu0 %1188
        %1190 = vrot.lane.b32.xlu0 %v808, 32
        %v1191 = vpop.permute.xlu0 %1190
        %1192 = vrot.lane.b32.xlu0 %v811, 32
        %v1193 = vpop.permute.xlu0 %1192
        %1202 = vrot.lane.b32.xlu0 %v984, 64
        %v1203 = vpop.permute.xlu0 %1202
        %1204 = vrot.lane.b32.xlu0 %v987, 64
        %v1205 = vpop.permute.xlu0 %1204
        %1206 = vrot.lane.b32.xlu0 %v992, 64
        %v1207 = vpop.permute.xlu0 %1206
        %1208 = vrot.lane.b32.xlu0 %v995, 64
        %v1209 = vpop.permute.xlu0 %1208
        %1218 = vrot.lane.b32.xlu0 %v1168, 96
        %v1219 = vpop.permute.xlu0 %1218
        %1220 = vrot.lane.b32.xlu0 %v1171, 96
        %v1221 = vpop.permute.xlu0 %1220
        %1222 = vrot.lane.b32.xlu0 %v1176, 96
        %v1223 = vpop.permute.xlu0 %1222
        %1224 = vrot.lane.b32.xlu0 %v1179, 96
        %v1225 = vpop.permute.xlu0 %1224
        %v1230 = vsel %vm447, %v616, %v1187
        %v1231 = vsel %vm447, %v619, %v1189
        %v1232 = vsel %vm447, %v624, %v1191
        %v1233 = vsel %vm447, %v627, %v1193
        %vm1234 = vcmask 523264
        %v1235 = vsel %vm1234, %v1230, %v1203
        %v1236 = vsel %vm1234, %v1231, %v1205
        %v1237 = vsel %vm1234, %v1232, %v1207
        %v1238 = vsel %vm1234, %v1233, %v1209
        %vm1239 = vcmask 785408
        %v1240 = vsel %vm1239, %v1235, %v1219
        %v1241 = vsel %vm1239, %v1236, %v1221
        %v1242 = vsel %vm1239, %v1237, %v1223
        %v1243 = vsel %vm1239, %v1238, %v1225
        %v1244 = vpack.c.bf16 %v1241, %v1240
        %v1245 = vpack.c.bf16 %v1243, %v1242
        %v1248 = vunpack.c.l.b16 %v1244
        %v1249 = vunpack.c.h.b16 %v1244
        %v1250 = vunpack.c.l.b16 %v1245
        %v1251 = vunpack.c.h.b16 %v1245
        %v1252 = vpack.c.b16 %v1248, %v1248
        %v1253 = vpack.c.b16 %v1249, %v1249
        %v1254 = vpack.c.b16 %v1250, %v1250
        %v1255 = vpack.c.b16 %v1251, %v1251
        %1260 = vst [vmem:[%s409] sm:$0xf] %v1252
        %1261 = vst [vmem:[%s409 + $0x4] sm:$0xf] %v1253
        %1262 = vst [vmem:[%s409 + $0x8] sm:$0xf] %v1254
        %1263 = vst [vmem:[%s409 + $0xc] sm:$0xf] %v1255
        %p1264 = scmp.lt.s32.totalorder %s18, 1
        %s1265 = scalar_select %p1264, %s18, 1
        %p1266 = scmp.lt.s32.totalorder %s19, 0
        %s1267 = scalar_select %p1266, %s19, 0
        %s1268 = smul.addr %s1265, 4
        %s1269 = sadd.s32 %s1267, %s1268
        %s1270 = smul.addr %s1269, 4
        %s1271 = scalar_lea.vmem %s3, %s1270
        // Predicated region
        $region156: #{image_encoder_forward.21} parent=142 // pred_check
          %p1272 = pneg %p134
        $region157: #{image_encoder_forward.21} parent=142 // pred_check_branch
          %1274 = sbr.rel (%p1272) target = $region159
        $region158: #{image_encoder_forward.21} parent=142 // pred_region
          _
        $region159: #{image_encoder_forward.21} parent=142 // pred_fallthru
          _
      $region143: #{image_encoder_forward.21} parent=5 // pred_fallthru
        _
      %p1275 = scmp.le.s32.totalorder 2, %s9
      // Predicated region
      $region160: #{image_encoder_forward.21} parent=5 // pred_check
        %p1276 = pneg %p1275
      $region161: #{image_encoder_forward.21} parent=5 // pred_check_branch
        %1278 = sbr.rel (%p1276) target = $region163
      $region162: #{image_encoder_forward.21} parent=5 // pred_region
        %s1279 = ssub.s32 %s9, 2
        // Predicated region
        $region164: #{image_encoder_forward.21} parent=162 // pred_check
          %p1280 = pneg %p140
        $region165: #{image_encoder_forward.21} parent=162 // pred_check_branch
          %1282 = sbr.rel (%p1280) target = $region167
        $region166: #{image_encoder_forward.21} parent=162 // pred_region
          %p1283 = scmp.lt.s32.totalorder %s20, 1
          %s1284 = scalar_select %p1283, %s20, 1
          %p1285 = scmp.lt.s32.totalorder %s21, 0
          %s1286 = scalar_select %p1285, %s21, 0
          %s1287 = smul.addr %s1284, 4
          %s1288 = sadd.s32 %s1286, %s1287
          %s1289 = smul.addr %s1288, 4
          %s1290 = scalar_lea.vmem %s3, %s1289
        $region167: #{image_encoder_forward.21} parent=162 // pred_fallthru
          _
      $region163: #{image_encoder_forward.21} parent=5 // pred_fallthru
        _
    $region6: #{image_encoder_forward.21} parent=1 // loop_footer
      %s13 = sadd.s32 1, %s9
    $region7: #{image_encoder_forward.21} parent=1 // loop_footer_branch
      %8 = sbr.rel target = $region3
    $region8: #{image_encoder_forward.21} parent=1 // loop_exit
      _

// kernel: image_encoder_forward.33
$region0: #{image_encoder_forward.33}
  #allocation0 [shape = 'u32[]', space=smem, size = 0x4, offset = 0x4, fixed_abs, tag = 'smem constant byte address 0x4 - core index']
  #allocation1 [shape = 'u32[144,128]{1,0:T(1,128)}', space=vmem, size = 0x12000, scoped, tag = 'internal scratch']
  %s0 = inlined_call_operand.vmem [shape: f32[32,128], index: 0, kind: input, shape index: {}]
  %s1 = inlined_call_operand.vmem [shape: f32[1,128], index: 1, kind: input, shape index: {}]
  %s2 = inlined_call_operand.vmem [shape: f32[1,128], index: 2, kind: input, shape index: {}]
  %s3 = inlined_call_operand.hbm [shape: f32[32,128], index: 3, kind: output, shape index: {}]
  %s4 = sld [smem:[#allocation0]]
  $region22: #{image_encoder_forward.33} parent=0
    _
  %s6 = ssub.s32 1, %s4
  %s7 = scalar_select 0, %s6, %s4
  $region1: #{image_encoder_forward.33} parent=0
    #allocation2 [shape = 'u8[16384]{0}', space=vmem, size = 0x4000, scoped, tag = 'output window, operand 0, single buffered']
    #allocation3 [shape = 's32[1]{0}', space=sflag, size = 0x4, scoped, tag = 'scoped memory for image_encoder_forward.33']
    %8 = vsyncpa [#allocation3], 0
    // Predicated region
    $region2: #{image_encoder_forward.33} parent=1 // pred_check
      _
    $region3: #{image_encoder_forward.33} parent=1 // pred_check_branch
      %10 = sbr.rel (0) target = $region5
    $region4: #{image_encoder_forward.33} parent=1 // pred_region
      _
    $region5: #{image_encoder_forward.33} parent=1 // pred_fallthru
      _
    // Predicated region
    $region6: #{image_encoder_forward.33} parent=1 // pred_check
      _
    $region7: #{image_encoder_forward.33} parent=1 // pred_check_branch
      %12 = sbr.rel (0) target = $region9
    $region8: #{image_encoder_forward.33} parent=1 // pred_region
      _
    $region9: #{image_encoder_forward.33} parent=1 // pred_fallthru
      _
    // Predicated region
    $region10: #{image_encoder_forward.33} parent=1 // pred_check
      _
    $region11: #{image_encoder_forward.33} parent=1 // pred_check_branch
      %14 = sbr.rel (0) target = $region13
    $region12: #{image_encoder_forward.33} parent=1 // pred_region
      _
    $region13: #{image_encoder_forward.33} parent=1 // pred_fallthru
      _
    %v15 = vld [vmem:[%s0] sm:$0xff]
    %v16 = vld [vmem:[%s0 + $0x8] sm:$0xff]
    %v17 = vld [vmem:[%s0 + $0x10] sm:$0xff]
    %v18 = vld [vmem:[%s0 + $0x18] sm:$0xff]
    %19 = vadd.xlane.f32.xlu0 %v15
    %v20 = vpop.xlane.xlu0 %19
    %21 = vadd.xlane.f32.xlu0 %v16
    %v22 = vpop.xlane.xlu0 %21
    %23 = vadd.xlane.f32.xlu0 %v17
    %v24 = vpop.xlane.xlu0 %23
    %25 = vadd.xlane.f32.xlu0 %v18
    %v26 = vpop.xlane.xlu0 %25
    %v27 = vrcp.pop 128.0
    %v28 = vmul.f32 %v20, %v27
    %v29 = vmul.f32 %v22, %v27
    %v30 = vmul.f32 %v24, %v27
    %v31 = vmul.f32 %v26, %v27
    %v32 = vsub.f32 %v15, %v28
    %v33 = vsub.f32 %v16, %v29
    %v34 = vsub.f32 %v17, %v30
    %v35 = vsub.f32 %v18, %v31
    %v36 = vmul.f32 %v32, %v32
    %v37 = vmul.f32 %v33, %v33
    %v38 = vmul.f32 %v34, %v34
    %v39 = vmul.f32 %v35, %v35
    %40 = vadd.xlane.f32.xlu0 %v36
    %v41 = vpop.xlane.xlu0 %40
    %42 = vadd.xlane.f32.xlu0 %v37
    %v43 = vpop.xlane.xlu0 %42
    %44 = vadd.xlane.f32.xlu0 %v38
    %v45 = vpop.xlane.xlu0 %44
    %46 = vadd.xlane.f32.xlu0 %v39
    %v47 = vpop.xlane.xlu0 %46
    %v48 = vmul.f32 %v41, %v27
    %v49 = vmul.f32 %v43, %v27
    %v50 = vmul.f32 %v45, %v27
    %v51 = vmul.f32 %v47, %v27
    %v52 = vadd.f32 %v48, 1e-05
    %v53 = vadd.f32 %v49, 1e-05
    %v54 = vadd.f32 %v50, 1e-05
    %v55 = vadd.f32 %v51, 1e-05
    %v56 = vrsqrt.pop %v52
    %v57 = vrsqrt.pop %v53
    %v58 = vrsqrt.pop %v54
    %v59 = vrsqrt.pop %v55
    %v60 = vmul.f32 %v32, %v56
    %v61 = vmul.f32 %v33, %v57
    %v62 = vmul.f32 %v34, %v58
    %v63 = vmul.f32 %v35, %v59
    %v64 = vld [vmem:[%s1] sm:$0x1]
    %v66 = vlaneseq
    %v67 = vshrl.u32 %v66, 7
    %v68 = vsub.s32 0, %v67
    %v69 = vrot.slane %v64, %v68
    %v71 = vmul.f32 %v60, %v69
    %v72 = vmul.f32 %v61, %v69
    %v73 = vmul.f32 %v62, %v69
    %v74 = vmul.f32 %v63, %v69
    %v75 = vld [vmem:[%s2] sm:$0x1]
    %v77 = vlaneseq
    %v78 = vshrl.u32 %v77, 7
    %v79 = vsub.s32 0, %v78
    %v80 = vrot.slane %v75, %v79
    %v82 = vadd.f32 %v71, %v80
    %v83 = vadd.f32 %v72, %v80
    %v84 = vadd.f32 %v73, %v80
    %v85 = vadd.f32 %v74, %v80
    %86 = vst [vmem:[#allocation2] sm:$0xff] %v82
    %87 = vst [vmem:[#allocation2 + $0x8] sm:$0xff] %v83
    %88 = vst [vmem:[#allocation2 + $0x10] sm:$0xff] %v84
    %89 = vst [vmem:[#allocation2 + $0x18] sm:$0xff] %v85
    // Predicated region
    $region14: #{image_encoder_forward.33} parent=1 // pred_check
      _
    $region15: #{image_encoder_forward.33} parent=1 // pred_check_branch
      %91 = sbr.rel (0) target = $region17
    $region16: #{image_encoder_forward.33} parent=1 // pred_region
      %s93 = ssub.s32 512, 512
      %94 = vsyncadd [#allocation3], %s93
      %s95 = sshll.u32 [#allocation2], 4
      %s96 = int_to_ptr.vmem [resolvable:$true] %s95
      %101 = dma.vmem_to_hbm [thread:$0]  %s96, 512, %s3, [#allocation3], 128, 128, 8
    $region17: #{image_encoder_forward.33} parent=1 // pred_fallthru
      _
    // Predicated region
    $region18: #{image_encoder_forward.33} parent=1 // pred_check
      _
    $region19: #{image_encoder_forward.33} parent=1 // pred_check_branch
      %103 = sbr.rel (0) target = $region21
    $region20: #{image_encoder_forward.33} parent=1 // pred_region
      %104 = dma.done [#allocation3], 512
    $region21: #{image_encoder_forward.33} parent=1 // pred_fallthru
      _
    %105 = vsyncpa [#allocation3], 1

// kernel: image_encoder_forward.24
$region0: #{image_encoder_forward.24}
  #allocation0 [shape = 'u32[]', space=smem, size = 0x4, offset = 0x4, fixed_abs, tag = 'smem constant byte address 0x4 - core index']
  #allocation1 [shape = 'u32[144,128]{1,0:T(1,128)}', space=vmem, size = 0x12000, scoped, tag = 'internal scratch']
  %s0 = inlined_call_operand.vmem [shape: bf16[64,128], index: 0, kind: input, shape index: {}]
  %s1 = inlined_call_operand.vmem [shape: bf16[128,512], index: 1, kind: input, shape index: {}]
  %s2 = inlined_call_operand.vmem [shape: f32[1,512], index: 2, kind: input, shape index: {}]
  %s3 = inlined_call_operand.vmem [shape: bf16[64,512], index: 3, kind: output, shape index: {}]
  %s4 = sld [smem:[#allocation0]]
  $region22: #{image_encoder_forward.24} parent=0
    _
  %s6 = ssub.s32 1, %s4
  %s7 = scalar_select 0, %s6, %s4
  // Predicated region
  $region2: #{image_encoder_forward.24} parent=0 // pred_check
    _
  $region3: #{image_encoder_forward.24} parent=0 // pred_check_branch
    %9 = sbr.rel (0) target = $region5
  $region4: #{image_encoder_forward.24} parent=0 // pred_region
    _
  $region5: #{image_encoder_forward.24} parent=0 // pred_fallthru
    _
  // Predicated region
  $region6: #{image_encoder_forward.24} parent=0 // pred_check
    _
  $region7: #{image_encoder_forward.24} parent=0 // pred_check_branch
    %11 = sbr.rel (0) target = $region9
  $region8: #{image_encoder_forward.24} parent=0 // pred_region
    _
  $region9: #{image_encoder_forward.24} parent=0 // pred_fallthru
    _
  // Predicated region
  $region10: #{image_encoder_forward.24} parent=0 // pred_check
    _
  $region11: #{image_encoder_forward.24} parent=0 // pred_check_branch
    %13 = sbr.rel (0) target = $region13
  $region12: #{image_encoder_forward.24} parent=0 // pred_region
    _
  $region13: #{image_encoder_forward.24} parent=0 // pred_fallthru
    _
  %v15 = vld [vmem:[%s0] sm:$0xf]
  %v16 = vld [vmem:[%s0 + $0x4] sm:$0xf]
  %v17 = vld [vmem:[%s0 + $0x8] sm:$0xf]
  %v18 = vld [vmem:[%s0 + $0xc] sm:$0xf]
  %v19 = vld [vmem:[%s0 + $0x10] sm:$0xf]
  %v20 = vld [vmem:[%s0 + $0x14] sm:$0xf]
  %v21 = vld [vmem:[%s0 + $0x18] sm:$0xf]
  %v22 = vld [vmem:[%s0 + $0x1c] sm:$0xf]
  %v23 = vld [vmem:[%s1] sm:$0xff]
  %v24 = vld [vmem:[%s1 + $0x8] sm:$0xff]
  %v25 = vld [vmem:[%s1 + $0x10] sm:$0xff]
  %v26 = vld [vmem:[%s1 + $0x18] sm:$0xff]
  %v27 = vld [vmem:[%s1 + $0x20] sm:$0xff]
  %v28 = vld [vmem:[%s1 + $0x28] sm:$0xff]
  %v29 = vld [vmem:[%s1 + $0x30] sm:$0xff]
  %v30 = vld [vmem:[%s1 + $0x38] sm:$0xff]
  %v31 = vld [vmem:[%s1 + $0x40] sm:$0xff]
  %v32 = vld [vmem:[%s1 + $0x48] sm:$0xff]
  %v33 = vld [vmem:[%s1 + $0x50] sm:$0xff]
  %v34 = vld [vmem:[%s1 + $0x58] sm:$0xff]
  %v35 = vld [vmem:[%s1 + $0x60] sm:$0xff]
  %v36 = vld [vmem:[%s1 + $0x68] sm:$0xff]
  %v37 = vld [vmem:[%s1 + $0x70] sm:$0xff]
  %v38 = vld [vmem:[%s1 + $0x78] sm:$0xff]
  %v39 = vld [vmem:[%s1 + $0x80] sm:$0xff]
  %v40 = vld [vmem:[%s1 + $0x88] sm:$0xff]
  %v41 = vld [vmem:[%s1 + $0x90] sm:$0xff]
  %v42 = vld [vmem:[%s1 + $0x98] sm:$0xff]
  %v43 = vld [vmem:[%s1 + $0xa0] sm:$0xff]
  %v44 = vld [vmem:[%s1 + $0xa8] sm:$0xff]
  %v45 = vld [vmem:[%s1 + $0xb0] sm:$0xff]
  %v46 = vld [vmem:[%s1 + $0xb8] sm:$0xff]
  %v47 = vld [vmem:[%s1 + $0xc0] sm:$0xff]
  %v48 = vld [vmem:[%s1 + $0xc8] sm:$0xff]
  %v49 = vld [vmem:[%s1 + $0xd0] sm:$0xff]
  %v50 = vld [vmem:[%s1 + $0xd8] sm:$0xff]
  %v51 = vld [vmem:[%s1 + $0xe0] sm:$0xff]
  %v52 = vld [vmem:[%s1 + $0xe8] sm:$0xff]
  %v53 = vld [vmem:[%s1 + $0xf0] sm:$0xff]
  %v54 = vld [vmem:[%s1 + $0xf8] sm:$0xff]
  %v55 = vld [vmem:[%s2] sm:$0xf]
  %v57 = vlaneseq
  %v58 = vshrl.u32 %v57, 7
  %v59 = vsub.s32 0, %v58
  %v60 = vrot.slane %v55, %v59
  %v61 = vlaneseq
  %v62 = vshrl.u32 %v61, 7
  %v63 = vsub.s32 1, %v62
  %v64 = vrot.slane %v55, %v63
  %v65 = vlaneseq
  %v66 = vshrl.u32 %v65, 7
  %v67 = vsub.s32 2, %v66
  %v68 = vrot.slane %v55, %v67
  %v69 = vlaneseq
  %v70 = vshrl.u32 %v69, 7
  %v71 = vsub.s32 3, %v70
  %v72 = vrot.slane %v55, %v71
  %v85 = vunpack.c.l.b16 %v15
  %v86 = vunpack.c.l.b16 %v16
  %v87 = vunpack.c.l.b16 %v17
  %v88 = vunpack.c.l.b16 %v18
  %v89 = vunpack.c.l.b16 %v19
  %v90 = vunpack.c.l.b16 %v20
  %v91 = vunpack.c.l.b16 %v21
  %v92 = vunpack.c.l.b16 %v22
  %v93 = vpack.c.b16 %v86, %v85
  %v94 = vpack.c.b16 %v88, %v87
  %v95 = vpack.c.b16 %v90, %v89
  %v96 = vpack.c.b16 %v92, %v91
  %v133 = vunpack.c.l.b16 %v23
  %v134 = vunpack.c.h.b16 %v23
  %v135 = vunpack.c.l.b16 %v24
  %v136 = vunpack.c.h.b16 %v24
  %v137 = vunpack.c.l.b16 %v25
  %v138 = vunpack.c.h.b16 %v25
  %v139 = vunpack.c.l.b16 %v26
  %v140 = vunpack.c.h.b16 %v26
  %v141 = vunpack.c.l.b16 %v27
  %v142 = vunpack.c.h.b16 %v27
  %v143 = vunpack.c.l.b16 %v28
  %v144 = vunpack.c.h.b16 %v28
  %v145 = vunpack.c.l.b16 %v29
  %v146 = vunpack.c.h.b16 %v29
  %v147 = vunpack.c.l.b16 %v30
  %v148 = vunpack.c.h.b16 %v30
  %v149 = vunpack.c.l.b16 %v31
  %v150 = vunpack.c.h.b16 %v31
  %v151 = vunpack.c.l.b16 %v32
  %v152 = vunpack.c.h.b16 %v32
  %v153 = vunpack.c.l.b16 %v33
  %v154 = vunpack.c.h.b16 %v33
  %v155 = vunpack.c.l.b16 %v34
  %v156 = vunpack.c.h.b16 %v34
  %v157 = vunpack.c.l.b16 %v35
  %v158 = vunpack.c.h.b16 %v35
  %v159 = vunpack.c.l.b16 %v36
  %v160 = vunpack.c.h.b16 %v36
  %v161 = vunpack.c.l.b16 %v37
  %v162 = vunpack.c.h.b16 %v37
  %v163 = vunpack.c.l.b16 %v38
  %v164 = vunpack.c.h.b16 %v38
  %v165 = vunpack.c.l.b16 %v39
  %v166 = vunpack.c.h.b16 %v39
  %v167 = vunpack.c.l.b16 %v40
  %v168 = vunpack.c.h.b16 %v40
  %v169 = vunpack.c.l.b16 %v41
  %v170 = vunpack.c.h.b16 %v41
  %v171 = vunpack.c.l.b16 %v42
  %v172 = vunpack.c.h.b16 %v42
  %v173 = vunpack.c.l.b16 %v43
  %v174 = vunpack.c.h.b16 %v43
  %v175 = vunpack.c.l.b16 %v44
  %v176 = vunpack.c.h.b16 %v44
  %v177 = vunpack.c.l.b16 %v45
  %v178 = vunpack.c.h.b16 %v45
  %v179 = vunpack.c.l.b16 %v46
  %v180 = vunpack.c.h.b16 %v46
  %v181 = vunpack.c.l.b16 %v47
  %v182 = vunpack.c.h.b16 %v47
  %v183 = vunpack.c.l.b16 %v48
  %v184 = vunpack.c.h.b16 %v48
  %v185 = vunpack.c.l.b16 %v49
  %v186 = vunpack.c.h.b16 %v49
  %v187 = vunpack.c.l.b16 %v50
  %v188 = vunpack.c.h.b16 %v50
  %v189 = vunpack.c.l.b16 %v51
  %v190 = vunpack.c.h.b16 %v51
  %v191 = vunpack.c.l.b16 %v52
  %v192 = vunpack.c.h.b16 %v52
  %v193 = vunpack.c.l.b16 %v53
  %v194 = vunpack.c.h.b16 %v53
  %v195 = vunpack.c.l.b16 %v54
  %v196 = vunpack.c.h.b16 %v54
  %v197 = vpack.c.b16 %v137, %v133
  %v198 = vpack.c.b16 %v138, %v134
  %v199 = vpack.c.b16 %v139, %v135
  %v200 = vpack.c.b16 %v140, %v136
  %v201 = vpack.c.b16 %v145, %v141
  %v202 = vpack.c.b16 %v146, %v142
  %v203 = vpack.c.b16 %v147, %v143
  %v204 = vpack.c.b16 %v148, %v144
  %v205 = vpack.c.b16 %v153, %v149
  %v206 = vpack.c.b16 %v154, %v150
  %v207 = vpack.c.b16 %v155, %v151
  %v208 = vpack.c.b16 %v156, %v152
  %v209 = vpack.c.b16 %v161, %v157
  %v210 = vpack.c.b16 %v162, %v158
  %v211 = vpack.c.b16 %v163, %v159
  %v212 = vpack.c.b16 %v164, %v160
  %v213 = vpack.c.b16 %v169, %v165
  %v214 = vpack.c.b16 %v170, %v166
  %v215 = vpack.c.b16 %v171, %v167
  %v216 = vpack.c.b16 %v172, %v168
  %v217 = vpack.c.b16 %v177, %v173
  %v218 = vpack.c.b16 %v178, %v174
  %v219 = vpack.c.b16 %v179, %v175
  %v220 = vpack.c.b16 %v180, %v176
  %v221 = vpack.c.b16 %v185, %v181
  %v222 = vpack.c.b16 %v186, %v182
  %v223 = vpack.c.b16 %v187, %v183
  %v224 = vpack.c.b16 %v188, %v184
  %v225 = vpack.c.b16 %v193, %v189
  %v226 = vpack.c.b16 %v194, %v190
  %v227 = vpack.c.b16 %v195, %v191
  %v228 = vpack.c.b16 %v196, %v192
  %261 = vmatprep.subr.bf16.mxu0 %v198
  %262 = vmatpush1.bf16.msra.mxu0 %v197
  %263 = vmatprep.subr.bf16.mxu0 %v202
  %264 = vmatpush1.bf16.msra.mxu0 %v201
  %265 = vmatprep.subr.bf16.mxu0 %v206
  %266 = vmatpush1.bf16.msra.mxu0 %v205
  %267 = vmatprep.subr.bf16.mxu0 %v210
  %268 = vmatpush1.bf16.msra.mxu0 %v209
  %269 = vmatprep.subr.bf16.mxu0 %v214
  %270 = vmatpush1.bf16.msra.mxu0 %v213
  %271 = vmatprep.subr.bf16.mxu0 %v218
  %272 = vmatpush1.bf16.msra.mxu0 %v217
  %273 = vmatprep.subr.bf16.mxu0 %v222
  %274 = vmatpush1.bf16.msra.mxu0 %v221
  %275 = vmatprep.subr.bf16.mxu0 %v226
  %276 = vmatpush1.bf16.msra.mxu0 %v225
  %277 = vmatprep.subr.bf16.mxu0 0
  %278 = vmatpush1.bf16.msra.mxu0 0
  %279 = vmatprep.subr.bf16.mxu0 0
  %280 = vmatpush1.bf16.msra.mxu0 0
  %281 = vmatprep.subr.bf16.mxu0 0
  %282 = vmatpush1.bf16.msra.mxu0 0
  %283 = vmatprep.subr.bf16.mxu0 0
  %284 = vmatpush1.bf16.msra.mxu0 0
  %285 = vmatprep.subr.bf16.mxu0 0
  %286 = vmatpush1.bf16.msra.mxu0 0
  %287 = vmatprep.subr.bf16.mxu0 0
  %288 = vmatpush1.bf16.msra.mxu0 0
  %289 = vmatprep.subr.bf16.mxu0 0
  %290 = vmatpush1.bf16.msra.mxu0 0
  %291 = vmatprep.subr.bf16.mxu0 0
  %292 = vmatpush1.bf16.msra.mxu0 0
  %293 = vmatprep.mubr.bf16.mxu0 0
  %294 = vmatmul.mubr.bf16.gmra.mrb[0].mxu0 %v93
  %v295 = vpop.f32.mrb[0].mxu0
  %v296 = vadd.f32 %v60, %v295
  %v297 = vpop.f32.mrb[0].mxu0
  %v298 = vadd.f32 %v64, %v297
  %v299 = vpop.f32.mrb[0].mxu0
  %v300 = vadd.f32 %v60, %v299
  %v301 = vpop.f32.mrb[0].mxu0
  %v302 = vadd.f32 %v64, %v301
  %303 = vmatprep.mubr.bf16.mxu0 0
  %304 = vmatmul.mubr.bf16.gmra.mrb[0].mxu0 %v94
  %v305 = vpop.f32.mrb[0].mxu0
  %v306 = vadd.f32 %v60, %v305
  %v307 = vpop.f32.mrb[0].mxu0
  %v308 = vadd.f32 %v64, %v307
  %v309 = vpop.f32.mrb[0].mxu0
  %v310 = vadd.f32 %v60, %v309
  %v311 = vpop.f32.mrb[0].mxu0
  %v312 = vadd.f32 %v64, %v311
  %313 = vmatprep.mubr.bf16.mxu0 0
  %314 = vmatmul.mubr.bf16.gmra.mrb[0].mxu0 %v95
  %v315 = vpop.f32.mrb[0].mxu0
  %v316 = vadd.f32 %v60, %v315
  %v317 = vpop.f32.mrb[0].mxu0
  %v318 = vadd.f32 %v64, %v317
  %v319 = vpop.f32.mrb[0].mxu0
  %v320 = vadd.f32 %v60, %v319
  %v321 = vpop.f32.mrb[0].mxu0
  %v322 = vadd.f32 %v64, %v321
  %323 = vmatprep.mubr.bf16.mxu0 0
  %324 = vmatmul.mubr.bf16.gmra.mrb[0].mxu0 %v96
  %v325 = vpop.f32.mrb[0].mxu0
  %v326 = vadd.f32 %v60, %v325
  %v327 = vpop.f32.mrb[0].mxu0
  %v328 = vadd.f32 %v64, %v327
  %v329 = vpop.f32.mrb[0].mxu0
  %v330 = vadd.f32 %v60, %v329
  %v331 = vpop.f32.mrb[0].mxu0
  %v332 = vadd.f32 %v64, %v331
  %333 = vdwg.mxu0
  %334 = vmatprep.subr.bf16.mxu0 %v200
  %335 = vmatpush1.bf16.msra.mxu0 %v199
  %336 = vmatprep.subr.bf16.mxu0 %v204
  %337 = vmatpush1.bf16.msra.mxu0 %v203
  %338 = vmatprep.subr.bf16.mxu0 %v208
  %339 = vmatpush1.bf16.msra.mxu0 %v207
  %340 = vmatprep.subr.bf16.mxu0 %v212
  %341 = vmatpush1.bf16.msra.mxu0 %v211
  %342 = vmatprep.subr.bf16.mxu0 %v216
  %343 = vmatpush1.bf16.msra.mxu0 %v215
  %344 = vmatprep.subr.bf16.mxu0 %v220
  %345 = vmatpush1.bf16.msra.mxu0 %v219
  %346 = vmatprep.subr.bf16.mxu0 %v224
  %347 = vmatpush1.bf16.msra.mxu0 %v223
  %348 = vmatprep.subr.bf16.mxu0 %v228
  %349 = vmatpush1.bf16.msra.mxu0 %v227
  %350 = vmatprep.subr.bf16.mxu0 0
  %351 = vmatpush1.bf16.msra.mxu0 0
  %352 = vmatprep.subr.bf16.mxu0 0
  %353 = vmatpush1.bf16.msra.mxu0 0
  %354 = vmatprep.subr.bf16.mxu0 0
  %355 = vmatpush1.bf16.msra.mxu0 0
  %356 = vmatprep.subr.bf16.mxu0 0
  %357 = vmatpush1.bf16.msra.mxu0 0
  %358 = vmatprep.subr.bf16.mxu0 0
  %359 = vmatpush1.bf16.msra.mxu0 0
  %360 = vmatprep.subr.bf16.mxu0 0
  %361 = vmatpush1.bf16.msra.mxu0 0
  %362 = vmatprep.subr.bf16.mxu0 0
  %363 = vmatpush1.bf16.msra.mxu0 0
  %364 = vmatprep.subr.bf16.mxu0 0
  %365 = vmatpush1.bf16.msra.mxu0 0
  %366 = vmatprep.mubr.bf16.mxu0 0
  %367 = vmatmul.mubr.bf16.gmra.mrb[0].mxu0 %v93
  %v368 = vpop.f32.mrb[0].mxu0
  %v369 = vadd.f32 %v68, %v368
  %v370 = vpop.f32.mrb[0].mxu0
  %v371 = vadd.f32 %v72, %v370
  %v372 = vpop.f32.mrb[0].mxu0
  %v373 = vadd.f32 %v68, %v372
  %v374 = vpop.f32.mrb[0].mxu0
  %v375 = vadd.f32 %v72, %v374
  %376 = vmatprep.mubr.bf16.mxu0 0
  %377 = vmatmul.mubr.bf16.gmra.mrb[0].mxu0 %v94
  %v378 = vpop.f32.mrb[0].mxu0
  %v379 = vadd.f32 %v68, %v378
  %v380 = vpop.f32.mrb[0].mxu0
  %v381 = vadd.f32 %v72, %v380
  %v382 = vpop.f32.mrb[0].mxu0
  %v383 = vadd.f32 %v68, %v382
  %v384 = vpop.f32.mrb[0].mxu0
  %v385 = vadd.f32 %v72, %v384
  %386 = vmatprep.mubr.bf16.mxu0 0
  %387 = vmatmul.mubr.bf16.gmra.mrb[0].mxu0 %v95
  %v388 = vpop.f32.mrb[0].mxu0
  %v389 = vadd.f32 %v68, %v388
  %v390 = vpop.f32.mrb[0].mxu0
  %v391 = vadd.f32 %v72, %v390
  %v392 = vpop.f32.mrb[0].mxu0
  %v393 = vadd.f32 %v68, %v392
  %v394 = vpop.f32.mrb[0].mxu0
  %v395 = vadd.f32 %v72, %v394
  %396 = vmatprep.mubr.bf16.mxu0 0
  %397 = vmatmul.mubr.bf16.gmra.mrb[0].mxu0 %v96
  %v398 = vpop.f32.mrb[0].mxu0
  %v399 = vadd.f32 %v68, %v398
  %v400 = vpop.f32.mrb[0].mxu0
  %v401 = vadd.f32 %v72, %v400
  %v402 = vpop.f32.mrb[0].mxu0
  %v403 = vadd.f32 %v68, %v402
  %v404 = vpop.f32.mrb[0].mxu0
  %v405 = vadd.f32 %v72, %v404
  %406 = vdwg.mxu0
  %v407 = vmul.f32 %v296, 1.702
  %v408 = vmul.f32 %v298, 1.702
  %v409 = vmul.f32 %v369, 1.702
  %v410 = vmul.f32 %v371, 1.702
  %v411 = vmul.f32 %v300, 1.702
  %v412 = vmul.f32 %v302, 1.702
  %v413 = vmul.f32 %v373, 1.702
  %v414 = vmul.f32 %v375, 1.702
  %v415 = vmul.f32 %v306, 1.702
  %v416 = vmul.f32 %v308, 1.702
  %v417 = vmul.f32 %v379, 1.702
  %v418 = vmul.f32 %v381, 1.702
  %v419 = vmul.f32 %v310, 1.702
  %v420 = vmul.f32 %v312, 1.702
  %v421 = vmul.f32 %v383, 1.702
  %v422 = vmul.f32 %v385, 1.702
  %v423 = vmul.f32 %v316, 1.702
  %v424 = vmul.f32 %v318, 1.702
  %v425 = vmul.f32 %v389, 1.702
  %v426 = vmul.f32 %v391, 1.702
  %v427 = vmul.f32 %v320, 1.702
  %v428 = vmul.f32 %v322, 1.702
  %v429 = vmul.f32 %v393, 1.702
  %v430 = vmul.f32 %v395, 1.702
  %v431 = vmul.f32 %v326, 1.702
  %v432 = vmul.f32 %v328, 1.702
  %v433 = vmul.f32 %v399, 1.702
  %v434 = vmul.f32 %v401, 1.702
  %v435 = vmul.f32 %v330, 1.702
  %v436 = vmul.f32 %v332, 1.702
  %v437 = vmul.f32 %v403, 1.702
  %v438 = vmul.f32 %v405, 1.702
  %v439 = vxor.u32 %v407, 2147483648
  %v440 = vxor.u32 %v408, 2147483648
  %v441 = vxor.u32 %v409, 2147483648
  %v442 = vxor.u32 %v410, 2147483648
  %v443 = vxor.u32 %v411, 2147483648
  %v444 = vxor.u32 %v412, 2147483648
  %v445 = vxor.u32 %v413, 2147483648
  %v446 = vxor.u32 %v414, 2147483648
  %v447 = vxor.u32 %v415, 2147483648
  %v448 = vxor.u32 %v416, 2147483648
  %v449 = vxor.u32 %v417, 2147483648
  %v450 = vxor.u32 %v418, 2147483648
  %v451 = vxor.u32 %v419, 2147483648
  %v452 = vxor.u32 %v420, 2147483648
  %v453 = vxor.u32 %v421, 2147483648
  %v454 = vxor.u32 %v422, 2147483648
  %v455 = vxor.u32 %v423, 2147483648
  %v456 = vxor.u32 %v424, 2147483648
  %v457 = vxor.u32 %v425, 2147483648
  %v458 = vxor.u32 %v426, 2147483648
  %v459 = vxor.u32 %v427, 2147483648
  %v460 = vxor.u32 %v428, 2147483648
  %v461 = vxor.u32 %v429, 2147483648
  %v462 = vxor.u32 %v430, 2147483648
  %v463 = vxor.u32 %v431, 2147483648
  %v464 = vxor.u32 %v432, 2147483648
  %v465 = vxor.u32 %v433, 2147483648
  %v466 = vxor.u32 %v434, 2147483648
  %v467 = vxor.u32 %v435, 2147483648
  %v468 = vxor.u32 %v436, 2147483648
  %v469 = vxor.u32 %v437, 2147483648
  %v470 = vxor.u32 %v438, 2147483648
  %v471 = vmul.f32 %v439, 1.442695
  %v472 = vpow.pop %v471
  %v473 = vmul.f32 %v440, 1.442695
  %v474 = vpow.pop %v473
  %v475 = vmul.f32 %v441, 1.442695
  %v476 = vpow.pop %v475
  %v477 = vmul.f32 %v442, 1.442695
  %v478 = vpow.pop %v477
  %v479 = vmul.f32 %v443, 1.442695
  %v480 = vpow.pop %v479
  %v481 = vmul.f32 %v444, 1.442695
  %v482 = vpow.pop %v481
  %v483 = vmul.f32 %v445, 1.442695
  %v484 = vpow.pop %v483
  %v485 = vmul.f32 %v446, 1.442695
  %v486 = vpow.pop %v485
  %v487 = vmul.f32 %v447, 1.442695
  %v488 = vpow.pop %v487
  %v489 = vmul.f32 %v448, 1.442695
  %v490 = vpow.pop %v489
  %v491 = vmul.f32 %v449, 1.442695
  %v492 = vpow.pop %v491
  %v493 = vmul.f32 %v450, 1.442695
  %v494 = vpow.pop %v493
  %v495 = vmul.f32 %v451, 1.442695
  %v496 = vpow.pop %v495
  %v497 = vmul.f32 %v452, 1.442695
  %v498 = vpow.pop %v497
  %v499 = vmul.f32 %v453, 1.442695
  %v500 = vpow.pop %v499
  %v501 = vmul.f32 %v454, 1.442695
  %v502 = vpow.pop %v501
  %v503 = vmul.f32 %v455, 1.442695
  %v504 = vpow.pop %v503
  %v505 = vmul.f32 %v456, 1.442695
  %v506 = vpow.pop %v505
  %v507 = vmul.f32 %v457, 1.442695
  %v508 = vpow.pop %v507
  %v509 = vmul.f32 %v458, 1.442695
  %v510 = vpow.pop %v509
  %v511 = vmul.f32 %v459, 1.442695
  %v512 = vpow.pop %v511
  %v513 = vmul.f32 %v460, 1.442695
  %v514 = vpow.pop %v513
  %v515 = vmul.f32 %v461, 1.442695
  %v516 = vpow.pop %v515
  %v517 = vmul.f32 %v462, 1.442695
  %v518 = vpow.pop %v517
  %v519 = vmul.f32 %v463, 1.442695
  %v520 = vpow.pop %v519
  %v521 = vmul.f32 %v464, 1.442695
  %v522 = vpow.pop %v521
  %v523 = vmul.f32 %v465, 1.442695
  %v524 = vpow.pop %v523
  %v525 = vmul.f32 %v466, 1.442695
  %v526 = vpow.pop %v525
  %v527 = vmul.f32 %v467, 1.442695
  %v528 = vpow.pop %v527
  %v529 = vmul.f32 %v468, 1.442695
  %v530 = vpow.pop %v529
  %v531 = vmul.f32 %v469, 1.442695
  %v532 = vpow.pop %v531
  %v533 = vmul.f32 %v470, 1.442695
  %v534 = vpow.pop %v533
  %v535 = vadd.f32 %v472, 1.0
  %v536 = vadd.f32 %v474, 1.0
  %v537 = vadd.f32 %v476, 1.0
  %v538 = vadd.f32 %v478, 1.0
  %v539 = vadd.f32 %v480, 1.0
  %v540 = vadd.f32 %v482, 1.0
  %v541 = vadd.f32 %v484, 1.0
  %v542 = vadd.f32 %v486, 1.0
  %v543 = vadd.f32 %v488, 1.0
  %v544 = vadd.f32 %v490, 1.0
  %v545 = vadd.f32 %v492, 1.0
  %v546 = vadd.f32 %v494, 1.0
  %v547 = vadd.f32 %v496, 1.0
  %v548 = vadd.f32 %v498, 1.0
  %v549 = vadd.f32 %v500, 1.0
  %v550 = vadd.f32 %v502, 1.0
  %v551 = vadd.f32 %v504, 1.0
  %v552 = vadd.f32 %v506, 1.0
  %v553 = vadd.f32 %v508, 1.0
  %v554 = vadd.f32 %v510, 1.0
  %v555 = vadd.f32 %v512, 1.0
  %v556 = vadd.f32 %v514, 1.0
  %v557 = vadd.f32 %v516, 1.0
  %v558 = vadd.f32 %v518, 1.0
  %v559 = vadd.f32 %v520, 1.0
  %v560 = vadd.f32 %v522, 1.0
  %v561 = vadd.f32 %v524, 1.0
  %v562 = vadd.f32 %v526, 1.0
  %v563 = vadd.f32 %v528, 1.0
  %v564 = vadd.f32 %v530, 1.0
  %v565 = vadd.f32 %v532, 1.0
  %v566 = vadd.f32 %v534, 1.0
  %v567 = vrcp.pop %v535
  %v568 = vmul.f32 1.0, %v567
  %v569 = vrcp.pop %v536
  %v570 = vmul.f32 1.0, %v569
  %v571 = vrcp.pop %v537
  %v572 = vmul.f32 1.0, %v571
  %v573 = vrcp.pop %v538
  %v574 = vmul.f32 1.0, %v573
  %v575 = vrcp.pop %v539
  %v576 = vmul.f32 1.0, %v575
  %v577 = vrcp.pop %v540
  %v578 = vmul.f32 1.0, %v577
  %v579 = vrcp.pop %v541
  %v580 = vmul.f32 1.0, %v579
  %v581 = vrcp.pop %v542
  %v582 = vmul.f32 1.0, %v581
  %v583 = vrcp.pop %v543
  %v584 = vmul.f32 1.0, %v583
  %v585 = vrcp.pop %v544
  %v586 = vmul.f32 1.0, %v585
  %v587 = vrcp.pop %v545
  %v588 = vmul.f32 1.0, %v587
  %v589 = vrcp.pop %v546
  %v590 = vmul.f32 1.0, %v589
  %v591 = vrcp.pop %v547
  %v592 = vmul.f32 1.0, %v591
  %v593 = vrcp.pop %v548
  %v594 = vmul.f32 1.0, %v593
  %v595 = vrcp.pop %v549
  %v596 = vmul.f32 1.0, %v595
  %v597 = vrcp.pop %v550
  %v598 = vmul.f32 1.0, %v597
  %v599 = vrcp.pop %v551
  %v600 = vmul.f32 1.0, %v599
  %v601 = vrcp.pop %v552
  %v602 = vmul.f32 1.0, %v601
  %v603 = vrcp.pop %v553
  %v604 = vmul.f32 1.0, %v603
  %v605 = vrcp.pop %v554
  %v606 = vmul.f32 1.0, %v605
  %v607 = vrcp.pop %v555
  %v608 = vmul.f32 1.0, %v607
  %v609 = vrcp.pop %v556
  %v610 = vmul.f32 1.0, %v609
  %v611 = vrcp.pop %v557
  %v612 = vmul.f32 1.0, %v611
  %v613 = vrcp.pop %v558
  %v614 = vmul.f32 1.0, %v613
  %v615 = vrcp.pop %v559
  %v616 = vmul.f32 1.0, %v615
  %v617 = vrcp.pop %v560
  %v618 = vmul.f32 1.0, %v617
  %v619 = vrcp.pop %v561
  %v620 = vmul.f32 1.0, %v619
  %v621 = vrcp.pop %v562
  %v622 = vmul.f32 1.0, %v621
  %v623 = vrcp.pop %v563
  %v624 = vmul.f32 1.0, %v623
  %v625 = vrcp.pop %v564
  %v626 = vmul.f32 1.0, %v625
  %v627 = vrcp.pop %v565
  %v628 = vmul.f32 1.0, %v627
  %v629 = vrcp.pop %v566
  %v630 = vmul.f32 1.0, %v629
  %v631 = vmul.f32 %v296, %v568
  %v632 = vmul.f32 %v298, %v570
  %v633 = vmul.f32 %v369, %v572
  %v634 = vmul.f32 %v371, %v574
  %v635 = vmul.f32 %v300, %v576
  %v636 = vmul.f32 %v302, %v578
  %v637 = vmul.f32 %v373, %v580
  %v638 = vmul.f32 %v375, %v582
  %v639 = vmul.f32 %v306, %v584
  %v640 = vmul.f32 %v308, %v586
  %v641 = vmul.f32 %v379, %v588
  %v642 = vmul.f32 %v381, %v590
  %v643 = vmul.f32 %v310, %v592
  %v644 = vmul.f32 %v312, %v594
  %v645 = vmul.f32 %v383, %v596
  %v646 = vmul.f32 %v385, %v598
  %v647 = vmul.f32 %v316, %v600
  %v648 = vmul.f32 %v318, %v602
  %v649 = vmul.f32 %v389, %v604
  %v650 = vmul.f32 %v391, %v606
  %v651 = vmul.f32 %v320, %v608
  %v652 = vmul.f32 %v322, %v610
  %v653 = vmul.f32 %v393, %v612
  %v654 = vmul.f32 %v395, %v614
  %v655 = vmul.f32 %v326, %v616
  %v656 = vmul.f32 %v328, %v618
  %v657 = vmul.f32 %v399, %v620
  %v658 = vmul.f32 %v401, %v622
  %v659 = vmul.f32 %v330, %v624
  %v660 = vmul.f32 %v332, %v626
  %v661 = vmul.f32 %v403, %v628
  %v662 = vmul.f32 %v405, %v630
  %v663 = vpack.c.bf16 %v635, %v631
  %v664 = vpack.c.bf16 %v636, %v632
  %v665 = vpack.c.bf16 %v637, %v633
  %v666 = vpack.c.bf16 %v638, %v634
  %v667 = vpack.c.bf16 %v643, %v639
  %v668 = vpack.c.bf16 %v644, %v640
  %v669 = vpack.c.bf16 %v645, %v641
  %v670 = vpack.c.bf16 %v646, %v642
  %v671 = vpack.c.bf16 %v651, %v647
  %v672 = vpack.c.bf16 %v652, %v648
  %v673 = vpack.c.bf16 %v653, %v649
  %v674 = vpack.c.bf16 %v654, %v650
  %v675 = vpack.c.bf16 %v659, %v655
  %v676 = vpack.c.bf16 %v660, %v656
  %v677 = vpack.c.bf16 %v661, %v657
  %v678 = vpack.c.bf16 %v662, %v658
  %v695 = vunpack.c.l.b16 %v663
  %v696 = vunpack.c.l.b16 %v664
  %v697 = vunpack.c.l.b16 %v665
  %v698 = vunpack.c.l.b16 %v666
  %v699 = vunpack.c.h.b16 %v663
  %v700 = vunpack.c.h.b16 %v664
  %v701 = vunpack.c.h.b16 %v665
  %v702 = vunpack.c.h.b16 %v666
  %v703 = vunpack.c.l.b16 %v667
  %v704 = vunpack.c.l.b16 %v668
  %v705 = vunpack.c.l.b16 %v669
  %v706 = vunpack.c.l.b16 %v670
  %v707 = vunpack.c.h.b16 %v667
  %v708 = vunpack.c.h.b16 %v668
  %v709 = vunpack.c.h.b16 %v669
  %v710 = vunpack.c.h.b16 %v670
  %v711 = vunpack.c.l.b16 %v671
  %v712 = vunpack.c.l.b16 %v672
  %v713 = vunpack.c.l.b16 %v673
  %v714 = vunpack.c.l.b16 %v674
  %v715 = vunpack.c.h.b16 %v671
  %v716 = vunpack.c.h.b16 %v672
  %v717 = vunpack.c.h.b16 %v673
  %v718 = vunpack.c.h.b16 %v674
  %v719 = vunpack.c.l.b16 %v675
  %v720 = vunpack.c.l.b16 %v676
  %v721 = vunpack.c.l.b16 %v677
  %v722 = vunpack.c.l.b16 %v678
  %v723 = vunpack.c.h.b16 %v675
  %v724 = vunpack.c.h.b16 %v676
  %v725 = vunpack.c.h.b16 %v677
  %v726 = vunpack.c.h.b16 %v678
  %v727 = vpack.c.b16 %v696, %v695
  %v728 = vpack.c.b16 %v698, %v697
  %v729 = vpack.c.b16 %v700, %v699
  %v730 = vpack.c.b16 %v702, %v701
  %v731 = vpack.c.b16 %v704, %v703
  %v732 = vpack.c.b16 %v706, %v705
  %v733 = vpack.c.b16 %v708, %v707
  %v734 = vpack.c.b16 %v710, %v709
  %v735 = vpack.c.b16 %v712, %v711
  %v736 = vpack.c.b16 %v714, %v713
  %v737 = vpack.c.b16 %v716, %v715
  %v738 = vpack.c.b16 %v718, %v717
  %v739 = vpack.c.b16 %v720, %v719
  %v740 = vpack.c.b16 %v722, %v721
  %v741 = vpack.c.b16 %v724, %v723
  %v742 = vpack.c.b16 %v726, %v725
  %759 = vst [vmem:[%s3] sm:$0xff] %v727
  %760 = vst [vmem:[%s3 + $0x8] sm:$0xff] %v728
  %761 = vst [vmem:[%s3 + $0x10] sm:$0xff] %v729
  %762 = vst [vmem:[%s3 + $0x18] sm:$0xff] %v730
  %763 = vst [vmem:[%s3 + $0x20] sm:$0xff] %v731
  %764 = vst [vmem:[%s3 + $0x28] sm:$0xff] %v732
  %765 = vst [vmem:[%s3 + $0x30] sm:$0xff] %v733
  %766 = vst [vmem:[%s3 + $0x38] sm:$0xff] %v734
  %767 = vst [vmem:[%s3 + $0x40] sm:$0xff] %v735
  %768 = vst [vmem:[%s3 + $0x48] sm:$0xff] %v736
  %769 = vst [vmem:[%s3 + $0x50] sm:$0xff] %v737
  %770 = vst [vmem:[%s3 + $0x58] sm:$0xff] %v738
  %771 = vst [vmem:[%s3 + $0x60] sm:$0xff] %v739
  %772 = vst [vmem:[%s3 + $0x68] sm:$0xff] %v740
  %773 = vst [vmem:[%s3 + $0x70] sm:$0xff] %v741
  %774 = vst [vmem:[%s3 + $0x78] sm:$0xff] %v742
  // Predicated region
  $region14: #{image_encoder_forward.24} parent=0 // pred_check
    _
  $region15: #{image_encoder_forward.24} parent=0 // pred_check_branch
    %776 = sbr.rel (0) target = $region17
  $region16: #{image_encoder_forward.24} parent=0 // pred_region
    _
  $region17: #{image_encoder_forward.24} parent=0 // pred_fallthru
    _
  // Predicated region
  $region18: #{image_encoder_forward.24} parent=0 // pred_check
    _
  $region19: #{image_encoder_forward.24} parent=0 // pred_check_branch
    %778 = sbr.rel (0) target = $region21
  $region20: #{image_encoder_forward.24} parent=0 // pred_region
    _
  $region21: #{image_encoder_forward.24} parent=0 // pred_fallthru
    _

</llo_original>
